<compile_context>
chip_gen: v7x
topology: tpu7x:2x2x1
jax: 0.10.0
libtpu: 0.0.40
codegen_flags: <defaults>
</compile_context>

<pallas_src>
import math
import functools

import jax
import jax.numpy as jnp
from jax.experimental import pallas as pl
from jax.experimental.pallas import tpu as pltpu  # noqa: F401  (no scratch needed at these shapes)


# MXU operand dtype. Keep f32 at these toy shapes for fidelity with the PyTorch
# reference; set to jnp.bfloat16 on v6e/v7x once B/S/H grow (accumulation stays
# f32 via preferred_element_type).
MXU_DTYPE = jnp.float32


# ----------------------------- small helpers (used inside the kernel) --------

def _mm(a, b):
    return jnp.dot(a.astype(MXU_DTYPE), b.astype(MXU_DTYPE),
                   preferred_element_type=jnp.float32)


def _sigmoid(x):
    # sigmoid(x) = 0.5*(tanh(x/2)+1): tanh runs on the EUP slot (no VALU divide)
    # and the result is exactly bounded in [0, 1].
    return 0.5 * (jnp.tanh(0.5 * x) + 1.0)


def _layernorm(x, gamma, beta, eps):
    mu = jnp.mean(x, axis=-1, keepdims=True)
    xc = x - mu
    var = jnp.mean(xc * xc, axis=-1, keepdims=True)
    return xc * jax.lax.rsqrt(var + eps) * gamma + beta


def _gelu(x):
    # TODO(synk): HF BERT "gelu" is erf-based; tanh approximation used here
    # because lax.erf is not guaranteed to lower in Mosaic (diff ~1e-3).
    c = math.sqrt(2.0 / math.pi)
    return 0.5 * x * (1.0 + jnp.tanh(c * (x + 0.044715 * x * x * x)))


# ----------------------------- fused forward kernel --------------------------

def lstmattn_kernel(xcat_ref, xcont_ref, mask_ref,
                    wcat_ref, bcat_ref, gcat_ref, btcat_ref,
                    wcont_ref, bcont_ref, gcont_ref, btcont_ref,
                    wih_ref, whh_ref, blstm_ref,
                    wqkv_ref, bqkv_ref, wao_ref, bao_ref, g1_ref, bt1_ref,
                    wi_ref, bi_ref, w2_ref, b2_ref, g2_ref, bt2_ref,
                    wfc_ref, bfc_ref,
                    out_ref, *, n_heads, n_layers):
    B, S, Dc = xcat_ref.shape
    Dn = xcont_ref.shape[-1]
    H = wao_ref.shape[0]
    hd = H // n_heads

    # ---- cate / cont comb_proj: Linear + LayerNorm, concat along lanes -------
    xc = xcat_ref[...].reshape(B * S, Dc)
    yc = _layernorm(_mm(xc, wcat_ref[...]) + bcat_ref[...],
                    gcat_ref[...], btcat_ref[...], 1e-5)       # nn.LayerNorm eps
    xn = xcont_ref[...].reshape(B * S, Dn)
    yn = _layernorm(_mm(xn, wcont_ref[...]) + bcont_ref[...],
                    gcont_ref[...], btcont_ref[...], 1e-5)
    x2 = jnp.concatenate([yc, yn], axis=-1)                    # (B*S, H), batch-major

    # ---- LSTM (n_layers); input-hidden projection hoisted out of time loop --
    t_iota = jax.lax.broadcasted_iota(jnp.int32, (B, S, H), 1)  # hoisted, reused
    for l in range(n_layers):
        whh = whh_ref[l]                                        # (H, 4H)
        # Hoisted: whole-sequence input projection + combined (b_ih + b_hh).
        xw = (_mm(x2, wih_ref[l]) + blstm_ref[l]).reshape(B, S, 4 * H)
        h = jnp.zeros((B, H), jnp.float32)
        c = jnp.zeros((B, H), jnp.float32)
        seq = jnp.zeros((B, S, H), jnp.float32)
        for t in range(S):                                      # static unroll (S small)
            gates = xw[:, t, :] + _mm(h, whh)                   # (B, 4H), torch order i,f,g,o
            i_g = _sigmoid(gates[:, 0 * H:1 * H])
            f_g = _sigmoid(gates[:, 1 * H:2 * H])
            g_g = jnp.tanh(gates[:, 2 * H:3 * H])
            o_g = _sigmoid(gates[:, 3 * H:4 * H])
            c = f_g * c + i_g * g_g
            h = o_g * jnp.tanh(c)
            # One-hot accumulate h into time slot t: pure VPU sequence assembly
            # (no sublane scatter / concat on the serial recurrent path).
            seq = seq + (t_iota == t).astype(jnp.float32) * h[:, None, :]
        x2 = seq.reshape(B * S, H)

    # ---- BertEncoder (1 layer): fused QKV projection, per-head attention -----
    qkv = _mm(x2, wqkv_ref[...]) + bqkv_ref[...]                # (B*S, 3H)
    q = qkv[:, 0 * H:1 * H].reshape(B, S, H)
    k = qkv[:, 1 * H:2 * H].reshape(B, S, H)
    v = qkv[:, 2 * H:3 * H].reshape(B, S, H)
    neg = ((1.0 - mask_ref[...]) * -10000.0)[:, None, :]        # (B, 1, S)
    scale = 1.0 / math.sqrt(hd)

    attn_acc = jnp.zeros((B * S, H), jnp.float32)
    for hh in range(n_heads):                                   # static head loop (tiny)
        sl = slice(hh * hd, (hh + 1) * hd)
        sc = jnp.einsum('bqd,bkd->bqk', q[:, :, sl], k[:, :, sl],
                        preferred_element_type=jnp.float32) * scale + neg
        sc = sc - jnp.max(sc, axis=-1, keepdims=True)
        e = jnp.exp(sc)
        p = e * pl.reciprocal(jnp.sum(e, axis=-1, keepdims=True), approx=True)
        ctx = jnp.einsum('bqk,bkd->bqd', p, v[:, :, sl],
                         preferred_element_type=jnp.float32)    # (B, S, hd)
        # Fold per-head context straight into the output projection: removes the
        # lane-axis concatenate entirely.
        attn_acc = attn_acc + _mm(ctx.reshape(B * S, hd), wao_ref[sl, :])
    h1 = _layernorm(attn_acc + bao_ref[...] + x2,
                    g1_ref[...], bt1_ref[...], 1e-12)           # Bert LN eps

    inter = _gelu(_mm(h1, wi_ref[...]) + bi_ref[...])
    ffn = _mm(inter, w2_ref[...]) + b2_ref[...]
    hout = _layernorm(ffn + h1, g2_ref[...], bt2_ref[...], 1e-12)

    # ---- fc (H -> 1) as VPU multiply + lane reduce; lane-dense (B, S) output -
    logits = jnp.sum(hout.reshape(B, S, H) * wfc_ref[...], axis=-1) + bfc_ref[...]
    out_ref[...] = _sigmoid(logits)


# ----------------------------- wrapper (glue + pallas_call) ------------------

def lstmattn_forward(params, categorical, continuous, mask, *, n_layers, n_heads):
    # Categorical embedding lookups (gathers) stay in plain JAX glue.
    x_cat = jnp.concatenate(
        [jnp.take(params["emb"][i], categorical[i], axis=0)
         for i in range(len(categorical))], axis=-1)
    x_cont = jnp.stack(continuous, axis=-1).astype(jnp.float32)
    B, S = mask.shape

    kernel = functools.partial(lstmattn_kernel, n_heads=n_heads, n_layers=n_layers)
    # Single fused invocation: all weights + activations are far below the VMEM
    # limit on v5e/v6e/v7x, so no grid / BlockSpecs are needed at these shapes.
    # TODO(synk): when scaling B/S/H, add a grid over (batch, query-blocks) with
    # proper BlockSpecs (v7x has only 64 MiB VMEM) and mark the batch axis
    # "parallel" so both v7x TensorCores are used.
    return pl.pallas_call(
        kernel,
        out_shape=jax.ShapeDtypeStruct((B, S), jnp.float32),
    )(x_cat, x_cont, mask,
      params["cate_w"], params["cate_b"], params["cate_g"], params["cate_beta"],
      params["cont_w"], params["cont_b"], params["cont_g"], params["cont_beta"],
      params["lstm_wih"], params["lstm_whh"], params["lstm_b"],
      params["wqkv"], params["bqkv"], params["wao"], params["bao"],
      params["g1"], params["bt1"],
      params["wi"], params["bi"], params["w2"], params["b2"],
      params["g2"], params["bt2"],
      params["wfc"], params["bfc"])


# ----------------------------- parameter / input construction ----------------

def build_params_and_inputs():
    B, S = 2, 8
    hidden_dim = 32
    n_layers = 2
    n_heads = 2
    n_cates = 3
    cate_embs = [7, 11, 13]
    n_conts = 4
    emb_dim = hidden_dim // 3                                   # 10
    h2 = hidden_dim // 2                                        # 16
    H = hidden_dim

    keys = iter(jax.random.split(jax.random.PRNGKey(0), 64))

    def nrm(shape, scale=0.05):
        return (scale * jax.random.normal(next(keys), shape)).astype(jnp.float32)

    params = {
        "emb": [nrm((cate_embs[i], emb_dim)) for i in range(n_cates)],
        # Linear weights stored pre-transposed (in, out); biases / LN params as (1, N)
        "cate_w": nrm((emb_dim * n_cates, h2)), "cate_b": nrm((1, h2)),
        "cate_g": 1.0 + nrm((1, h2), 0.02), "cate_beta": nrm((1, h2), 0.02),
        "cont_w": nrm((n_conts, h2)), "cont_b": nrm((1, h2)),
        "cont_g": 1.0 + nrm((1, h2), 0.02), "cont_beta": nrm((1, h2), 0.02),
        # LSTM, stacked over layers: W_ih^T (L,H,4H), W_hh^T (L,H,4H), b_ih+b_hh (L,1,4H)
        "lstm_wih": jnp.stack([nrm((H, 4 * H)) for _ in range(n_layers)]),
        "lstm_whh": jnp.stack([nrm((H, 4 * H)) for _ in range(n_layers)]),
        "lstm_b": jnp.stack([nrm((1, 4 * H)) for _ in range(n_layers)]),
        # attention: Q/K/V Linear weights fused into a single (H, 3H) matrix
        "wqkv": nrm((H, 3 * H)), "bqkv": nrm((1, 3 * H)),
        "wao": nrm((H, H)), "bao": nrm((1, H)),
        "g1": 1.0 + nrm((1, H), 0.02), "bt1": nrm((1, H), 0.02),
        "wi": nrm((H, H)), "bi": nrm((1, H)),
        "w2": nrm((H, H)), "b2": nrm((1, H)),
        "g2": 1.0 + nrm((1, H), 0.02), "bt2": nrm((1, H), 0.02),
        "wfc": nrm((1, H)), "bfc": nrm((1, 1)),                 # fc: nn.Linear(H, 1)
    }

    categorical = [jax.random.randint(next(keys), (B, S), 0, cate_embs[i], dtype=jnp.int32)
                   for i in range(n_cates)]
    continuous = [jax.random.normal(next(keys), (B, S), dtype=jnp.float32)
                  for _ in range(n_conts)]
    lengths = jnp.array([S, 5], dtype=jnp.int32)
    mask = (jnp.arange(S)[None, :] < lengths[:, None]).astype(jnp.float32)

    return params, categorical, continuous, mask, n_layers, n_heads, (B, S)


# ----------------------------- main -------------------------------------------

if __name__ == "__main__":
    params, categorical, continuous, mask, n_layers, n_heads, (B, S) = build_params_and_inputs()

    preds = lstmattn_forward(params, categorical, continuous, mask,
                             n_layers=n_layers, n_heads=n_heads)
    preds = jax.block_until_ready(preds)

    assert preds.shape == (B, S), preds.shape
    assert bool(jnp.all(jnp.isfinite(preds)))
    assert bool(jnp.all((preds >= 0.0) & (preds <= 1.0)))
    print("KERNEL_OK")
</pallas_src>

<mosaic_0001>
module attributes {stable_mosaic.version = 11 : i64} {
  func.func @lstmattn_kernel(%arg0: memref<2x8x30xf32, #tpu.memory_space<vmem>>, %arg1: memref<2x8x4xf32, #tpu.memory_space<vmem>>, %arg2: memref<2x8xf32, #tpu.memory_space<vmem>>, %arg3: memref<30x16xf32, #tpu.memory_space<vmem>>, %arg4: memref<1x16xf32, #tpu.memory_space<vmem>>, %arg5: memref<1x16xf32, #tpu.memory_space<vmem>>, %arg6: memref<1x16xf32, #tpu.memory_space<vmem>>, %arg7: memref<4x16xf32, #tpu.memory_space<vmem>>, %arg8: memref<1x16xf32, #tpu.memory_space<vmem>>, %arg9: memref<1x16xf32, #tpu.memory_space<vmem>>, %arg10: memref<1x16xf32, #tpu.memory_space<vmem>>, %arg11: memref<2x32x128xf32, #tpu.memory_space<vmem>>, %arg12: memref<2x32x128xf32, #tpu.memory_space<vmem>>, %arg13: memref<2x1x128xf32, #tpu.memory_space<vmem>>, %arg14: memref<32x96xf32, #tpu.memory_space<vmem>>, %arg15: memref<1x96xf32, #tpu.memory_space<vmem>>, %arg16: memref<32x32xf32, #tpu.memory_space<vmem>>, %arg17: memref<1x32xf32, #tpu.memory_space<vmem>>, %arg18: memref<1x32xf32, #tpu.memory_space<vmem>>, %arg19: memref<1x32xf32, #tpu.memory_space<vmem>>, %arg20: memref<32x32xf32, #tpu.memory_space<vmem>>, %arg21: memref<1x32xf32, #tpu.memory_space<vmem>>, %arg22: memref<32x32xf32, #tpu.memory_space<vmem>>, %arg23: memref<1x32xf32, #tpu.memory_space<vmem>>, %arg24: memref<1x32xf32, #tpu.memory_space<vmem>>, %arg25: memref<1x32xf32, #tpu.memory_space<vmem>>, %arg26: memref<1x32xf32, #tpu.memory_space<vmem>>, %arg27: memref<1x1xf32, #tpu.memory_space<vmem>>, %arg28: memref<2x8xf32, #tpu.memory_space<vmem>>) attributes {dimension_semantics = [], scalar_prefetch = 0 : i64, scratch_operands = 0 : i64, tpu.core_type = #tpu.core_type<tc>} {
    %c0 = arith.constant 0 : index
    %c0_0 = arith.constant 0 : index
    %c0_1 = arith.constant 0 : index
    %0 = vector.load %arg0[%c0, %c0_0, %c0_1] : memref<2x8x30xf32, #tpu.memory_space<vmem>>, vector<2x8x30xf32>
    %1 = vector.shape_cast %0 : vector<2x8x30xf32> to vector<16x30xf32>
    %c0_2 = arith.constant 0 : index
    %c0_3 = arith.constant 0 : index
    %2 = vector.load %arg3[%c0_2, %c0_3] : memref<30x16xf32, #tpu.memory_space<vmem>>, vector<30x16xf32>
    %cst = arith.constant dense<0.000000e+00> : vector<16x16xf32>
    %3 = tpu.matmul %1, %2, %cst {dimension_numbers = #tpu.dot_dimension_numbers<[1], [0], [0], [1], [0, 0, 1, 1], [], []>} : vector<16x30xf32>, vector<30x16xf32>, vector<16x16xf32> -> vector<16x16xf32>
    %c0_4 = arith.constant 0 : index
    %c0_5 = arith.constant 0 : index
    %4 = vector.load %arg4[%c0_4, %c0_5] : memref<1x16xf32, #tpu.memory_space<vmem>>, vector<1x16xf32>
    %5 = vector.broadcast %4 : vector<1x16xf32> to vector<16x16xf32>
    %6 = arith.addf %3, %5 : vector<16x16xf32>
    %c0_6 = arith.constant 0 : index
    %c0_7 = arith.constant 0 : index
    %7 = vector.load %arg5[%c0_6, %c0_7] : memref<1x16xf32, #tpu.memory_space<vmem>>, vector<1x16xf32>
    %c0_8 = arith.constant 0 : index
    %c0_9 = arith.constant 0 : index
    %8 = vector.load %arg6[%c0_8, %c0_9] : memref<1x16xf32, #tpu.memory_space<vmem>>, vector<1x16xf32>
    %cst_10 = arith.constant dense<0.000000e+00> : vector<16xf32>
    %9 = vector.multi_reduction <add>, %6, %cst_10 [1] : vector<16x16xf32> to vector<16xf32>
    %10 = vector.shape_cast %9 : vector<16xf32> to vector<16x1xf32>
    %cst_11 = arith.constant 1.600000e+01 : f32
    %11 = vector.broadcast %cst_11 : f32 to vector<16x1xf32>
    %12 = arith.divf %10, %11 : vector<16x1xf32>
    %13 = vector.broadcast %12 : vector<16x1xf32> to vector<16x16xf32>
    %14 = arith.subf %6, %13 : vector<16x16xf32>
    %15 = arith.mulf %14, %14 : vector<16x16xf32>
    %cst_12 = arith.constant dense<0.000000e+00> : vector<16xf32>
    %16 = vector.multi_reduction <add>, %15, %cst_12 [1] : vector<16x16xf32> to vector<16xf32>
    %17 = vector.shape_cast %16 : vector<16xf32> to vector<16x1xf32>
    %cst_13 = arith.constant 1.600000e+01 : f32
    %18 = vector.broadcast %cst_13 : f32 to vector<16x1xf32>
    %19 = arith.divf %17, %18 : vector<16x1xf32>
    %cst_14 = arith.constant 9.99999974E-6 : f32
    %20 = vector.broadcast %cst_14 : f32 to vector<16x1xf32>
    %21 = arith.addf %19, %20 : vector<16x1xf32>
    %22 = math.rsqrt %21 : vector<16x1xf32>
    %23 = vector.broadcast %22 : vector<16x1xf32> to vector<16x16xf32>
    %24 = arith.mulf %14, %23 : vector<16x16xf32>
    %25 = vector.broadcast %7 : vector<1x16xf32> to vector<16x16xf32>
    %26 = arith.mulf %24, %25 : vector<16x16xf32>
    %27 = vector.broadcast %8 : vector<1x16xf32> to vector<16x16xf32>
    %28 = arith.addf %26, %27 : vector<16x16xf32>
    %c0_15 = arith.constant 0 : index
    %c0_16 = arith.constant 0 : index
    %c0_17 = arith.constant 0 : index
    %29 = vector.load %arg1[%c0_15, %c0_16, %c0_17] : memref<2x8x4xf32, #tpu.memory_space<vmem>>, vector<2x8x4xf32>
    %30 = vector.shape_cast %29 : vector<2x8x4xf32> to vector<16x4xf32>
    %c0_18 = arith.constant 0 : index
    %c0_19 = arith.constant 0 : index
    %31 = vector.load %arg7[%c0_18, %c0_19] : memref<4x16xf32, #tpu.memory_space<vmem>>, vector<4x16xf32>
    %cst_20 = arith.constant dense<0.000000e+00> : vector<16x16xf32>
    %32 = tpu.matmul %30, %31, %cst_20 {dimension_numbers = #tpu.dot_dimension_numbers<[1], [0], [0], [1], [0, 0, 1, 1], [], []>} : vector<16x4xf32>, vector<4x16xf32>, vector<16x16xf32> -> vector<16x16xf32>
    %c0_21 = arith.constant 0 : index
    %c0_22 = arith.constant 0 : index
    %33 = vector.load %arg8[%c0_21, %c0_22] : memref<1x16xf32, #tpu.memory_space<vmem>>, vector<1x16xf32>
    %34 = vector.broadcast %33 : vector<1x16xf32> to vector<16x16xf32>
    %35 = arith.addf %32, %34 : vector<16x16xf32>
    %c0_23 = arith.constant 0 : index
    %c0_24 = arith.constant 0 : index
    %36 = vector.load %arg9[%c0_23, %c0_24] : memref<1x16xf32, #tpu.memory_space<vmem>>, vector<1x16xf32>
    %c0_25 = arith.constant 0 : index
    %c0_26 = arith.constant 0 : index
    %37 = vector.load %arg10[%c0_25, %c0_26] : memref<1x16xf32, #tpu.memory_space<vmem>>, vector<1x16xf32>
    %cst_27 = arith.constant dense<0.000000e+00> : vector<16xf32>
    %38 = vector.multi_reduction <add>, %35, %cst_27 [1] : vector<16x16xf32> to vector<16xf32>
    %39 = vector.shape_cast %38 : vector<16xf32> to vector<16x1xf32>
    %cst_28 = arith.constant 1.600000e+01 : f32
    %40 = vector.broadcast %cst_28 : f32 to vector<16x1xf32>
    %41 = arith.divf %39, %40 : vector<16x1xf32>
    %42 = vector.broadcast %41 : vector<16x1xf32> to vector<16x16xf32>
    %43 = arith.subf %35, %42 : vector<16x16xf32>
    %44 = arith.mulf %43, %43 : vector<16x16xf32>
    %cst_29 = arith.constant dense<0.000000e+00> : vector<16xf32>
    %45 = vector.multi_reduction <add>, %44, %cst_29 [1] : vector<16x16xf32> to vector<16xf32>
    %46 = vector.shape_cast %45 : vector<16xf32> to vector<16x1xf32>
    %cst_30 = arith.constant 1.600000e+01 : f32
    %47 = vector.broadcast %cst_30 : f32 to vector<16x1xf32>
    %48 = arith.divf %46, %47 : vector<16x1xf32>
    %cst_31 = arith.constant 9.99999974E-6 : f32
    %49 = vector.broadcast %cst_31 : f32 to vector<16x1xf32>
    %50 = arith.addf %48, %49 : vector<16x1xf32>
    %51 = math.rsqrt %50 : vector<16x1xf32>
    %52 = vector.broadcast %51 : vector<16x1xf32> to vector<16x16xf32>
    %53 = arith.mulf %43, %52 : vector<16x16xf32>
    %54 = vector.broadcast %36 : vector<1x16xf32> to vector<16x16xf32>
    %55 = arith.mulf %53, %54 : vector<16x16xf32>
    %56 = vector.broadcast %37 : vector<1x16xf32> to vector<16x16xf32>
    %57 = arith.addf %55, %56 : vector<16x16xf32>
    %58 = tpu.concatenate %28, %57 in 1 : vector<16x16xf32>, vector<16x16xf32> -> vector<16x32xf32>
    %59 = tpu.iota {dimensions = array<i32: 1>} : vector<2x8x32xi32>
    %c0_32 = arith.constant 0 : index
    %c0_33 = arith.constant 0 : index
    %c0_34 = arith.constant 0 : index
    %60 = vector.load %arg12[%c0_32, %c0_33, %c0_34] : memref<2x32x128xf32, #tpu.memory_space<vmem>>, vector<1x32x128xf32>
    %61 = vector.shape_cast %60 : vector<1x32x128xf32> to vector<32x128xf32>
    %c0_35 = arith.constant 0 : index
    %c0_36 = arith.constant 0 : index
    %c0_37 = arith.constant 0 : index
    %62 = vector.load %arg11[%c0_35, %c0_36, %c0_37] : memref<2x32x128xf32, #tpu.memory_space<vmem>>, vector<1x32x128xf32>
    %63 = vector.shape_cast %62 : vector<1x32x128xf32> to vector<32x128xf32>
    %cst_38 = arith.constant dense<0.000000e+00> : vector<16x128xf32>
    %64 = tpu.matmul %58, %63, %cst_38 {dimension_numbers = #tpu.dot_dimension_numbers<[1], [0], [0], [1], [0, 0, 1, 1], [], []>} : vector<16x32xf32>, vector<32x128xf32>, vector<16x128xf32> -> vector<16x128xf32>
    %c0_39 = arith.constant 0 : index
    %c0_40 = arith.constant 0 : index
    %c0_41 = arith.constant 0 : index
    %65 = vector.load %arg13[%c0_39, %c0_40, %c0_41] : memref<2x1x128xf32, #tpu.memory_space<vmem>>, vector<1x1x128xf32>
    %66 = vector.shape_cast %65 : vector<1x1x128xf32> to vector<1x128xf32>
    %67 = vector.broadcast %66 : vector<1x128xf32> to vector<16x128xf32>
    %68 = arith.addf %64, %67 : vector<16x128xf32>
    %69 = vector.shape_cast %68 : vector<16x128xf32> to vector<2x8x128xf32>
    %cst_42 = arith.constant 0.000000e+00 : f32
    %70 = vector.broadcast %cst_42 : f32 to vector<2x32xf32>
    %cst_43 = arith.constant 0.000000e+00 : f32
    %71 = vector.broadcast %cst_43 : f32 to vector<2x32xf32>
    %cst_44 = arith.constant 0.000000e+00 : f32
    %72 = vector.broadcast %cst_44 : f32 to vector<2x8x32xf32>
    %73 = vector.extract_strided_slice %69 {offsets = [0, 0, 0], sizes = [2, 1, 128], strides = [1, 1, 1]} : vector<2x8x128xf32> to vector<2x1x128xf32>
    %74 = vector.shape_cast %73 : vector<2x1x128xf32> to vector<2x128xf32>
    %cst_45 = arith.constant dense<0.000000e+00> : vector<2x128xf32>
    %75 = tpu.matmul %70, %61, %cst_45 {dimension_numbers = #tpu.dot_dimension_numbers<[1], [0], [0], [1], [0, 0, 1, 1], [], []>} : vector<2x32xf32>, vector<32x128xf32>, vector<2x128xf32> -> vector<2x128xf32>
    %76 = arith.addf %74, %75 : vector<2x128xf32>
    %77 = vector.extract_strided_slice %76 {offsets = [0, 0], sizes = [2, 32], strides = [1, 1]} : vector<2x128xf32> to vector<2x32xf32>
    %cst_46 = arith.constant 5.000000e-01 : f32
    %78 = vector.broadcast %cst_46 : f32 to vector<2x32xf32>
    %79 = arith.mulf %78, %77 : vector<2x32xf32>
    %80 = math.tanh %79 : vector<2x32xf32>
    %cst_47 = arith.constant 1.000000e+00 : f32
    %81 = vector.broadcast %cst_47 : f32 to vector<2x32xf32>
    %82 = arith.addf %80, %81 : vector<2x32xf32>
    %cst_48 = arith.constant 5.000000e-01 : f32
    %83 = vector.broadcast %cst_48 : f32 to vector<2x32xf32>
    %84 = arith.mulf %83, %82 : vector<2x32xf32>
    %85 = vector.extract_strided_slice %76 {offsets = [0, 32], sizes = [2, 32], strides = [1, 1]} : vector<2x128xf32> to vector<2x32xf32>
    %cst_49 = arith.constant 5.000000e-01 : f32
    %86 = vector.broadcast %cst_49 : f32 to vector<2x32xf32>
    %87 = arith.mulf %86, %85 : vector<2x32xf32>
    %88 = math.tanh %87 : vector<2x32xf32>
    %cst_50 = arith.constant 1.000000e+00 : f32
    %89 = vector.broadcast %cst_50 : f32 to vector<2x32xf32>
    %90 = arith.addf %88, %89 : vector<2x32xf32>
    %cst_51 = arith.constant 5.000000e-01 : f32
    %91 = vector.broadcast %cst_51 : f32 to vector<2x32xf32>
    %92 = arith.mulf %91, %90 : vector<2x32xf32>
    %93 = vector.extract_strided_slice %76 {offsets = [0, 64], sizes = [2, 32], strides = [1, 1]} : vector<2x128xf32> to vector<2x32xf32>
    %94 = math.tanh %93 : vector<2x32xf32>
    %95 = vector.extract_strided_slice %76 {offsets = [0, 96], sizes = [2, 32], strides = [1, 1]} : vector<2x128xf32> to vector<2x32xf32>
    %cst_52 = arith.constant 5.000000e-01 : f32
    %96 = vector.broadcast %cst_52 : f32 to vector<2x32xf32>
    %97 = arith.mulf %96, %95 : vector<2x32xf32>
    %98 = math.tanh %97 : vector<2x32xf32>
    %cst_53 = arith.constant 1.000000e+00 : f32
    %99 = vector.broadcast %cst_53 : f32 to vector<2x32xf32>
    %100 = arith.addf %98, %99 : vector<2x32xf32>
    %cst_54 = arith.constant 5.000000e-01 : f32
    %101 = vector.broadcast %cst_54 : f32 to vector<2x32xf32>
    %102 = arith.mulf %101, %100 : vector<2x32xf32>
    %103 = arith.mulf %92, %71 : vector<2x32xf32>
    %104 = arith.mulf %84, %94 : vector<2x32xf32>
    %105 = arith.addf %103, %104 : vector<2x32xf32>
    %106 = math.tanh %105 : vector<2x32xf32>
    %107 = arith.mulf %102, %106 : vector<2x32xf32>
    %c0_i32 = arith.constant 0 : i32
    %108 = vector.broadcast %c0_i32 : i32 to vector<2x8x32xi32>
    %109 = arith.cmpi eq, %59, %108 : vector<2x8x32xi32>
    %110 = arith.extui %109 : vector<2x8x32xi1> to vector<2x8x32xi32>
    %111 = arith.sitofp %110 : vector<2x8x32xi32> to vector<2x8x32xf32>
    %112 = vector.shape_cast %107 : vector<2x32xf32> to vector<2x1x32xf32>
    %113 = vector.broadcast %112 : vector<2x1x32xf32> to vector<2x8x32xf32>
    %114 = arith.mulf %111, %113 : vector<2x8x32xf32>
    %115 = arith.addf %72, %114 : vector<2x8x32xf32>
    %116 = vector.extract_strided_slice %69 {offsets = [0, 1, 0], sizes = [2, 1, 128], strides = [1, 1, 1]} : vector<2x8x128xf32> to vector<2x1x128xf32>
    %117 = vector.shape_cast %116 : vector<2x1x128xf32> to vector<2x128xf32>
    %cst_55 = arith.constant dense<0.000000e+00> : vector<2x128xf32>
    %118 = tpu.matmul %107, %61, %cst_55 {dimension_numbers = #tpu.dot_dimension_numbers<[1], [0], [0], [1], [0, 0, 1, 1], [], []>} : vector<2x32xf32>, vector<32x128xf32>, vector<2x128xf32> -> vector<2x128xf32>
    %119 = arith.addf %117, %118 : vector<2x128xf32>
    %120 = vector.extract_strided_slice %119 {offsets = [0, 0], sizes = [2, 32], strides = [1, 1]} : vector<2x128xf32> to vector<2x32xf32>
    %cst_56 = arith.constant 5.000000e-01 : f32
    %121 = vector.broadcast %cst_56 : f32 to vector<2x32xf32>
    %122 = arith.mulf %121, %120 : vector<2x32xf32>
    %123 = math.tanh %122 : vector<2x32xf32>
    %cst_57 = arith.constant 1.000000e+00 : f32
    %124 = vector.broadcast %cst_57 : f32 to vector<2x32xf32>
    %125 = arith.addf %123, %124 : vector<2x32xf32>
    %cst_58 = arith.constant 5.000000e-01 : f32
    %126 = vector.broadcast %cst_58 : f32 to vector<2x32xf32>
    %127 = arith.mulf %126, %125 : vector<2x32xf32>
    %128 = vector.extract_strided_slice %119 {offsets = [0, 32], sizes = [2, 32], strides = [1, 1]} : vector<2x128xf32> to vector<2x32xf32>
    %cst_59 = arith.constant 5.000000e-01 : f32
    %129 = vector.broadcast %cst_59 : f32 to vector<2x32xf32>
    %130 = arith.mulf %129, %128 : vector<2x32xf32>
    %131 = math.tanh %130 : vector<2x32xf32>
    %cst_60 = arith.constant 1.000000e+00 : f32
    %132 = vector.broadcast %cst_60 : f32 to vector<2x32xf32>
    %133 = arith.addf %131, %132 : vector<2x32xf32>
    %cst_61 = arith.constant 5.000000e-01 : f32
    %134 = vector.broadcast %cst_61 : f32 to vector<2x32xf32>
    %135 = arith.mulf %134, %133 : vector<2x32xf32>
    %136 = vector.extract_strided_slice %119 {offsets = [0, 64], sizes = [2, 32], strides = [1, 1]} : vector<2x128xf32> to vector<2x32xf32>
    %137 = math.tanh %136 : vector<2x32xf32>
    %138 = vector.extract_strided_slice %119 {offsets = [0, 96], sizes = [2, 32], strides = [1, 1]} : vector<2x128xf32> to vector<2x32xf32>
    %cst_62 = arith.constant 5.000000e-01 : f32
    %139 = vector.broadcast %cst_62 : f32 to vector<2x32xf32>
    %140 = arith.mulf %139, %138 : vector<2x32xf32>
    %141 = math.tanh %140 : vector<2x32xf32>
    %cst_63 = arith.constant 1.000000e+00 : f32
    %142 = vector.broadcast %cst_63 : f32 to vector<2x32xf32>
    %143 = arith.addf %141, %142 : vector<2x32xf32>
    %cst_64 = arith.constant 5.000000e-01 : f32
    %144 = vector.broadcast %cst_64 : f32 to vector<2x32xf32>
    %145 = arith.mulf %144, %143 : vector<2x32xf32>
    %146 = arith.mulf %135, %105 : vector<2x32xf32>
    %147 = arith.mulf %127, %137 : vector<2x32xf32>
    %148 = arith.addf %146, %147 : vector<2x32xf32>
    %149 = math.tanh %148 : vector<2x32xf32>
    %150 = arith.mulf %145, %149 : vector<2x32xf32>
    %c1_i32 = arith.constant 1 : i32
    %151 = vector.broadcast %c1_i32 : i32 to vector<2x8x32xi32>
    %152 = arith.cmpi eq, %59, %151 : vector<2x8x32xi32>
    %153 = arith.extui %152 : vector<2x8x32xi1> to vector<2x8x32xi32>
    %154 = arith.sitofp %153 : vector<2x8x32xi32> to vector<2x8x32xf32>
    %155 = vector.shape_cast %150 : vector<2x32xf32> to vector<2x1x32xf32>
    %156 = vector.broadcast %155 : vector<2x1x32xf32> to vector<2x8x32xf32>
    %157 = arith.mulf %154, %156 : vector<2x8x32xf32>
    %158 = arith.addf %115, %157 : vector<2x8x32xf32>
    %159 = vector.extract_strided_slice %69 {offsets = [0, 2, 0], sizes = [2, 1, 128], strides = [1, 1, 1]} : vector<2x8x128xf32> to vector<2x1x128xf32>
    %160 = vector.shape_cast %159 : vector<2x1x128xf32> to vector<2x128xf32>
    %cst_65 = arith.constant dense<0.000000e+00> : vector<2x128xf32>
    %161 = tpu.matmul %150, %61, %cst_65 {dimension_numbers = #tpu.dot_dimension_numbers<[1], [0], [0], [1], [0, 0, 1, 1], [], []>} : vector<2x32xf32>, vector<32x128xf32>, vector<2x128xf32> -> vector<2x128xf32>
    %162 = arith.addf %160, %161 : vector<2x128xf32>
    %163 = vector.extract_strided_slice %162 {offsets = [0, 0], sizes = [2, 32], strides = [1, 1]} : vector<2x128xf32> to vector<2x32xf32>
    %cst_66 = arith.constant 5.000000e-01 : f32
    %164 = vector.broadcast %cst_66 : f32 to vector<2x32xf32>
    %165 = arith.mulf %164, %163 : vector<2x32xf32>
    %166 = math.tanh %165 : vector<2x32xf32>
    %cst_67 = arith.constant 1.000000e+00 : f32
    %167 = vector.broadcast %cst_67 : f32 to vector<2x32xf32>
    %168 = arith.addf %166, %167 : vector<2x32xf32>
    %cst_68 = arith.constant 5.000000e-01 : f32
    %169 = vector.broadcast %cst_68 : f32 to vector<2x32xf32>
    %170 = arith.mulf %169, %168 : vector<2x32xf32>
    %171 = vector.extract_strided_slice %162 {offsets = [0, 32], sizes = [2, 32], strides = [1, 1]} : vector<2x128xf32> to vector<2x32xf32>
    %cst_69 = arith.constant 5.000000e-01 : f32
    %172 = vector.broadcast %cst_69 : f32 to vector<2x32xf32>
    %173 = arith.mulf %172, %171 : vector<2x32xf32>
    %174 = math.tanh %173 : vector<2x32xf32>
    %cst_70 = arith.constant 1.000000e+00 : f32
    %175 = vector.broadcast %cst_70 : f32 to vector<2x32xf32>
    %176 = arith.addf %174, %175 : vector<2x32xf32>
    %cst_71 = arith.constant 5.000000e-01 : f32
    %177 = vector.broadcast %cst_71 : f32 to vector<2x32xf32>
    %178 = arith.mulf %177, %176 : vector<2x32xf32>
    %179 = vector.extract_strided_slice %162 {offsets = [0, 64], sizes = [2, 32], strides = [1, 1]} : vector<2x128xf32> to vector<2x32xf32>
    %180 = math.tanh %179 : vector<2x32xf32>
    %181 = vector.extract_strided_slice %162 {offsets = [0, 96], sizes = [2, 32], strides = [1, 1]} : vector<2x128xf32> to vector<2x32xf32>
    %cst_72 = arith.constant 5.000000e-01 : f32
    %182 = vector.broadcast %cst_72 : f32 to vector<2x32xf32>
    %183 = arith.mulf %182, %181 : vector<2x32xf32>
    %184 = math.tanh %183 : vector<2x32xf32>
    %cst_73 = arith.constant 1.000000e+00 : f32
    %185 = vector.broadcast %cst_73 : f32 to vector<2x32xf32>
    %186 = arith.addf %184, %185 : vector<2x32xf32>
    %cst_74 = arith.constant 5.000000e-01 : f32
    %187 = vector.broadcast %cst_74 : f32 to vector<2x32xf32>
    %188 = arith.mulf %187, %186 : vector<2x32xf32>
    %189 = arith.mulf %178, %148 : vector<2x32xf32>
    %190 = arith.mulf %170, %180 : vector<2x32xf32>
    %191 = arith.addf %189, %190 : vector<2x32xf32>
    %192 = math.tanh %191 : vector<2x32xf32>
    %193 = arith.mulf %188, %192 : vector<2x32xf32>
    %c2_i32 = arith.constant 2 : i32
    %194 = vector.broadcast %c2_i32 : i32 to vector<2x8x32xi32>
    %195 = arith.cmpi eq, %59, %194 : vector<2x8x32xi32>
    %196 = arith.extui %195 : vector<2x8x32xi1> to vector<2x8x32xi32>
    %197 = arith.sitofp %196 : vector<2x8x32xi32> to vector<2x8x32xf32>
    %198 = vector.shape_cast %193 : vector<2x32xf32> to vector<2x1x32xf32>
    %199 = vector.broadcast %198 : vector<2x1x32xf32> to vector<2x8x32xf32>
    %200 = arith.mulf %197, %199 : vector<2x8x32xf32>
    %201 = arith.addf %158, %200 : vector<2x8x32xf32>
    %202 = vector.extract_strided_slice %69 {offsets = [0, 3, 0], sizes = [2, 1, 128], strides = [1, 1, 1]} : vector<2x8x128xf32> to vector<2x1x128xf32>
    %203 = vector.shape_cast %202 : vector<2x1x128xf32> to vector<2x128xf32>
    %cst_75 = arith.constant dense<0.000000e+00> : vector<2x128xf32>
    %204 = tpu.matmul %193, %61, %cst_75 {dimension_numbers = #tpu.dot_dimension_numbers<[1], [0], [0], [1], [0, 0, 1, 1], [], []>} : vector<2x32xf32>, vector<32x128xf32>, vector<2x128xf32> -> vector<2x128xf32>
    %205 = arith.addf %203, %204 : vector<2x128xf32>
    %206 = vector.extract_strided_slice %205 {offsets = [0, 0], sizes = [2, 32], strides = [1, 1]} : vector<2x128xf32> to vector<2x32xf32>
    %cst_76 = arith.constant 5.000000e-01 : f32
    %207 = vector.broadcast %cst_76 : f32 to vector<2x32xf32>
    %208 = arith.mulf %207, %206 : vector<2x32xf32>
    %209 = math.tanh %208 : vector<2x32xf32>
    %cst_77 = arith.constant 1.000000e+00 : f32
    %210 = vector.broadcast %cst_77 : f32 to vector<2x32xf32>
    %211 = arith.addf %209, %210 : vector<2x32xf32>
    %cst_78 = arith.constant 5.000000e-01 : f32
    %212 = vector.broadcast %cst_78 : f32 to vector<2x32xf32>
    %213 = arith.mulf %212, %211 : vector<2x32xf32>
    %214 = vector.extract_strided_slice %205 {offsets = [0, 32], sizes = [2, 32], strides = [1, 1]} : vector<2x128xf32> to vector<2x32xf32>
    %cst_79 = arith.constant 5.000000e-01 : f32
    %215 = vector.broadcast %cst_79 : f32 to vector<2x32xf32>
    %216 = arith.mulf %215, %214 : vector<2x32xf32>
    %217 = math.tanh %216 : vector<2x32xf32>
    %cst_80 = arith.constant 1.000000e+00 : f32
    %218 = vector.broadcast %cst_80 : f32 to vector<2x32xf32>
    %219 = arith.addf %217, %218 : vector<2x32xf32>
    %cst_81 = arith.constant 5.000000e-01 : f32
    %220 = vector.broadcast %cst_81 : f32 to vector<2x32xf32>
    %221 = arith.mulf %220, %219 : vector<2x32xf32>
    %222 = vector.extract_strided_slice %205 {offsets = [0, 64], sizes = [2, 32], strides = [1, 1]} : vector<2x128xf32> to vector<2x32xf32>
    %223 = math.tanh %222 : vector<2x32xf32>
    %224 = vector.extract_strided_slice %205 {offsets = [0, 96], sizes = [2, 32], strides = [1, 1]} : vector<2x128xf32> to vector<2x32xf32>
    %cst_82 = arith.constant 5.000000e-01 : f32
    %225 = vector.broadcast %cst_82 : f32 to vector<2x32xf32>
    %226 = arith.mulf %225, %224 : vector<2x32xf32>
    %227 = math.tanh %226 : vector<2x32xf32>
    %cst_83 = arith.constant 1.000000e+00 : f32
    %228 = vector.broadcast %cst_83 : f32 to vector<2x32xf32>
    %229 = arith.addf %227, %228 : vector<2x32xf32>
    %cst_84 = arith.constant 5.000000e-01 : f32
    %230 = vector.broadcast %cst_84 : f32 to vector<2x32xf32>
    %231 = arith.mulf %230, %229 : vector<2x32xf32>
    %232 = arith.mulf %221, %191 : vector<2x32xf32>
    %233 = arith.mulf %213, %223 : vector<2x32xf32>
    %234 = arith.addf %232, %233 : vector<2x32xf32>
    %235 = math.tanh %234 : vector<2x32xf32>
    %236 = arith.mulf %231, %235 : vector<2x32xf32>
    %c3_i32 = arith.constant 3 : i32
    %237 = vector.broadcast %c3_i32 : i32 to vector<2x8x32xi32>
    %238 = arith.cmpi eq, %59, %237 : vector<2x8x32xi32>
    %239 = arith.extui %238 : vector<2x8x32xi1> to vector<2x8x32xi32>
    %240 = arith.sitofp %239 : vector<2x8x32xi32> to vector<2x8x32xf32>
    %241 = vector.shape_cast %236 : vector<2x32xf32> to vector<2x1x32xf32>
    %242 = vector.broadcast %241 : vector<2x1x32xf32> to vector<2x8x32xf32>
    %243 = arith.mulf %240, %242 : vector<2x8x32xf32>
    %244 = arith.addf %201, %243 : vector<2x8x32xf32>
    %245 = vector.extract_strided_slice %69 {offsets = [0, 4, 0], sizes = [2, 1, 128], strides = [1, 1, 1]} : vector<2x8x128xf32> to vector<2x1x128xf32>
    %246 = vector.shape_cast %245 : vector<2x1x128xf32> to vector<2x128xf32>
    %cst_85 = arith.constant dense<0.000000e+00> : vector<2x128xf32>
    %247 = tpu.matmul %236, %61, %cst_85 {dimension_numbers = #tpu.dot_dimension_numbers<[1], [0], [0], [1], [0, 0, 1, 1], [], []>} : vector<2x32xf32>, vector<32x128xf32>, vector<2x128xf32> -> vector<2x128xf32>
    %248 = arith.addf %246, %247 : vector<2x128xf32>
    %249 = vector.extract_strided_slice %248 {offsets = [0, 0], sizes = [2, 32], strides = [1, 1]} : vector<2x128xf32> to vector<2x32xf32>
    %cst_86 = arith.constant 5.000000e-01 : f32
    %250 = vector.broadcast %cst_86 : f32 to vector<2x32xf32>
    %251 = arith.mulf %250, %249 : vector<2x32xf32>
    %252 = math.tanh %251 : vector<2x32xf32>
    %cst_87 = arith.constant 1.000000e+00 : f32
    %253 = vector.broadcast %cst_87 : f32 to vector<2x32xf32>
    %254 = arith.addf %252, %253 : vector<2x32xf32>
    %cst_88 = arith.constant 5.000000e-01 : f32
    %255 = vector.broadcast %cst_88 : f32 to vector<2x32xf32>
    %256 = arith.mulf %255, %254 : vector<2x32xf32>
    %257 = vector.extract_strided_slice %248 {offsets = [0, 32], sizes = [2, 32], strides = [1, 1]} : vector<2x128xf32> to vector<2x32xf32>
    %cst_89 = arith.constant 5.000000e-01 : f32
    %258 = vector.broadcast %cst_89 : f32 to vector<2x32xf32>
    %259 = arith.mulf %258, %257 : vector<2x32xf32>
    %260 = math.tanh %259 : vector<2x32xf32>
    %cst_90 = arith.constant 1.000000e+00 : f32
    %261 = vector.broadcast %cst_90 : f32 to vector<2x32xf32>
    %262 = arith.addf %260, %261 : vector<2x32xf32>
    %cst_91 = arith.constant 5.000000e-01 : f32
    %263 = vector.broadcast %cst_91 : f32 to vector<2x32xf32>
    %264 = arith.mulf %263, %262 : vector<2x32xf32>
    %265 = vector.extract_strided_slice %248 {offsets = [0, 64], sizes = [2, 32], strides = [1, 1]} : vector<2x128xf32> to vector<2x32xf32>
    %266 = math.tanh %265 : vector<2x32xf32>
    %267 = vector.extract_strided_slice %248 {offsets = [0, 96], sizes = [2, 32], strides = [1, 1]} : vector<2x128xf32> to vector<2x32xf32>
    %cst_92 = arith.constant 5.000000e-01 : f32
    %268 = vector.broadcast %cst_92 : f32 to vector<2x32xf32>
    %269 = arith.mulf %268, %267 : vector<2x32xf32>
    %270 = math.tanh %269 : vector<2x32xf32>
    %cst_93 = arith.constant 1.000000e+00 : f32
    %271 = vector.broadcast %cst_93 : f32 to vector<2x32xf32>
    %272 = arith.addf %270, %271 : vector<2x32xf32>
    %cst_94 = arith.constant 5.000000e-01 : f32
    %273 = vector.broadcast %cst_94 : f32 to vector<2x32xf32>
    %274 = arith.mulf %273, %272 : vector<2x32xf32>
    %275 = arith.mulf %264, %234 : vector<2x32xf32>
    %276 = arith.mulf %256, %266 : vector<2x32xf32>
    %277 = arith.addf %275, %276 : vector<2x32xf32>
    %278 = math.tanh %277 : vector<2x32xf32>
    %279 = arith.mulf %274, %278 : vector<2x32xf32>
    %c4_i32 = arith.constant 4 : i32
    %280 = vector.broadcast %c4_i32 : i32 to vector<2x8x32xi32>
    %281 = arith.cmpi eq, %59, %280 : vector<2x8x32xi32>
    %282 = arith.extui %281 : vector<2x8x32xi1> to vector<2x8x32xi32>
    %283 = arith.sitofp %282 : vector<2x8x32xi32> to vector<2x8x32xf32>
    %284 = vector.shape_cast %279 : vector<2x32xf32> to vector<2x1x32xf32>
    %285 = vector.broadcast %284 : vector<2x1x32xf32> to vector<2x8x32xf32>
    %286 = arith.mulf %283, %285 : vector<2x8x32xf32>
    %287 = arith.addf %244, %286 : vector<2x8x32xf32>
    %288 = vector.extract_strided_slice %69 {offsets = [0, 5, 0], sizes = [2, 1, 128], strides = [1, 1, 1]} : vector<2x8x128xf32> to vector<2x1x128xf32>
    %289 = vector.shape_cast %288 : vector<2x1x128xf32> to vector<2x128xf32>
    %cst_95 = arith.constant dense<0.000000e+00> : vector<2x128xf32>
    %290 = tpu.matmul %279, %61, %cst_95 {dimension_numbers = #tpu.dot_dimension_numbers<[1], [0], [0], [1], [0, 0, 1, 1], [], []>} : vector<2x32xf32>, vector<32x128xf32>, vector<2x128xf32> -> vector<2x128xf32>
    %291 = arith.addf %289, %290 : vector<2x128xf32>
    %292 = vector.extract_strided_slice %291 {offsets = [0, 0], sizes = [2, 32], strides = [1, 1]} : vector<2x128xf32> to vector<2x32xf32>
    %cst_96 = arith.constant 5.000000e-01 : f32
    %293 = vector.broadcast %cst_96 : f32 to vector<2x32xf32>
    %294 = arith.mulf %293, %292 : vector<2x32xf32>
    %295 = math.tanh %294 : vector<2x32xf32>
    %cst_97 = arith.constant 1.000000e+00 : f32
    %296 = vector.broadcast %cst_97 : f32 to vector<2x32xf32>
    %297 = arith.addf %295, %296 : vector<2x32xf32>
    %cst_98 = arith.constant 5.000000e-01 : f32
    %298 = vector.broadcast %cst_98 : f32 to vector<2x32xf32>
    %299 = arith.mulf %298, %297 : vector<2x32xf32>
    %300 = vector.extract_strided_slice %291 {offsets = [0, 32], sizes = [2, 32], strides = [1, 1]} : vector<2x128xf32> to vector<2x32xf32>
    %cst_99 = arith.constant 5.000000e-01 : f32
    %301 = vector.broadcast %cst_99 : f32 to vector<2x32xf32>
    %302 = arith.mulf %301, %300 : vector<2x32xf32>
    %303 = math.tanh %302 : vector<2x32xf32>
    %cst_100 = arith.constant 1.000000e+00 : f32
    %304 = vector.broadcast %cst_100 : f32 to vector<2x32xf32>
    %305 = arith.addf %303, %304 : vector<2x32xf32>
    %cst_101 = arith.constant 5.000000e-01 : f32
    %306 = vector.broadcast %cst_101 : f32 to vector<2x32xf32>
    %307 = arith.mulf %306, %305 : vector<2x32xf32>
    %308 = vector.extract_strided_slice %291 {offsets = [0, 64], sizes = [2, 32], strides = [1, 1]} : vector<2x128xf32> to vector<2x32xf32>
    %309 = math.tanh %308 : vector<2x32xf32>
    %310 = vector.extract_strided_slice %291 {offsets = [0, 96], sizes = [2, 32], strides = [1, 1]} : vector<2x128xf32> to vector<2x32xf32>
    %cst_102 = arith.constant 5.000000e-01 : f32
    %311 = vector.broadcast %cst_102 : f32 to vector<2x32xf32>
    %312 = arith.mulf %311, %310 : vector<2x32xf32>
    %313 = math.tanh %312 : vector<2x32xf32>
    %cst_103 = arith.constant 1.000000e+00 : f32
    %314 = vector.broadcast %cst_103 : f32 to vector<2x32xf32>
    %315 = arith.addf %313, %314 : vector<2x32xf32>
    %cst_104 = arith.constant 5.000000e-01 : f32
    %316 = vector.broadcast %cst_104 : f32 to vector<2x32xf32>
    %317 = arith.mulf %316, %315 : vector<2x32xf32>
    %318 = arith.mulf %307, %277 : vector<2x32xf32>
    %319 = arith.mulf %299, %309 : vector<2x32xf32>
    %320 = arith.addf %318, %319 : vector<2x32xf32>
    %321 = math.tanh %320 : vector<2x32xf32>
    %322 = arith.mulf %317, %321 : vector<2x32xf32>
    %c5_i32 = arith.constant 5 : i32
    %323 = vector.broadcast %c5_i32 : i32 to vector<2x8x32xi32>
    %324 = arith.cmpi eq, %59, %323 : vector<2x8x32xi32>
    %325 = arith.extui %324 : vector<2x8x32xi1> to vector<2x8x32xi32>
    %326 = arith.sitofp %325 : vector<2x8x32xi32> to vector<2x8x32xf32>
    %327 = vector.shape_cast %322 : vector<2x32xf32> to vector<2x1x32xf32>
    %328 = vector.broadcast %327 : vector<2x1x32xf32> to vector<2x8x32xf32>
    %329 = arith.mulf %326, %328 : vector<2x8x32xf32>
    %330 = arith.addf %287, %329 : vector<2x8x32xf32>
    %331 = vector.extract_strided_slice %69 {offsets = [0, 6, 0], sizes = [2, 1, 128], strides = [1, 1, 1]} : vector<2x8x128xf32> to vector<2x1x128xf32>
    %332 = vector.shape_cast %331 : vector<2x1x128xf32> to vector<2x128xf32>
    %cst_105 = arith.constant dense<0.000000e+00> : vector<2x128xf32>
    %333 = tpu.matmul %322, %61, %cst_105 {dimension_numbers = #tpu.dot_dimension_numbers<[1], [0], [0], [1], [0, 0, 1, 1], [], []>} : vector<2x32xf32>, vector<32x128xf32>, vector<2x128xf32> -> vector<2x128xf32>
    %334 = arith.addf %332, %333 : vector<2x128xf32>
    %335 = vector.extract_strided_slice %334 {offsets = [0, 0], sizes = [2, 32], strides = [1, 1]} : vector<2x128xf32> to vector<2x32xf32>
    %cst_106 = arith.constant 5.000000e-01 : f32
    %336 = vector.broadcast %cst_106 : f32 to vector<2x32xf32>
    %337 = arith.mulf %336, %335 : vector<2x32xf32>
    %338 = math.tanh %337 : vector<2x32xf32>
    %cst_107 = arith.constant 1.000000e+00 : f32
    %339 = vector.broadcast %cst_107 : f32 to vector<2x32xf32>
    %340 = arith.addf %338, %339 : vector<2x32xf32>
    %cst_108 = arith.constant 5.000000e-01 : f32
    %341 = vector.broadcast %cst_108 : f32 to vector<2x32xf32>
    %342 = arith.mulf %341, %340 : vector<2x32xf32>
    %343 = vector.extract_strided_slice %334 {offsets = [0, 32], sizes = [2, 32], strides = [1, 1]} : vector<2x128xf32> to vector<2x32xf32>
    %cst_109 = arith.constant 5.000000e-01 : f32
    %344 = vector.broadcast %cst_109 : f32 to vector<2x32xf32>
    %345 = arith.mulf %344, %343 : vector<2x32xf32>
    %346 = math.tanh %345 : vector<2x32xf32>
    %cst_110 = arith.constant 1.000000e+00 : f32
    %347 = vector.broadcast %cst_110 : f32 to vector<2x32xf32>
    %348 = arith.addf %346, %347 : vector<2x32xf32>
    %cst_111 = arith.constant 5.000000e-01 : f32
    %349 = vector.broadcast %cst_111 : f32 to vector<2x32xf32>
    %350 = arith.mulf %349, %348 : vector<2x32xf32>
    %351 = vector.extract_strided_slice %334 {offsets = [0, 64], sizes = [2, 32], strides = [1, 1]} : vector<2x128xf32> to vector<2x32xf32>
    %352 = math.tanh %351 : vector<2x32xf32>
    %353 = vector.extract_strided_slice %334 {offsets = [0, 96], sizes = [2, 32], strides = [1, 1]} : vector<2x128xf32> to vector<2x32xf32>
    %cst_112 = arith.constant 5.000000e-01 : f32
    %354 = vector.broadcast %cst_112 : f32 to vector<2x32xf32>
    %355 = arith.mulf %354, %353 : vector<2x32xf32>
    %356 = math.tanh %355 : vector<2x32xf32>
    %cst_113 = arith.constant 1.000000e+00 : f32
    %357 = vector.broadcast %cst_113 : f32 to vector<2x32xf32>
    %358 = arith.addf %356, %357 : vector<2x32xf32>
    %cst_114 = arith.constant 5.000000e-01 : f32
    %359 = vector.broadcast %cst_114 : f32 to vector<2x32xf32>
    %360 = arith.mulf %359, %358 : vector<2x32xf32>
    %361 = arith.mulf %350, %320 : vector<2x32xf32>
    %362 = arith.mulf %342, %352 : vector<2x32xf32>
    %363 = arith.addf %361, %362 : vector<2x32xf32>
    %364 = math.tanh %363 : vector<2x32xf32>
    %365 = arith.mulf %360, %364 : vector<2x32xf32>
    %c6_i32 = arith.constant 6 : i32
    %366 = vector.broadcast %c6_i32 : i32 to vector<2x8x32xi32>
    %367 = arith.cmpi eq, %59, %366 : vector<2x8x32xi32>
    %368 = arith.extui %367 : vector<2x8x32xi1> to vector<2x8x32xi32>
    %369 = arith.sitofp %368 : vector<2x8x32xi32> to vector<2x8x32xf32>
    %370 = vector.shape_cast %365 : vector<2x32xf32> to vector<2x1x32xf32>
    %371 = vector.broadcast %370 : vector<2x1x32xf32> to vector<2x8x32xf32>
    %372 = arith.mulf %369, %371 : vector<2x8x32xf32>
    %373 = arith.addf %330, %372 : vector<2x8x32xf32>
    %374 = vector.extract_strided_slice %69 {offsets = [0, 7, 0], sizes = [2, 1, 128], strides = [1, 1, 1]} : vector<2x8x128xf32> to vector<2x1x128xf32>
    %375 = vector.shape_cast %374 : vector<2x1x128xf32> to vector<2x128xf32>
    %cst_115 = arith.constant dense<0.000000e+00> : vector<2x128xf32>
    %376 = tpu.matmul %365, %61, %cst_115 {dimension_numbers = #tpu.dot_dimension_numbers<[1], [0], [0], [1], [0, 0, 1, 1], [], []>} : vector<2x32xf32>, vector<32x128xf32>, vector<2x128xf32> -> vector<2x128xf32>
    %377 = arith.addf %375, %376 : vector<2x128xf32>
    %378 = vector.extract_strided_slice %377 {offsets = [0, 0], sizes = [2, 32], strides = [1, 1]} : vector<2x128xf32> to vector<2x32xf32>
    %cst_116 = arith.constant 5.000000e-01 : f32
    %379 = vector.broadcast %cst_116 : f32 to vector<2x32xf32>
    %380 = arith.mulf %379, %378 : vector<2x32xf32>
    %381 = math.tanh %380 : vector<2x32xf32>
    %cst_117 = arith.constant 1.000000e+00 : f32
    %382 = vector.broadcast %cst_117 : f32 to vector<2x32xf32>
    %383 = arith.addf %381, %382 : vector<2x32xf32>
    %cst_118 = arith.constant 5.000000e-01 : f32
    %384 = vector.broadcast %cst_118 : f32 to vector<2x32xf32>
    %385 = arith.mulf %384, %383 : vector<2x32xf32>
    %386 = vector.extract_strided_slice %377 {offsets = [0, 32], sizes = [2, 32], strides = [1, 1]} : vector<2x128xf32> to vector<2x32xf32>
    %cst_119 = arith.constant 5.000000e-01 : f32
    %387 = vector.broadcast %cst_119 : f32 to vector<2x32xf32>
    %388 = arith.mulf %387, %386 : vector<2x32xf32>
    %389 = math.tanh %388 : vector<2x32xf32>
    %cst_120 = arith.constant 1.000000e+00 : f32
    %390 = vector.broadcast %cst_120 : f32 to vector<2x32xf32>
    %391 = arith.addf %389, %390 : vector<2x32xf32>
    %cst_121 = arith.constant 5.000000e-01 : f32
    %392 = vector.broadcast %cst_121 : f32 to vector<2x32xf32>
    %393 = arith.mulf %392, %391 : vector<2x32xf32>
    %394 = vector.extract_strided_slice %377 {offsets = [0, 64], sizes = [2, 32], strides = [1, 1]} : vector<2x128xf32> to vector<2x32xf32>
    %395 = math.tanh %394 : vector<2x32xf32>
    %396 = vector.extract_strided_slice %377 {offsets = [0, 96], sizes = [2, 32], strides = [1, 1]} : vector<2x128xf32> to vector<2x32xf32>
    %cst_122 = arith.constant 5.000000e-01 : f32
    %397 = vector.broadcast %cst_122 : f32 to vector<2x32xf32>
    %398 = arith.mulf %397, %396 : vector<2x32xf32>
    %399 = math.tanh %398 : vector<2x32xf32>
    %cst_123 = arith.constant 1.000000e+00 : f32
    %400 = vector.broadcast %cst_123 : f32 to vector<2x32xf32>
    %401 = arith.addf %399, %400 : vector<2x32xf32>
    %cst_124 = arith.constant 5.000000e-01 : f32
    %402 = vector.broadcast %cst_124 : f32 to vector<2x32xf32>
    %403 = arith.mulf %402, %401 : vector<2x32xf32>
    %404 = arith.mulf %393, %363 : vector<2x32xf32>
    %405 = arith.mulf %385, %395 : vector<2x32xf32>
    %406 = arith.addf %404, %405 : vector<2x32xf32>
    %407 = math.tanh %406 : vector<2x32xf32>
    %408 = arith.mulf %403, %407 : vector<2x32xf32>
    %c7_i32 = arith.constant 7 : i32
    %409 = vector.broadcast %c7_i32 : i32 to vector<2x8x32xi32>
    %410 = arith.cmpi eq, %59, %409 : vector<2x8x32xi32>
    %411 = arith.extui %410 : vector<2x8x32xi1> to vector<2x8x32xi32>
    %412 = arith.sitofp %411 : vector<2x8x32xi32> to vector<2x8x32xf32>
    %413 = vector.shape_cast %408 : vector<2x32xf32> to vector<2x1x32xf32>
    %414 = vector.broadcast %413 : vector<2x1x32xf32> to vector<2x8x32xf32>
    %415 = arith.mulf %412, %414 : vector<2x8x32xf32>
    %416 = arith.addf %373, %415 : vector<2x8x32xf32>
    %417 = vector.shape_cast %416 : vector<2x8x32xf32> to vector<16x32xf32>
    %c1 = arith.constant 1 : index
    %c0_125 = arith.constant 0 : index
    %c0_126 = arith.constant 0 : index
    %418 = vector.load %arg12[%c1, %c0_125, %c0_126] : memref<2x32x128xf32, #tpu.memory_space<vmem>>, vector<1x32x128xf32>
    %419 = vector.shape_cast %418 : vector<1x32x128xf32> to vector<32x128xf32>
    %c1_127 = arith.constant 1 : index
    %c0_128 = arith.constant 0 : index
    %c0_129 = arith.constant 0 : index
    %420 = vector.load %arg11[%c1_127, %c0_128, %c0_129] : memref<2x32x128xf32, #tpu.memory_space<vmem>>, vector<1x32x128xf32>
    %421 = vector.shape_cast %420 : vector<1x32x128xf32> to vector<32x128xf32>
    %cst_130 = arith.constant dense<0.000000e+00> : vector<16x128xf32>
    %422 = tpu.matmul %417, %421, %cst_130 {dimension_numbers = #tpu.dot_dimension_numbers<[1], [0], [0], [1], [0, 0, 1, 1], [], []>} : vector<16x32xf32>, vector<32x128xf32>, vector<16x128xf32> -> vector<16x128xf32>
    %c1_131 = arith.constant 1 : index
    %c0_132 = arith.constant 0 : index
    %c0_133 = arith.constant 0 : index
    %423 = vector.load %arg13[%c1_131, %c0_132, %c0_133] : memref<2x1x128xf32, #tpu.memory_space<vmem>>, vector<1x1x128xf32>
    %424 = vector.shape_cast %423 : vector<1x1x128xf32> to vector<1x128xf32>
    %425 = vector.broadcast %424 : vector<1x128xf32> to vector<16x128xf32>
    %426 = arith.addf %422, %425 : vector<16x128xf32>
    %427 = vector.shape_cast %426 : vector<16x128xf32> to vector<2x8x128xf32>
    %cst_134 = arith.constant 0.000000e+00 : f32
    %428 = vector.broadcast %cst_134 : f32 to vector<2x32xf32>
    %cst_135 = arith.constant 0.000000e+00 : f32
    %429 = vector.broadcast %cst_135 : f32 to vector<2x32xf32>
    %cst_136 = arith.constant 0.000000e+00 : f32
    %430 = vector.broadcast %cst_136 : f32 to vector<2x8x32xf32>
    %431 = vector.extract_strided_slice %427 {offsets = [0, 0, 0], sizes = [2, 1, 128], strides = [1, 1, 1]} : vector<2x8x128xf32> to vector<2x1x128xf32>
    %432 = vector.shape_cast %431 : vector<2x1x128xf32> to vector<2x128xf32>
    %cst_137 = arith.constant dense<0.000000e+00> : vector<2x128xf32>
    %433 = tpu.matmul %428, %419, %cst_137 {dimension_numbers = #tpu.dot_dimension_numbers<[1], [0], [0], [1], [0, 0, 1, 1], [], []>} : vector<2x32xf32>, vector<32x128xf32>, vector<2x128xf32> -> vector<2x128xf32>
    %434 = arith.addf %432, %433 : vector<2x128xf32>
    %435 = vector.extract_strided_slice %434 {offsets = [0, 0], sizes = [2, 32], strides = [1, 1]} : vector<2x128xf32> to vector<2x32xf32>
    %cst_138 = arith.constant 5.000000e-01 : f32
    %436 = vector.broadcast %cst_138 : f32 to vector<2x32xf32>
    %437 = arith.mulf %436, %435 : vector<2x32xf32>
    %438 = math.tanh %437 : vector<2x32xf32>
    %cst_139 = arith.constant 1.000000e+00 : f32
    %439 = vector.broadcast %cst_139 : f32 to vector<2x32xf32>
    %440 = arith.addf %438, %439 : vector<2x32xf32>
    %cst_140 = arith.constant 5.000000e-01 : f32
    %441 = vector.broadcast %cst_140 : f32 to vector<2x32xf32>
    %442 = arith.mulf %441, %440 : vector<2x32xf32>
    %443 = vector.extract_strided_slice %434 {offsets = [0, 32], sizes = [2, 32], strides = [1, 1]} : vector<2x128xf32> to vector<2x32xf32>
    %cst_141 = arith.constant 5.000000e-01 : f32
    %444 = vector.broadcast %cst_141 : f32 to vector<2x32xf32>
    %445 = arith.mulf %444, %443 : vector<2x32xf32>
    %446 = math.tanh %445 : vector<2x32xf32>
    %cst_142 = arith.constant 1.000000e+00 : f32
    %447 = vector.broadcast %cst_142 : f32 to vector<2x32xf32>
    %448 = arith.addf %446, %447 : vector<2x32xf32>
    %cst_143 = arith.constant 5.000000e-01 : f32
    %449 = vector.broadcast %cst_143 : f32 to vector<2x32xf32>
    %450 = arith.mulf %449, %448 : vector<2x32xf32>
    %451 = vector.extract_strided_slice %434 {offsets = [0, 64], sizes = [2, 32], strides = [1, 1]} : vector<2x128xf32> to vector<2x32xf32>
    %452 = math.tanh %451 : vector<2x32xf32>
    %453 = vector.extract_strided_slice %434 {offsets = [0, 96], sizes = [2, 32], strides = [1, 1]} : vector<2x128xf32> to vector<2x32xf32>
    %cst_144 = arith.constant 5.000000e-01 : f32
    %454 = vector.broadcast %cst_144 : f32 to vector<2x32xf32>
    %455 = arith.mulf %454, %453 : vector<2x32xf32>
    %456 = math.tanh %455 : vector<2x32xf32>
    %cst_145 = arith.constant 1.000000e+00 : f32
    %457 = vector.broadcast %cst_145 : f32 to vector<2x32xf32>
    %458 = arith.addf %456, %457 : vector<2x32xf32>
    %cst_146 = arith.constant 5.000000e-01 : f32
    %459 = vector.broadcast %cst_146 : f32 to vector<2x32xf32>
    %460 = arith.mulf %459, %458 : vector<2x32xf32>
    %461 = arith.mulf %450, %429 : vector<2x32xf32>
    %462 = arith.mulf %442, %452 : vector<2x32xf32>
    %463 = arith.addf %461, %462 : vector<2x32xf32>
    %464 = math.tanh %463 : vector<2x32xf32>
    %465 = arith.mulf %460, %464 : vector<2x32xf32>
    %c0_i32_147 = arith.constant 0 : i32
    %466 = vector.broadcast %c0_i32_147 : i32 to vector<2x8x32xi32>
    %467 = arith.cmpi eq, %59, %466 : vector<2x8x32xi32>
    %468 = arith.extui %467 : vector<2x8x32xi1> to vector<2x8x32xi32>
    %469 = arith.sitofp %468 : vector<2x8x32xi32> to vector<2x8x32xf32>
    %470 = vector.shape_cast %465 : vector<2x32xf32> to vector<2x1x32xf32>
    %471 = vector.broadcast %470 : vector<2x1x32xf32> to vector<2x8x32xf32>
    %472 = arith.mulf %469, %471 : vector<2x8x32xf32>
    %473 = arith.addf %430, %472 : vector<2x8x32xf32>
    %474 = vector.extract_strided_slice %427 {offsets = [0, 1, 0], sizes = [2, 1, 128], strides = [1, 1, 1]} : vector<2x8x128xf32> to vector<2x1x128xf32>
    %475 = vector.shape_cast %474 : vector<2x1x128xf32> to vector<2x128xf32>
    %cst_148 = arith.constant dense<0.000000e+00> : vector<2x128xf32>
    %476 = tpu.matmul %465, %419, %cst_148 {dimension_numbers = #tpu.dot_dimension_numbers<[1], [0], [0], [1], [0, 0, 1, 1], [], []>} : vector<2x32xf32>, vector<32x128xf32>, vector<2x128xf32> -> vector<2x128xf32>
    %477 = arith.addf %475, %476 : vector<2x128xf32>
    %478 = vector.extract_strided_slice %477 {offsets = [0, 0], sizes = [2, 32], strides = [1, 1]} : vector<2x128xf32> to vector<2x32xf32>
    %cst_149 = arith.constant 5.000000e-01 : f32
    %479 = vector.broadcast %cst_149 : f32 to vector<2x32xf32>
    %480 = arith.mulf %479, %478 : vector<2x32xf32>
    %481 = math.tanh %480 : vector<2x32xf32>
    %cst_150 = arith.constant 1.000000e+00 : f32
    %482 = vector.broadcast %cst_150 : f32 to vector<2x32xf32>
    %483 = arith.addf %481, %482 : vector<2x32xf32>
    %cst_151 = arith.constant 5.000000e-01 : f32
    %484 = vector.broadcast %cst_151 : f32 to vector<2x32xf32>
    %485 = arith.mulf %484, %483 : vector<2x32xf32>
    %486 = vector.extract_strided_slice %477 {offsets = [0, 32], sizes = [2, 32], strides = [1, 1]} : vector<2x128xf32> to vector<2x32xf32>
    %cst_152 = arith.constant 5.000000e-01 : f32
    %487 = vector.broadcast %cst_152 : f32 to vector<2x32xf32>
    %488 = arith.mulf %487, %486 : vector<2x32xf32>
    %489 = math.tanh %488 : vector<2x32xf32>
    %cst_153 = arith.constant 1.000000e+00 : f32
    %490 = vector.broadcast %cst_153 : f32 to vector<2x32xf32>
    %491 = arith.addf %489, %490 : vector<2x32xf32>
    %cst_154 = arith.constant 5.000000e-01 : f32
    %492 = vector.broadcast %cst_154 : f32 to vector<2x32xf32>
    %493 = arith.mulf %492, %491 : vector<2x32xf32>
    %494 = vector.extract_strided_slice %477 {offsets = [0, 64], sizes = [2, 32], strides = [1, 1]} : vector<2x128xf32> to vector<2x32xf32>
    %495 = math.tanh %494 : vector<2x32xf32>
    %496 = vector.extract_strided_slice %477 {offsets = [0, 96], sizes = [2, 32], strides = [1, 1]} : vector<2x128xf32> to vector<2x32xf32>
    %cst_155 = arith.constant 5.000000e-01 : f32
    %497 = vector.broadcast %cst_155 : f32 to vector<2x32xf32>
    %498 = arith.mulf %497, %496 : vector<2x32xf32>
    %499 = math.tanh %498 : vector<2x32xf32>
    %cst_156 = arith.constant 1.000000e+00 : f32
    %500 = vector.broadcast %cst_156 : f32 to vector<2x32xf32>
    %501 = arith.addf %499, %500 : vector<2x32xf32>
    %cst_157 = arith.constant 5.000000e-01 : f32
    %502 = vector.broadcast %cst_157 : f32 to vector<2x32xf32>
    %503 = arith.mulf %502, %501 : vector<2x32xf32>
    %504 = arith.mulf %493, %463 : vector<2x32xf32>
    %505 = arith.mulf %485, %495 : vector<2x32xf32>
    %506 = arith.addf %504, %505 : vector<2x32xf32>
    %507 = math.tanh %506 : vector<2x32xf32>
    %508 = arith.mulf %503, %507 : vector<2x32xf32>
    %c1_i32_158 = arith.constant 1 : i32
    %509 = vector.broadcast %c1_i32_158 : i32 to vector<2x8x32xi32>
    %510 = arith.cmpi eq, %59, %509 : vector<2x8x32xi32>
    %511 = arith.extui %510 : vector<2x8x32xi1> to vector<2x8x32xi32>
    %512 = arith.sitofp %511 : vector<2x8x32xi32> to vector<2x8x32xf32>
    %513 = vector.shape_cast %508 : vector<2x32xf32> to vector<2x1x32xf32>
    %514 = vector.broadcast %513 : vector<2x1x32xf32> to vector<2x8x32xf32>
    %515 = arith.mulf %512, %514 : vector<2x8x32xf32>
    %516 = arith.addf %473, %515 : vector<2x8x32xf32>
    %517 = vector.extract_strided_slice %427 {offsets = [0, 2, 0], sizes = [2, 1, 128], strides = [1, 1, 1]} : vector<2x8x128xf32> to vector<2x1x128xf32>
    %518 = vector.shape_cast %517 : vector<2x1x128xf32> to vector<2x128xf32>
    %cst_159 = arith.constant dense<0.000000e+00> : vector<2x128xf32>
    %519 = tpu.matmul %508, %419, %cst_159 {dimension_numbers = #tpu.dot_dimension_numbers<[1], [0], [0], [1], [0, 0, 1, 1], [], []>} : vector<2x32xf32>, vector<32x128xf32>, vector<2x128xf32> -> vector<2x128xf32>
    %520 = arith.addf %518, %519 : vector<2x128xf32>
    %521 = vector.extract_strided_slice %520 {offsets = [0, 0], sizes = [2, 32], strides = [1, 1]} : vector<2x128xf32> to vector<2x32xf32>
    %cst_160 = arith.constant 5.000000e-01 : f32
    %522 = vector.broadcast %cst_160 : f32 to vector<2x32xf32>
    %523 = arith.mulf %522, %521 : vector<2x32xf32>
    %524 = math.tanh %523 : vector<2x32xf32>
    %cst_161 = arith.constant 1.000000e+00 : f32
    %525 = vector.broadcast %cst_161 : f32 to vector<2x32xf32>
    %526 = arith.addf %524, %525 : vector<2x32xf32>
    %cst_162 = arith.constant 5.000000e-01 : f32
    %527 = vector.broadcast %cst_162 : f32 to vector<2x32xf32>
    %528 = arith.mulf %527, %526 : vector<2x32xf32>
    %529 = vector.extract_strided_slice %520 {offsets = [0, 32], sizes = [2, 32], strides = [1, 1]} : vector<2x128xf32> to vector<2x32xf32>
    %cst_163 = arith.constant 5.000000e-01 : f32
    %530 = vector.broadcast %cst_163 : f32 to vector<2x32xf32>
    %531 = arith.mulf %530, %529 : vector<2x32xf32>
    %532 = math.tanh %531 : vector<2x32xf32>
    %cst_164 = arith.constant 1.000000e+00 : f32
    %533 = vector.broadcast %cst_164 : f32 to vector<2x32xf32>
    %534 = arith.addf %532, %533 : vector<2x32xf32>
    %cst_165 = arith.constant 5.000000e-01 : f32
    %535 = vector.broadcast %cst_165 : f32 to vector<2x32xf32>
    %536 = arith.mulf %535, %534 : vector<2x32xf32>
    %537 = vector.extract_strided_slice %520 {offsets = [0, 64], sizes = [2, 32], strides = [1, 1]} : vector<2x128xf32> to vector<2x32xf32>
    %538 = math.tanh %537 : vector<2x32xf32>
    %539 = vector.extract_strided_slice %520 {offsets = [0, 96], sizes = [2, 32], strides = [1, 1]} : vector<2x128xf32> to vector<2x32xf32>
    %cst_166 = arith.constant 5.000000e-01 : f32
    %540 = vector.broadcast %cst_166 : f32 to vector<2x32xf32>
    %541 = arith.mulf %540, %539 : vector<2x32xf32>
    %542 = math.tanh %541 : vector<2x32xf32>
    %cst_167 = arith.constant 1.000000e+00 : f32
    %543 = vector.broadcast %cst_167 : f32 to vector<2x32xf32>
    %544 = arith.addf %542, %543 : vector<2x32xf32>
    %cst_168 = arith.constant 5.000000e-01 : f32
    %545 = vector.broadcast %cst_168 : f32 to vector<2x32xf32>
    %546 = arith.mulf %545, %544 : vector<2x32xf32>
    %547 = arith.mulf %536, %506 : vector<2x32xf32>
    %548 = arith.mulf %528, %538 : vector<2x32xf32>
    %549 = arith.addf %547, %548 : vector<2x32xf32>
    %550 = math.tanh %549 : vector<2x32xf32>
    %551 = arith.mulf %546, %550 : vector<2x32xf32>
    %c2_i32_169 = arith.constant 2 : i32
    %552 = vector.broadcast %c2_i32_169 : i32 to vector<2x8x32xi32>
    %553 = arith.cmpi eq, %59, %552 : vector<2x8x32xi32>
    %554 = arith.extui %553 : vector<2x8x32xi1> to vector<2x8x32xi32>
    %555 = arith.sitofp %554 : vector<2x8x32xi32> to vector<2x8x32xf32>
    %556 = vector.shape_cast %551 : vector<2x32xf32> to vector<2x1x32xf32>
    %557 = vector.broadcast %556 : vector<2x1x32xf32> to vector<2x8x32xf32>
    %558 = arith.mulf %555, %557 : vector<2x8x32xf32>
    %559 = arith.addf %516, %558 : vector<2x8x32xf32>
    %560 = vector.extract_strided_slice %427 {offsets = [0, 3, 0], sizes = [2, 1, 128], strides = [1, 1, 1]} : vector<2x8x128xf32> to vector<2x1x128xf32>
    %561 = vector.shape_cast %560 : vector<2x1x128xf32> to vector<2x128xf32>
    %cst_170 = arith.constant dense<0.000000e+00> : vector<2x128xf32>
    %562 = tpu.matmul %551, %419, %cst_170 {dimension_numbers = #tpu.dot_dimension_numbers<[1], [0], [0], [1], [0, 0, 1, 1], [], []>} : vector<2x32xf32>, vector<32x128xf32>, vector<2x128xf32> -> vector<2x128xf32>
    %563 = arith.addf %561, %562 : vector<2x128xf32>
    %564 = vector.extract_strided_slice %563 {offsets = [0, 0], sizes = [2, 32], strides = [1, 1]} : vector<2x128xf32> to vector<2x32xf32>
    %cst_171 = arith.constant 5.000000e-01 : f32
    %565 = vector.broadcast %cst_171 : f32 to vector<2x32xf32>
    %566 = arith.mulf %565, %564 : vector<2x32xf32>
    %567 = math.tanh %566 : vector<2x32xf32>
    %cst_172 = arith.constant 1.000000e+00 : f32
    %568 = vector.broadcast %cst_172 : f32 to vector<2x32xf32>
    %569 = arith.addf %567, %568 : vector<2x32xf32>
    %cst_173 = arith.constant 5.000000e-01 : f32
    %570 = vector.broadcast %cst_173 : f32 to vector<2x32xf32>
    %571 = arith.mulf %570, %569 : vector<2x32xf32>
    %572 = vector.extract_strided_slice %563 {offsets = [0, 32], sizes = [2, 32], strides = [1, 1]} : vector<2x128xf32> to vector<2x32xf32>
    %cst_174 = arith.constant 5.000000e-01 : f32
    %573 = vector.broadcast %cst_174 : f32 to vector<2x32xf32>
    %574 = arith.mulf %573, %572 : vector<2x32xf32>
    %575 = math.tanh %574 : vector<2x32xf32>
    %cst_175 = arith.constant 1.000000e+00 : f32
    %576 = vector.broadcast %cst_175 : f32 to vector<2x32xf32>
    %577 = arith.addf %575, %576 : vector<2x32xf32>
    %cst_176 = arith.constant 5.000000e-01 : f32
    %578 = vector.broadcast %cst_176 : f32 to vector<2x32xf32>
    %579 = arith.mulf %578, %577 : vector<2x32xf32>
    %580 = vector.extract_strided_slice %563 {offsets = [0, 64], sizes = [2, 32], strides = [1, 1]} : vector<2x128xf32> to vector<2x32xf32>
    %581 = math.tanh %580 : vector<2x32xf32>
    %582 = vector.extract_strided_slice %563 {offsets = [0, 96], sizes = [2, 32], strides = [1, 1]} : vector<2x128xf32> to vector<2x32xf32>
    %cst_177 = arith.constant 5.000000e-01 : f32
    %583 = vector.broadcast %cst_177 : f32 to vector<2x32xf32>
    %584 = arith.mulf %583, %582 : vector<2x32xf32>
    %585 = math.tanh %584 : vector<2x32xf32>
    %cst_178 = arith.constant 1.000000e+00 : f32
    %586 = vector.broadcast %cst_178 : f32 to vector<2x32xf32>
    %587 = arith.addf %585, %586 : vector<2x32xf32>
    %cst_179 = arith.constant 5.000000e-01 : f32
    %588 = vector.broadcast %cst_179 : f32 to vector<2x32xf32>
    %589 = arith.mulf %588, %587 : vector<2x32xf32>
    %590 = arith.mulf %579, %549 : vector<2x32xf32>
    %591 = arith.mulf %571, %581 : vector<2x32xf32>
    %592 = arith.addf %590, %591 : vector<2x32xf32>
    %593 = math.tanh %592 : vector<2x32xf32>
    %594 = arith.mulf %589, %593 : vector<2x32xf32>
    %c3_i32_180 = arith.constant 3 : i32
    %595 = vector.broadcast %c3_i32_180 : i32 to vector<2x8x32xi32>
    %596 = arith.cmpi eq, %59, %595 : vector<2x8x32xi32>
    %597 = arith.extui %596 : vector<2x8x32xi1> to vector<2x8x32xi32>
    %598 = arith.sitofp %597 : vector<2x8x32xi32> to vector<2x8x32xf32>
    %599 = vector.shape_cast %594 : vector<2x32xf32> to vector<2x1x32xf32>
    %600 = vector.broadcast %599 : vector<2x1x32xf32> to vector<2x8x32xf32>
    %601 = arith.mulf %598, %600 : vector<2x8x32xf32>
    %602 = arith.addf %559, %601 : vector<2x8x32xf32>
    %603 = vector.extract_strided_slice %427 {offsets = [0, 4, 0], sizes = [2, 1, 128], strides = [1, 1, 1]} : vector<2x8x128xf32> to vector<2x1x128xf32>
    %604 = vector.shape_cast %603 : vector<2x1x128xf32> to vector<2x128xf32>
    %cst_181 = arith.constant dense<0.000000e+00> : vector<2x128xf32>
    %605 = tpu.matmul %594, %419, %cst_181 {dimension_numbers = #tpu.dot_dimension_numbers<[1], [0], [0], [1], [0, 0, 1, 1], [], []>} : vector<2x32xf32>, vector<32x128xf32>, vector<2x128xf32> -> vector<2x128xf32>
    %606 = arith.addf %604, %605 : vector<2x128xf32>
    %607 = vector.extract_strided_slice %606 {offsets = [0, 0], sizes = [2, 32], strides = [1, 1]} : vector<2x128xf32> to vector<2x32xf32>
    %cst_182 = arith.constant 5.000000e-01 : f32
    %608 = vector.broadcast %cst_182 : f32 to vector<2x32xf32>
    %609 = arith.mulf %608, %607 : vector<2x32xf32>
    %610 = math.tanh %609 : vector<2x32xf32>
    %cst_183 = arith.constant 1.000000e+00 : f32
    %611 = vector.broadcast %cst_183 : f32 to vector<2x32xf32>
    %612 = arith.addf %610, %611 : vector<2x32xf32>
    %cst_184 = arith.constant 5.000000e-01 : f32
    %613 = vector.broadcast %cst_184 : f32 to vector<2x32xf32>
    %614 = arith.mulf %613, %612 : vector<2x32xf32>
    %615 = vector.extract_strided_slice %606 {offsets = [0, 32], sizes = [2, 32], strides = [1, 1]} : vector<2x128xf32> to vector<2x32xf32>
    %cst_185 = arith.constant 5.000000e-01 : f32
    %616 = vector.broadcast %cst_185 : f32 to vector<2x32xf32>
    %617 = arith.mulf %616, %615 : vector<2x32xf32>
    %618 = math.tanh %617 : vector<2x32xf32>
    %cst_186 = arith.constant 1.000000e+00 : f32
    %619 = vector.broadcast %cst_186 : f32 to vector<2x32xf32>
    %620 = arith.addf %618, %619 : vector<2x32xf32>
    %cst_187 = arith.constant 5.000000e-01 : f32
    %621 = vector.broadcast %cst_187 : f32 to vector<2x32xf32>
    %622 = arith.mulf %621, %620 : vector<2x32xf32>
    %623 = vector.extract_strided_slice %606 {offsets = [0, 64], sizes = [2, 32], strides = [1, 1]} : vector<2x128xf32> to vector<2x32xf32>
    %624 = math.tanh %623 : vector<2x32xf32>
    %625 = vector.extract_strided_slice %606 {offsets = [0, 96], sizes = [2, 32], strides = [1, 1]} : vector<2x128xf32> to vector<2x32xf32>
    %cst_188 = arith.constant 5.000000e-01 : f32
    %626 = vector.broadcast %cst_188 : f32 to vector<2x32xf32>
    %627 = arith.mulf %626, %625 : vector<2x32xf32>
    %628 = math.tanh %627 : vector<2x32xf32>
    %cst_189 = arith.constant 1.000000e+00 : f32
    %629 = vector.broadcast %cst_189 : f32 to vector<2x32xf32>
    %630 = arith.addf %628, %629 : vector<2x32xf32>
    %cst_190 = arith.constant 5.000000e-01 : f32
    %631 = vector.broadcast %cst_190 : f32 to vector<2x32xf32>
    %632 = arith.mulf %631, %630 : vector<2x32xf32>
    %633 = arith.mulf %622, %592 : vector<2x32xf32>
    %634 = arith.mulf %614, %624 : vector<2x32xf32>
    %635 = arith.addf %633, %634 : vector<2x32xf32>
    %636 = math.tanh %635 : vector<2x32xf32>
    %637 = arith.mulf %632, %636 : vector<2x32xf32>
    %c4_i32_191 = arith.constant 4 : i32
    %638 = vector.broadcast %c4_i32_191 : i32 to vector<2x8x32xi32>
    %639 = arith.cmpi eq, %59, %638 : vector<2x8x32xi32>
    %640 = arith.extui %639 : vector<2x8x32xi1> to vector<2x8x32xi32>
    %641 = arith.sitofp %640 : vector<2x8x32xi32> to vector<2x8x32xf32>
    %642 = vector.shape_cast %637 : vector<2x32xf32> to vector<2x1x32xf32>
    %643 = vector.broadcast %642 : vector<2x1x32xf32> to vector<2x8x32xf32>
    %644 = arith.mulf %641, %643 : vector<2x8x32xf32>
    %645 = arith.addf %602, %644 : vector<2x8x32xf32>
    %646 = vector.extract_strided_slice %427 {offsets = [0, 5, 0], sizes = [2, 1, 128], strides = [1, 1, 1]} : vector<2x8x128xf32> to vector<2x1x128xf32>
    %647 = vector.shape_cast %646 : vector<2x1x128xf32> to vector<2x128xf32>
    %cst_192 = arith.constant dense<0.000000e+00> : vector<2x128xf32>
    %648 = tpu.matmul %637, %419, %cst_192 {dimension_numbers = #tpu.dot_dimension_numbers<[1], [0], [0], [1], [0, 0, 1, 1], [], []>} : vector<2x32xf32>, vector<32x128xf32>, vector<2x128xf32> -> vector<2x128xf32>
    %649 = arith.addf %647, %648 : vector<2x128xf32>
    %650 = vector.extract_strided_slice %649 {offsets = [0, 0], sizes = [2, 32], strides = [1, 1]} : vector<2x128xf32> to vector<2x32xf32>
    %cst_193 = arith.constant 5.000000e-01 : f32
    %651 = vector.broadcast %cst_193 : f32 to vector<2x32xf32>
    %652 = arith.mulf %651, %650 : vector<2x32xf32>
    %653 = math.tanh %652 : vector<2x32xf32>
    %cst_194 = arith.constant 1.000000e+00 : f32
    %654 = vector.broadcast %cst_194 : f32 to vector<2x32xf32>
    %655 = arith.addf %653, %654 : vector<2x32xf32>
    %cst_195 = arith.constant 5.000000e-01 : f32
    %656 = vector.broadcast %cst_195 : f32 to vector<2x32xf32>
    %657 = arith.mulf %656, %655 : vector<2x32xf32>
    %658 = vector.extract_strided_slice %649 {offsets = [0, 32], sizes = [2, 32], strides = [1, 1]} : vector<2x128xf32> to vector<2x32xf32>
    %cst_196 = arith.constant 5.000000e-01 : f32
    %659 = vector.broadcast %cst_196 : f32 to vector<2x32xf32>
    %660 = arith.mulf %659, %658 : vector<2x32xf32>
    %661 = math.tanh %660 : vector<2x32xf32>
    %cst_197 = arith.constant 1.000000e+00 : f32
    %662 = vector.broadcast %cst_197 : f32 to vector<2x32xf32>
    %663 = arith.addf %661, %662 : vector<2x32xf32>
    %cst_198 = arith.constant 5.000000e-01 : f32
    %664 = vector.broadcast %cst_198 : f32 to vector<2x32xf32>
    %665 = arith.mulf %664, %663 : vector<2x32xf32>
    %666 = vector.extract_strided_slice %649 {offsets = [0, 64], sizes = [2, 32], strides = [1, 1]} : vector<2x128xf32> to vector<2x32xf32>
    %667 = math.tanh %666 : vector<2x32xf32>
    %668 = vector.extract_strided_slice %649 {offsets = [0, 96], sizes = [2, 32], strides = [1, 1]} : vector<2x128xf32> to vector<2x32xf32>
    %cst_199 = arith.constant 5.000000e-01 : f32
    %669 = vector.broadcast %cst_199 : f32 to vector<2x32xf32>
    %670 = arith.mulf %669, %668 : vector<2x32xf32>
    %671 = math.tanh %670 : vector<2x32xf32>
    %cst_200 = arith.constant 1.000000e+00 : f32
    %672 = vector.broadcast %cst_200 : f32 to vector<2x32xf32>
    %673 = arith.addf %671, %672 : vector<2x32xf32>
    %cst_201 = arith.constant 5.000000e-01 : f32
    %674 = vector.broadcast %cst_201 : f32 to vector<2x32xf32>
    %675 = arith.mulf %674, %673 : vector<2x32xf32>
    %676 = arith.mulf %665, %635 : vector<2x32xf32>
    %677 = arith.mulf %657, %667 : vector<2x32xf32>
    %678 = arith.addf %676, %677 : vector<2x32xf32>
    %679 = math.tanh %678 : vector<2x32xf32>
    %680 = arith.mulf %675, %679 : vector<2x32xf32>
    %c5_i32_202 = arith.constant 5 : i32
    %681 = vector.broadcast %c5_i32_202 : i32 to vector<2x8x32xi32>
    %682 = arith.cmpi eq, %59, %681 : vector<2x8x32xi32>
    %683 = arith.extui %682 : vector<2x8x32xi1> to vector<2x8x32xi32>
    %684 = arith.sitofp %683 : vector<2x8x32xi32> to vector<2x8x32xf32>
    %685 = vector.shape_cast %680 : vector<2x32xf32> to vector<2x1x32xf32>
    %686 = vector.broadcast %685 : vector<2x1x32xf32> to vector<2x8x32xf32>
    %687 = arith.mulf %684, %686 : vector<2x8x32xf32>
    %688 = arith.addf %645, %687 : vector<2x8x32xf32>
    %689 = vector.extract_strided_slice %427 {offsets = [0, 6, 0], sizes = [2, 1, 128], strides = [1, 1, 1]} : vector<2x8x128xf32> to vector<2x1x128xf32>
    %690 = vector.shape_cast %689 : vector<2x1x128xf32> to vector<2x128xf32>
    %cst_203 = arith.constant dense<0.000000e+00> : vector<2x128xf32>
    %691 = tpu.matmul %680, %419, %cst_203 {dimension_numbers = #tpu.dot_dimension_numbers<[1], [0], [0], [1], [0, 0, 1, 1], [], []>} : vector<2x32xf32>, vector<32x128xf32>, vector<2x128xf32> -> vector<2x128xf32>
    %692 = arith.addf %690, %691 : vector<2x128xf32>
    %693 = vector.extract_strided_slice %692 {offsets = [0, 0], sizes = [2, 32], strides = [1, 1]} : vector<2x128xf32> to vector<2x32xf32>
    %cst_204 = arith.constant 5.000000e-01 : f32
    %694 = vector.broadcast %cst_204 : f32 to vector<2x32xf32>
    %695 = arith.mulf %694, %693 : vector<2x32xf32>
    %696 = math.tanh %695 : vector<2x32xf32>
    %cst_205 = arith.constant 1.000000e+00 : f32
    %697 = vector.broadcast %cst_205 : f32 to vector<2x32xf32>
    %698 = arith.addf %696, %697 : vector<2x32xf32>
    %cst_206 = arith.constant 5.000000e-01 : f32
    %699 = vector.broadcast %cst_206 : f32 to vector<2x32xf32>
    %700 = arith.mulf %699, %698 : vector<2x32xf32>
    %701 = vector.extract_strided_slice %692 {offsets = [0, 32], sizes = [2, 32], strides = [1, 1]} : vector<2x128xf32> to vector<2x32xf32>
    %cst_207 = arith.constant 5.000000e-01 : f32
    %702 = vector.broadcast %cst_207 : f32 to vector<2x32xf32>
    %703 = arith.mulf %702, %701 : vector<2x32xf32>
    %704 = math.tanh %703 : vector<2x32xf32>
    %cst_208 = arith.constant 1.000000e+00 : f32
    %705 = vector.broadcast %cst_208 : f32 to vector<2x32xf32>
    %706 = arith.addf %704, %705 : vector<2x32xf32>
    %cst_209 = arith.constant 5.000000e-01 : f32
    %707 = vector.broadcast %cst_209 : f32 to vector<2x32xf32>
    %708 = arith.mulf %707, %706 : vector<2x32xf32>
    %709 = vector.extract_strided_slice %692 {offsets = [0, 64], sizes = [2, 32], strides = [1, 1]} : vector<2x128xf32> to vector<2x32xf32>
    %710 = math.tanh %709 : vector<2x32xf32>
    %711 = vector.extract_strided_slice %692 {offsets = [0, 96], sizes = [2, 32], strides = [1, 1]} : vector<2x128xf32> to vector<2x32xf32>
    %cst_210 = arith.constant 5.000000e-01 : f32
    %712 = vector.broadcast %cst_210 : f32 to vector<2x32xf32>
    %713 = arith.mulf %712, %711 : vector<2x32xf32>
    %714 = math.tanh %713 : vector<2x32xf32>
    %cst_211 = arith.constant 1.000000e+00 : f32
    %715 = vector.broadcast %cst_211 : f32 to vector<2x32xf32>
    %716 = arith.addf %714, %715 : vector<2x32xf32>
    %cst_212 = arith.constant 5.000000e-01 : f32
    %717 = vector.broadcast %cst_212 : f32 to vector<2x32xf32>
    %718 = arith.mulf %717, %716 : vector<2x32xf32>
    %719 = arith.mulf %708, %678 : vector<2x32xf32>
    %720 = arith.mulf %700, %710 : vector<2x32xf32>
    %721 = arith.addf %719, %720 : vector<2x32xf32>
    %722 = math.tanh %721 : vector<2x32xf32>
    %723 = arith.mulf %718, %722 : vector<2x32xf32>
    %c6_i32_213 = arith.constant 6 : i32
    %724 = vector.broadcast %c6_i32_213 : i32 to vector<2x8x32xi32>
    %725 = arith.cmpi eq, %59, %724 : vector<2x8x32xi32>
    %726 = arith.extui %725 : vector<2x8x32xi1> to vector<2x8x32xi32>
    %727 = arith.sitofp %726 : vector<2x8x32xi32> to vector<2x8x32xf32>
    %728 = vector.shape_cast %723 : vector<2x32xf32> to vector<2x1x32xf32>
    %729 = vector.broadcast %728 : vector<2x1x32xf32> to vector<2x8x32xf32>
    %730 = arith.mulf %727, %729 : vector<2x8x32xf32>
    %731 = arith.addf %688, %730 : vector<2x8x32xf32>
    %732 = vector.extract_strided_slice %427 {offsets = [0, 7, 0], sizes = [2, 1, 128], strides = [1, 1, 1]} : vector<2x8x128xf32> to vector<2x1x128xf32>
    %733 = vector.shape_cast %732 : vector<2x1x128xf32> to vector<2x128xf32>
    %cst_214 = arith.constant dense<0.000000e+00> : vector<2x128xf32>
    %734 = tpu.matmul %723, %419, %cst_214 {dimension_numbers = #tpu.dot_dimension_numbers<[1], [0], [0], [1], [0, 0, 1, 1], [], []>} : vector<2x32xf32>, vector<32x128xf32>, vector<2x128xf32> -> vector<2x128xf32>
    %735 = arith.addf %733, %734 : vector<2x128xf32>
    %736 = vector.extract_strided_slice %735 {offsets = [0, 0], sizes = [2, 32], strides = [1, 1]} : vector<2x128xf32> to vector<2x32xf32>
    %cst_215 = arith.constant 5.000000e-01 : f32
    %737 = vector.broadcast %cst_215 : f32 to vector<2x32xf32>
    %738 = arith.mulf %737, %736 : vector<2x32xf32>
    %739 = math.tanh %738 : vector<2x32xf32>
    %cst_216 = arith.constant 1.000000e+00 : f32
    %740 = vector.broadcast %cst_216 : f32 to vector<2x32xf32>
    %741 = arith.addf %739, %740 : vector<2x32xf32>
    %cst_217 = arith.constant 5.000000e-01 : f32
    %742 = vector.broadcast %cst_217 : f32 to vector<2x32xf32>
    %743 = arith.mulf %742, %741 : vector<2x32xf32>
    %744 = vector.extract_strided_slice %735 {offsets = [0, 32], sizes = [2, 32], strides = [1, 1]} : vector<2x128xf32> to vector<2x32xf32>
    %cst_218 = arith.constant 5.000000e-01 : f32
    %745 = vector.broadcast %cst_218 : f32 to vector<2x32xf32>
    %746 = arith.mulf %745, %744 : vector<2x32xf32>
    %747 = math.tanh %746 : vector<2x32xf32>
    %cst_219 = arith.constant 1.000000e+00 : f32
    %748 = vector.broadcast %cst_219 : f32 to vector<2x32xf32>
    %749 = arith.addf %747, %748 : vector<2x32xf32>
    %cst_220 = arith.constant 5.000000e-01 : f32
    %750 = vector.broadcast %cst_220 : f32 to vector<2x32xf32>
    %751 = arith.mulf %750, %749 : vector<2x32xf32>
    %752 = vector.extract_strided_slice %735 {offsets = [0, 64], sizes = [2, 32], strides = [1, 1]} : vector<2x128xf32> to vector<2x32xf32>
    %753 = math.tanh %752 : vector<2x32xf32>
    %754 = vector.extract_strided_slice %735 {offsets = [0, 96], sizes = [2, 32], strides = [1, 1]} : vector<2x128xf32> to vector<2x32xf32>
    %cst_221 = arith.constant 5.000000e-01 : f32
    %755 = vector.broadcast %cst_221 : f32 to vector<2x32xf32>
    %756 = arith.mulf %755, %754 : vector<2x32xf32>
    %757 = math.tanh %756 : vector<2x32xf32>
    %cst_222 = arith.constant 1.000000e+00 : f32
    %758 = vector.broadcast %cst_222 : f32 to vector<2x32xf32>
    %759 = arith.addf %757, %758 : vector<2x32xf32>
    %cst_223 = arith.constant 5.000000e-01 : f32
    %760 = vector.broadcast %cst_223 : f32 to vector<2x32xf32>
    %761 = arith.mulf %760, %759 : vector<2x32xf32>
    %762 = arith.mulf %751, %721 : vector<2x32xf32>
    %763 = arith.mulf %743, %753 : vector<2x32xf32>
    %764 = arith.addf %762, %763 : vector<2x32xf32>
    %765 = math.tanh %764 : vector<2x32xf32>
    %766 = arith.mulf %761, %765 : vector<2x32xf32>
    %c7_i32_224 = arith.constant 7 : i32
    %767 = vector.broadcast %c7_i32_224 : i32 to vector<2x8x32xi32>
    %768 = arith.cmpi eq, %59, %767 : vector<2x8x32xi32>
    %769 = arith.extui %768 : vector<2x8x32xi1> to vector<2x8x32xi32>
    %770 = arith.sitofp %769 : vector<2x8x32xi32> to vector<2x8x32xf32>
    %771 = vector.shape_cast %766 : vector<2x32xf32> to vector<2x1x32xf32>
    %772 = vector.broadcast %771 : vector<2x1x32xf32> to vector<2x8x32xf32>
    %773 = arith.mulf %770, %772 : vector<2x8x32xf32>
    %774 = arith.addf %731, %773 : vector<2x8x32xf32>
    %775 = vector.shape_cast %774 : vector<2x8x32xf32> to vector<16x32xf32>
    %c0_225 = arith.constant 0 : index
    %c0_226 = arith.constant 0 : index
    %776 = vector.load %arg14[%c0_225, %c0_226] : memref<32x96xf32, #tpu.memory_space<vmem>>, vector<32x96xf32>
    %cst_227 = arith.constant dense<0.000000e+00> : vector<16x96xf32>
    %777 = tpu.matmul %775, %776, %cst_227 {dimension_numbers = #tpu.dot_dimension_numbers<[1], [0], [0], [1], [0, 0, 1, 1], [], []>} : vector<16x32xf32>, vector<32x96xf32>, vector<16x96xf32> -> vector<16x96xf32>
    %c0_228 = arith.constant 0 : index
    %c0_229 = arith.constant 0 : index
    %778 = vector.load %arg15[%c0_228, %c0_229] : memref<1x96xf32, #tpu.memory_space<vmem>>, vector<1x96xf32>
    %779 = vector.broadcast %778 : vector<1x96xf32> to vector<16x96xf32>
    %780 = arith.addf %777, %779 : vector<16x96xf32>
    %781 = vector.extract_strided_slice %780 {offsets = [0, 0], sizes = [16, 32], strides = [1, 1]} : vector<16x96xf32> to vector<16x32xf32>
    %782 = vector.shape_cast %781 : vector<16x32xf32> to vector<2x8x32xf32>
    %783 = vector.extract_strided_slice %780 {offsets = [0, 32], sizes = [16, 32], strides = [1, 1]} : vector<16x96xf32> to vector<16x32xf32>
    %784 = vector.shape_cast %783 : vector<16x32xf32> to vector<2x8x32xf32>
    %785 = vector.extract_strided_slice %780 {offsets = [0, 64], sizes = [16, 32], strides = [1, 1]} : vector<16x96xf32> to vector<16x32xf32>
    %786 = vector.shape_cast %785 : vector<16x32xf32> to vector<2x8x32xf32>
    %c0_230 = arith.constant 0 : index
    %c0_231 = arith.constant 0 : index
    %787 = vector.load %arg2[%c0_230, %c0_231] : memref<2x8xf32, #tpu.memory_space<vmem>>, vector<2x8xf32>
    %cst_232 = arith.constant 1.000000e+00 : f32
    %788 = vector.broadcast %cst_232 : f32 to vector<2x8xf32>
    %789 = arith.subf %788, %787 : vector<2x8xf32>
    %cst_233 = arith.constant -1.000000e+04 : f32
    %790 = vector.broadcast %cst_233 : f32 to vector<2x8xf32>
    %791 = arith.mulf %789, %790 : vector<2x8xf32>
    %792 = vector.shape_cast %791 : vector<2x8xf32> to vector<2x1x8xf32>
    %cst_234 = arith.constant 0.000000e+00 : f32
    %793 = vector.broadcast %cst_234 : f32 to vector<16x32xf32>
    %794 = vector.extract_strided_slice %782 {offsets = [0, 0, 0], sizes = [2, 8, 16], strides = [1, 1, 1]} : vector<2x8x32xf32> to vector<2x8x16xf32>
    %795 = vector.extract_strided_slice %784 {offsets = [0, 0, 0], sizes = [2, 8, 16], strides = [1, 1, 1]} : vector<2x8x32xf32> to vector<2x8x16xf32>
    "tpu.trace_start"() <{level = 10 : i32, message = "bqd,bkd->bqk"}> : () -> ()
    %cst_235 = arith.constant dense<0.000000e+00> : vector<2x8x8xf32>
    %796 = tpu.matmul %794, %795, %cst_235 {dimension_numbers = #tpu.dot_dimension_numbers<[2], [2], [1], [1], [0, 0, 0, 1, 1, 1], [0], [0]>} : vector<2x8x16xf32>, vector<2x8x16xf32>, vector<2x8x8xf32> -> vector<2x8x8xf32>
    "tpu.trace_stop"() : () -> ()
    %cst_236 = arith.constant 2.500000e-01 : f32
    %797 = vector.broadcast %cst_236 : f32 to vector<2x8x8xf32>
    %798 = arith.mulf %796, %797 : vector<2x8x8xf32>
    %799 = vector.broadcast %792 : vector<2x1x8xf32> to vector<2x8x8xf32>
    %800 = arith.addf %798, %799 : vector<2x8x8xf32>
    %cst_237 = arith.constant dense<0xFF800000> : vector<2x8xf32>
    %801 = vector.multi_reduction <maximumf>, %800, %cst_237 [2] : vector<2x8x8xf32> to vector<2x8xf32>
    %802 = vector.shape_cast %801 : vector<2x8xf32> to vector<2x8x1xf32>
    %803 = vector.broadcast %802 : vector<2x8x1xf32> to vector<2x8x8xf32>
    %804 = arith.subf %800, %803 : vector<2x8x8xf32>
    %805 = math.exp %804 : vector<2x8x8xf32>
    %cst_238 = arith.constant dense<0.000000e+00> : vector<2x8xf32>
    %806 = vector.multi_reduction <add>, %805, %cst_238 [2] : vector<2x8x8xf32> to vector<2x8xf32>
    %807 = vector.shape_cast %806 : vector<2x8xf32> to vector<2x8x1xf32>
    %808 = tpu.reciprocal %807 {approx = true} : vector<2x8x1xf32> -> vector<2x8x1xf32>
    %809 = vector.broadcast %808 : vector<2x8x1xf32> to vector<2x8x8xf32>
    %810 = arith.mulf %805, %809 : vector<2x8x8xf32>
    %811 = vector.extract_strided_slice %786 {offsets = [0, 0, 0], sizes = [2, 8, 16], strides = [1, 1, 1]} : vector<2x8x32xf32> to vector<2x8x16xf32>
    "tpu.trace_start"() <{level = 10 : i32, message = "bqk,bkd->bqd"}> : () -> ()
    %cst_239 = arith.constant dense<0.000000e+00> : vector<2x8x16xf32>
    %812 = tpu.matmul %810, %811, %cst_239 {dimension_numbers = #tpu.dot_dimension_numbers<[2], [1], [1], [2], [0, 0, 0, 1, 1, 2], [0], [0]>} : vector<2x8x8xf32>, vector<2x8x16xf32>, vector<2x8x16xf32> -> vector<2x8x16xf32>
    "tpu.trace_stop"() : () -> ()
    %813 = vector.shape_cast %812 : vector<2x8x16xf32> to vector<16x16xf32>
    %c0_240 = arith.constant 0 : index
    %c0_241 = arith.constant 0 : index
    %814 = vector.load %arg16[%c0_240, %c0_241] : memref<32x32xf32, #tpu.memory_space<vmem>>, vector<16x32xf32>
    %cst_242 = arith.constant dense<0.000000e+00> : vector<16x32xf32>
    %815 = tpu.matmul %813, %814, %cst_242 {dimension_numbers = #tpu.dot_dimension_numbers<[1], [0], [0], [1], [0, 0, 1, 1], [], []>} : vector<16x16xf32>, vector<16x32xf32>, vector<16x32xf32> -> vector<16x32xf32>
    %816 = arith.addf %793, %815 : vector<16x32xf32>
    %817 = vector.extract_strided_slice %782 {offsets = [0, 0, 16], sizes = [2, 8, 16], strides = [1, 1, 1]} : vector<2x8x32xf32> to vector<2x8x16xf32>
    %818 = vector.extract_strided_slice %784 {offsets = [0, 0, 16], sizes = [2, 8, 16], strides = [1, 1, 1]} : vector<2x8x32xf32> to vector<2x8x16xf32>
    "tpu.trace_start"() <{level = 10 : i32, message = "bqd,bkd->bqk"}> : () -> ()
    %cst_243 = arith.constant dense<0.000000e+00> : vector<2x8x8xf32>
    %819 = tpu.matmul %817, %818, %cst_243 {dimension_numbers = #tpu.dot_dimension_numbers<[2], [2], [1], [1], [0, 0, 0, 1, 1, 1], [0], [0]>} : vector<2x8x16xf32>, vector<2x8x16xf32>, vector<2x8x8xf32> -> vector<2x8x8xf32>
    "tpu.trace_stop"() : () -> ()
    %cst_244 = arith.constant 2.500000e-01 : f32
    %820 = vector.broadcast %cst_244 : f32 to vector<2x8x8xf32>
    %821 = arith.mulf %819, %820 : vector<2x8x8xf32>
    %822 = vector.broadcast %792 : vector<2x1x8xf32> to vector<2x8x8xf32>
    %823 = arith.addf %821, %822 : vector<2x8x8xf32>
    %cst_245 = arith.constant dense<0xFF800000> : vector<2x8xf32>
    %824 = vector.multi_reduction <maximumf>, %823, %cst_245 [2] : vector<2x8x8xf32> to vector<2x8xf32>
    %825 = vector.shape_cast %824 : vector<2x8xf32> to vector<2x8x1xf32>
    %826 = vector.broadcast %825 : vector<2x8x1xf32> to vector<2x8x8xf32>
    %827 = arith.subf %823, %826 : vector<2x8x8xf32>
    %828 = math.exp %827 : vector<2x8x8xf32>
    %cst_246 = arith.constant dense<0.000000e+00> : vector<2x8xf32>
    %829 = vector.multi_reduction <add>, %828, %cst_246 [2] : vector<2x8x8xf32> to vector<2x8xf32>
    %830 = vector.shape_cast %829 : vector<2x8xf32> to vector<2x8x1xf32>
    %831 = tpu.reciprocal %830 {approx = true} : vector<2x8x1xf32> -> vector<2x8x1xf32>
    %832 = vector.broadcast %831 : vector<2x8x1xf32> to vector<2x8x8xf32>
    %833 = arith.mulf %828, %832 : vector<2x8x8xf32>
    %834 = vector.extract_strided_slice %786 {offsets = [0, 0, 16], sizes = [2, 8, 16], strides = [1, 1, 1]} : vector<2x8x32xf32> to vector<2x8x16xf32>
    "tpu.trace_start"() <{level = 10 : i32, message = "bqk,bkd->bqd"}> : () -> ()
    %cst_247 = arith.constant dense<0.000000e+00> : vector<2x8x16xf32>
    %835 = tpu.matmul %833, %834, %cst_247 {dimension_numbers = #tpu.dot_dimension_numbers<[2], [1], [1], [2], [0, 0, 0, 1, 1, 2], [0], [0]>} : vector<2x8x8xf32>, vector<2x8x16xf32>, vector<2x8x16xf32> -> vector<2x8x16xf32>
    "tpu.trace_stop"() : () -> ()
    %836 = vector.shape_cast %835 : vector<2x8x16xf32> to vector<16x16xf32>
    %c16 = arith.constant 16 : index
    %c0_248 = arith.constant 0 : index
    %837 = vector.load %arg16[%c16, %c0_248] : memref<32x32xf32, #tpu.memory_space<vmem>>, vector<16x32xf32>
    %cst_249 = arith.constant dense<0.000000e+00> : vector<16x32xf32>
    %838 = tpu.matmul %836, %837, %cst_249 {dimension_numbers = #tpu.dot_dimension_numbers<[1], [0], [0], [1], [0, 0, 1, 1], [], []>} : vector<16x16xf32>, vector<16x32xf32>, vector<16x32xf32> -> vector<16x32xf32>
    %839 = arith.addf %816, %838 : vector<16x32xf32>
    %c0_250 = arith.constant 0 : index
    %c0_251 = arith.constant 0 : index
    %840 = vector.load %arg17[%c0_250, %c0_251] : memref<1x32xf32, #tpu.memory_space<vmem>>, vector<1x32xf32>
    %841 = vector.broadcast %840 : vector<1x32xf32> to vector<16x32xf32>
    %842 = arith.addf %839, %841 : vector<16x32xf32>
    %843 = arith.addf %842, %775 : vector<16x32xf32>
    %c0_252 = arith.constant 0 : index
    %c0_253 = arith.constant 0 : index
    %844 = vector.load %arg18[%c0_252, %c0_253] : memref<1x32xf32, #tpu.memory_space<vmem>>, vector<1x32xf32>
    %c0_254 = arith.constant 0 : index
    %c0_255 = arith.constant 0 : index
    %845 = vector.load %arg19[%c0_254, %c0_255] : memref<1x32xf32, #tpu.memory_space<vmem>>, vector<1x32xf32>
    %cst_256 = arith.constant dense<0.000000e+00> : vector<16xf32>
    %846 = vector.multi_reduction <add>, %843, %cst_256 [1] : vector<16x32xf32> to vector<16xf32>
    %847 = vector.shape_cast %846 : vector<16xf32> to vector<16x1xf32>
    %cst_257 = arith.constant 3.200000e+01 : f32
    %848 = vector.broadcast %cst_257 : f32 to vector<16x1xf32>
    %849 = arith.divf %847, %848 : vector<16x1xf32>
    %850 = vector.broadcast %849 : vector<16x1xf32> to vector<16x32xf32>
    %851 = arith.subf %843, %850 : vector<16x32xf32>
    %852 = arith.mulf %851, %851 : vector<16x32xf32>
    %cst_258 = arith.constant dense<0.000000e+00> : vector<16xf32>
    %853 = vector.multi_reduction <add>, %852, %cst_258 [1] : vector<16x32xf32> to vector<16xf32>
    %854 = vector.shape_cast %853 : vector<16xf32> to vector<16x1xf32>
    %cst_259 = arith.constant 3.200000e+01 : f32
    %855 = vector.broadcast %cst_259 : f32 to vector<16x1xf32>
    %856 = arith.divf %854, %855 : vector<16x1xf32>
    %cst_260 = arith.constant 9.99999996E-13 : f32
    %857 = vector.broadcast %cst_260 : f32 to vector<16x1xf32>
    %858 = arith.addf %856, %857 : vector<16x1xf32>
    %859 = math.rsqrt %858 : vector<16x1xf32>
    %860 = vector.broadcast %859 : vector<16x1xf32> to vector<16x32xf32>
    %861 = arith.mulf %851, %860 : vector<16x32xf32>
    %862 = vector.broadcast %844 : vector<1x32xf32> to vector<16x32xf32>
    %863 = arith.mulf %861, %862 : vector<16x32xf32>
    %864 = vector.broadcast %845 : vector<1x32xf32> to vector<16x32xf32>
    %865 = arith.addf %863, %864 : vector<16x32xf32>
    %c0_261 = arith.constant 0 : index
    %c0_262 = arith.constant 0 : index
    %866 = vector.load %arg20[%c0_261, %c0_262] : memref<32x32xf32, #tpu.memory_space<vmem>>, vector<32x32xf32>
    %cst_263 = arith.constant dense<0.000000e+00> : vector<16x32xf32>
    %867 = tpu.matmul %865, %866, %cst_263 {dimension_numbers = #tpu.dot_dimension_numbers<[1], [0], [0], [1], [0, 0, 1, 1], [], []>} : vector<16x32xf32>, vector<32x32xf32>, vector<16x32xf32> -> vector<16x32xf32>
    %c0_264 = arith.constant 0 : index
    %c0_265 = arith.constant 0 : index
    %868 = vector.load %arg21[%c0_264, %c0_265] : memref<1x32xf32, #tpu.memory_space<vmem>>, vector<1x32xf32>
    %869 = vector.broadcast %868 : vector<1x32xf32> to vector<16x32xf32>
    %870 = arith.addf %867, %869 : vector<16x32xf32>
    %cst_266 = arith.constant 5.000000e-01 : f32
    %871 = vector.broadcast %cst_266 : f32 to vector<16x32xf32>
    %872 = arith.mulf %871, %870 : vector<16x32xf32>
    %cst_267 = arith.constant 4.471500e-02 : f32
    %873 = vector.broadcast %cst_267 : f32 to vector<16x32xf32>
    %874 = arith.mulf %873, %870 : vector<16x32xf32>
    %875 = arith.mulf %874, %870 : vector<16x32xf32>
    %876 = arith.mulf %875, %870 : vector<16x32xf32>
    %877 = arith.addf %870, %876 : vector<16x32xf32>
    %cst_268 = arith.constant 0.797884583 : f32
    %878 = vector.broadcast %cst_268 : f32 to vector<16x32xf32>
    %879 = arith.mulf %878, %877 : vector<16x32xf32>
    %880 = math.tanh %879 : vector<16x32xf32>
    %cst_269 = arith.constant 1.000000e+00 : f32
    %881 = vector.broadcast %cst_269 : f32 to vector<16x32xf32>
    %882 = arith.addf %881, %880 : vector<16x32xf32>
    %883 = arith.mulf %872, %882 : vector<16x32xf32>
    %c0_270 = arith.constant 0 : index
    %c0_271 = arith.constant 0 : index
    %884 = vector.load %arg22[%c0_270, %c0_271] : memref<32x32xf32, #tpu.memory_space<vmem>>, vector<32x32xf32>
    %cst_272 = arith.constant dense<0.000000e+00> : vector<16x32xf32>
    %885 = tpu.matmul %883, %884, %cst_272 {dimension_numbers = #tpu.dot_dimension_numbers<[1], [0], [0], [1], [0, 0, 1, 1], [], []>} : vector<16x32xf32>, vector<32x32xf32>, vector<16x32xf32> -> vector<16x32xf32>
    %c0_273 = arith.constant 0 : index
    %c0_274 = arith.constant 0 : index
    %886 = vector.load %arg23[%c0_273, %c0_274] : memref<1x32xf32, #tpu.memory_space<vmem>>, vector<1x32xf32>
    %887 = vector.broadcast %886 : vector<1x32xf32> to vector<16x32xf32>
    %888 = arith.addf %885, %887 : vector<16x32xf32>
    %889 = arith.addf %888, %865 : vector<16x32xf32>
    %c0_275 = arith.constant 0 : index
    %c0_276 = arith.constant 0 : index
    %890 = vector.load %arg24[%c0_275, %c0_276] : memref<1x32xf32, #tpu.memory_space<vmem>>, vector<1x32xf32>
    %c0_277 = arith.constant 0 : index
    %c0_278 = arith.constant 0 : index
    %891 = vector.load %arg25[%c0_277, %c0_278] : memref<1x32xf32, #tpu.memory_space<vmem>>, vector<1x32xf32>
    %cst_279 = arith.constant dense<0.000000e+00> : vector<16xf32>
    %892 = vector.multi_reduction <add>, %889, %cst_279 [1] : vector<16x32xf32> to vector<16xf32>
    %893 = vector.shape_cast %892 : vector<16xf32> to vector<16x1xf32>
    %cst_280 = arith.constant 3.200000e+01 : f32
    %894 = vector.broadcast %cst_280 : f32 to vector<16x1xf32>
    %895 = arith.divf %893, %894 : vector<16x1xf32>
    %896 = vector.broadcast %895 : vector<16x1xf32> to vector<16x32xf32>
    %897 = arith.subf %889, %896 : vector<16x32xf32>
    %898 = arith.mulf %897, %897 : vector<16x32xf32>
    %cst_281 = arith.constant dense<0.000000e+00> : vector<16xf32>
    %899 = vector.multi_reduction <add>, %898, %cst_281 [1] : vector<16x32xf32> to vector<16xf32>
    %900 = vector.shape_cast %899 : vector<16xf32> to vector<16x1xf32>
    %cst_282 = arith.constant 3.200000e+01 : f32
    %901 = vector.broadcast %cst_282 : f32 to vector<16x1xf32>
    %902 = arith.divf %900, %901 : vector<16x1xf32>
    %cst_283 = arith.constant 9.99999996E-13 : f32
    %903 = vector.broadcast %cst_283 : f32 to vector<16x1xf32>
    %904 = arith.addf %902, %903 : vector<16x1xf32>
    %905 = math.rsqrt %904 : vector<16x1xf32>
    %906 = vector.broadcast %905 : vector<16x1xf32> to vector<16x32xf32>
    %907 = arith.mulf %897, %906 : vector<16x32xf32>
    %908 = vector.broadcast %890 : vector<1x32xf32> to vector<16x32xf32>
    %909 = arith.mulf %907, %908 : vector<16x32xf32>
    %910 = vector.broadcast %891 : vector<1x32xf32> to vector<16x32xf32>
    %911 = arith.addf %909, %910 : vector<16x32xf32>
    %912 = vector.shape_cast %911 : vector<16x32xf32> to vector<2x8x32xf32>
    %c0_284 = arith.constant 0 : index
    %c0_285 = arith.constant 0 : index
    %913 = vector.load %arg26[%c0_284, %c0_285] : memref<1x32xf32, #tpu.memory_space<vmem>>, vector<1x32xf32>
    %914 = vector.shape_cast %913 : vector<1x32xf32> to vector<1x1x32xf32>
    %915 = vector.broadcast %914 : vector<1x1x32xf32> to vector<2x8x32xf32>
    %916 = arith.mulf %912, %915 : vector<2x8x32xf32>
    %cst_286 = arith.constant dense<0.000000e+00> : vector<2x8xf32>
    %917 = vector.multi_reduction <add>, %916, %cst_286 [2] : vector<2x8x32xf32> to vector<2x8xf32>
    %c0_287 = arith.constant 0 : index
    %c0_288 = arith.constant 0 : index
    %918 = vector.load %arg27[%c0_287, %c0_288] : memref<1x1xf32, #tpu.memory_space<vmem>>, vector<1x1xf32>
    %919 = vector.broadcast %918 : vector<1x1xf32> to vector<2x8xf32>
    %920 = arith.addf %917, %919 : vector<2x8xf32>
    %cst_289 = arith.constant 5.000000e-01 : f32
    %921 = vector.broadcast %cst_289 : f32 to vector<2x8xf32>
    %922 = arith.mulf %921, %920 : vector<2x8xf32>
    %923 = math.tanh %922 : vector<2x8xf32>
    %cst_290 = arith.constant 1.000000e+00 : f32
    %924 = vector.broadcast %cst_290 : f32 to vector<2x8xf32>
    %925 = arith.addf %923, %924 : vector<2x8xf32>
    %cst_291 = arith.constant 5.000000e-01 : f32
    %926 = vector.broadcast %cst_291 : f32 to vector<2x8xf32>
    %927 = arith.mulf %926, %925 : vector<2x8xf32>
    %c0_292 = arith.constant 0 : index
    %c0_293 = arith.constant 0 : index
    %928 = vector.load %arg28[%c0_292, %c0_293] : memref<2x8xf32, #tpu.memory_space<vmem>>, vector<2x8xf32>
    tpu.vector_store %arg28[%c0_292, %c0_293], %927 {strides = array<i32>} : memref<2x8xf32, #tpu.memory_space<vmem>>, vector<2x8xf32>,
    return
  }
}

</mosaic_0001>

<llo_original>
// kernel: tpu_custom_call.1
$region0: #{tpu_custom_call.1}
  #allocation0 [shape = 'u32[]', space=smem, size = 0x4, offset = 0x4, fixed_abs, tag = 'smem constant byte address 0x4 - core index']
  #allocation1 [shape = 'u32[144,128]{1,0:T(1,128)}', space=vmem, size = 0x12000, scoped, tag = 'internal scratch']
  #allocation2 [shape = 'f32[1,1]{1,0:T(1,128)S(1)}', space=vmem, size = 0x200, scoped, tag = 'scoped memory for tpu_custom_call.1']
  %s0 = inlined_call_operand.hbm [shape: f32[2,8,30], index: 0, kind: input, shape index: {}]
  %s1 = inlined_call_operand.vmem [shape: f32[2,8,4], index: 1, kind: input, shape index: {}]
  %s2 = inlined_call_operand.hbm [shape: f32[2,8], index: 2, kind: input, shape index: {}]
  %s3 = inlined_call_operand.vmem [shape: f32[30,16], index: 3, kind: input, shape index: {}]
  %s4 = inlined_call_operand.hbm [shape: f32[1,16], index: 4, kind: input, shape index: {}]
  %s5 = inlined_call_operand.hbm [shape: f32[1,16], index: 5, kind: input, shape index: {}]
  %s6 = inlined_call_operand.hbm [shape: f32[1,16], index: 6, kind: input, shape index: {}]
  %s7 = inlined_call_operand.hbm [shape: f32[4,16], index: 7, kind: input, shape index: {}]
  %s8 = inlined_call_operand.hbm [shape: f32[1,16], index: 8, kind: input, shape index: {}]
  %s9 = inlined_call_operand.hbm [shape: f32[1,16], index: 9, kind: input, shape index: {}]
  %s10 = inlined_call_operand.hbm [shape: f32[1,16], index: 10, kind: input, shape index: {}]
  %s11 = inlined_call_operand.vmem [shape: f32[2,32,128], index: 11, kind: input, shape index: {}]
  %s12 = inlined_call_operand.hbm [shape: f32[2,32,128], index: 12, kind: input, shape index: {}]
  %s13 = inlined_call_operand.hbm [shape: f32[2,1,128], index: 13, kind: input, shape index: {}]
  %s14 = inlined_call_operand.vmem [shape: f32[32,96], index: 14, kind: input, shape index: {}]
  %s15 = inlined_call_operand.vmem [shape: f32[1,96], index: 15, kind: input, shape index: {}]
  %s16 = inlined_call_operand.vmem [shape: f32[32,32], index: 16, kind: input, shape index: {}]
  %s17 = inlined_call_operand.vmem [shape: f32[1,32], index: 17, kind: input, shape index: {}]
  %s18 = inlined_call_operand.vmem [shape: f32[1,32], index: 18, kind: input, shape index: {}]
  %s19 = inlined_call_operand.vmem [shape: f32[1,32], index: 19, kind: input, shape index: {}]
  %s20 = inlined_call_operand.hbm [shape: f32[32,32], index: 20, kind: input, shape index: {}]
  %s21 = inlined_call_operand.vmem [shape: f32[1,32], index: 21, kind: input, shape index: {}]
  %s22 = inlined_call_operand.hbm [shape: f32[32,32], index: 22, kind: input, shape index: {}]
  %s23 = inlined_call_operand.vmem [shape: f32[1,32], index: 23, kind: input, shape index: {}]
  %s24 = inlined_call_operand.vmem [shape: f32[1,32], index: 24, kind: input, shape index: {}]
  %s25 = inlined_call_operand.vmem [shape: f32[1,32], index: 25, kind: input, shape index: {}]
  %s26 = inlined_call_operand.vmem [shape: f32[1,32], index: 26, kind: input, shape index: {}]
  %s27 = inlined_call_operand.<no memory space> [shape: f32[1,1], index: 27, kind: input, shape index: {}]
  %s28 = inlined_call_operand.hbm [shape: f32[2,8], index: 28, kind: output, shape index: {}]
  %s29 = sld [smem:[#allocation0]]
  $region174: #{tpu_custom_call.1} parent=0
    _
  %s31 = ssub.s32 1, %s29
  %s32 = scalar_select 0, %s31, %s29
  %v33 = vstv %s27
  %34 = vst [vmem:[#allocation2] sm:$0x1] %v33
  $region1: #{tpu_custom_call.1} parent=0
    #allocation3 [shape = 'u8[8192]{0}', space=vmem, size = 0x2000, scoped, tag = 'input window, operand 0, single buffered']
    #allocation4 [shape = 's32[1]{0}', space=sflag, size = 0x4, scoped, tag = 'scoped memory for tpu_custom_call.1']
    #allocation5 [shape = 's32[1]{0}', space=sflag, size = 0x4, scoped, tag = 'scoped memory for tpu_custom_call.1']
    #allocation6 [shape = 'u8[1024]{0}', space=vmem, size = 0x400, scoped, tag = 'input window, operand 2, single buffered']
    #allocation7 [shape = 's32[1]{0}', space=sflag, size = 0x4, scoped, tag = 'scoped memory for tpu_custom_call.1']
    #allocation8 [shape = 'u8[512]{0}', space=vmem, size = 0x400, scoped, tag = 'input window, operand 4, single buffered']
    #allocation9 [shape = 'u8[512]{0}', space=vmem, size = 0x400, scoped, tag = 'input window, operand 5, single buffered']
    #allocation10 [shape = 's32[1]{0}', space=sflag, size = 0x4, scoped, tag = 'scoped memory for tpu_custom_call.1']
    #allocation11 [shape = 'u8[512]{0}', space=vmem, size = 0x400, scoped, tag = 'input window, operand 6, single buffered']
    #allocation12 [shape = 'u8[2048]{0}', space=vmem, size = 0x800, scoped, tag = 'input window, operand 7, single buffered']
    #allocation13 [shape = 's32[1]{0}', space=sflag, size = 0x4, scoped, tag = 'scoped memory for tpu_custom_call.1']
    #allocation14 [shape = 'u8[512]{0}', space=vmem, size = 0x400, scoped, tag = 'input window, operand 8, single buffered']
    #allocation15 [shape = 'u8[512]{0}', space=vmem, size = 0x400, scoped, tag = 'input window, operand 9, single buffered']
    #allocation16 [shape = 's32[1]{0}', space=sflag, size = 0x4, scoped, tag = 'scoped memory for tpu_custom_call.1']
    #allocation17 [shape = 'u8[512]{0}', space=vmem, size = 0x400, scoped, tag = 'input window, operand 10, single buffered']
    #allocation18 [shape = 'u8[32768]{0}', space=vmem, size = 0x8000, scoped, tag = 'input window, operand 12, single buffered']
    #allocation19 [shape = 's32[1]{0}', space=sflag, size = 0x4, scoped, tag = 'scoped memory for tpu_custom_call.1']
    #allocation20 [shape = 'u8[1024]{0}', space=vmem, size = 0x400, scoped, tag = 'input window, operand 13, single buffered']
    #allocation21 [shape = 'u8[16384]{0}', space=vmem, size = 0x4000, scoped, tag = 'input window, operand 20, single buffered']
    #allocation22 [shape = 's32[1]{0}', space=sflag, size = 0x4, scoped, tag = 'scoped memory for tpu_custom_call.1']
    #allocation23 [shape = 'u8[16384]{0}', space=vmem, size = 0x4000, scoped, tag = 'input window, operand 22, single buffered']
    #allocation24 [shape = 'u8[1024]{0}', space=vmem, size = 0x400, scoped, tag = 'output window, operand 0, single buffered']
    %35 = vsyncpa [#allocation4], 0
    %36 = vsyncpa [#allocation7], 0
    %37 = vsyncpa [#allocation10], 0
    %38 = vsyncpa [#allocation13], 0
    %39 = vsyncpa [#allocation16], 0
    %40 = vsyncpa [#allocation19], 0
    %41 = vsyncpa [#allocation22], 0
    %42 = vsyncpa [#allocation5], 0
    // Predicated region
    $region2: #{tpu_custom_call.1} parent=1 // pred_check
      _
    $region3: #{tpu_custom_call.1} parent=1 // pred_check_branch
      %44 = sbr.rel (0) target = $region5
    $region4: #{tpu_custom_call.1} parent=1 // pred_region
      %s46 = ssub.s32 256, 256
      %47 = vsyncadd [#allocation4], %s46
      %s48 = sshll.u32 [#allocation3], 4
      %s49 = int_to_ptr.vmem [resolvable:$true] %s48
      %54 = dma.hbm_to_vmem [thread:$0]  %s0, 256, %s49, [#allocation4], 128, 128, 8
    $region5: #{tpu_custom_call.1} parent=1 // pred_fallthru
      _
    // Predicated region
    $region6: #{tpu_custom_call.1} parent=1 // pred_check
      _
    $region7: #{tpu_custom_call.1} parent=1 // pred_check_branch
      %56 = sbr.rel (0) target = $region9
    $region8: #{tpu_custom_call.1} parent=1 // pred_region
      _
    $region9: #{tpu_custom_call.1} parent=1 // pred_fallthru
      _
    // Predicated region
    $region10: #{tpu_custom_call.1} parent=1 // pred_check
      _
    $region11: #{tpu_custom_call.1} parent=1 // pred_check_branch
      %58 = sbr.rel (0) target = $region13
    $region12: #{tpu_custom_call.1} parent=1 // pred_region
      %s60 = ssub.s32 32, 32
      %61 = vsyncadd [#allocation7], %s60
      %s63 = sshll.u32 [#allocation6], 4
      %s64 = int_to_ptr.vmem [resolvable:$true] %s63
      %66 = dma.hbm_to_vmem [thread:$0]  %s2, 32, %s64, [#allocation7]
    $region13: #{tpu_custom_call.1} parent=1 // pred_fallthru
      _
    // Predicated region
    $region14: #{tpu_custom_call.1} parent=1 // pred_check
      _
    $region15: #{tpu_custom_call.1} parent=1 // pred_check_branch
      %68 = sbr.rel (0) target = $region17
    $region16: #{tpu_custom_call.1} parent=1 // pred_region
      _
    $region17: #{tpu_custom_call.1} parent=1 // pred_fallthru
      _
    // Predicated region
    $region18: #{tpu_custom_call.1} parent=1 // pred_check
      _
    $region19: #{tpu_custom_call.1} parent=1 // pred_check_branch
      %70 = sbr.rel (0) target = $region21
    $region20: #{tpu_custom_call.1} parent=1 // pred_region
      %s72 = ssub.s32 16, 16
      %73 = vsyncadd [#allocation7], %s72
      %s75 = sshll.u32 [#allocation8], 4
      %s76 = int_to_ptr.vmem [resolvable:$true] %s75
      %78 = dma.hbm_to_vmem [thread:$0]  %s4, 16, %s76, [#allocation7]
    $region21: #{tpu_custom_call.1} parent=1 // pred_fallthru
      _
    // Predicated region
    $region22: #{tpu_custom_call.1} parent=1 // pred_check
      _
    $region23: #{tpu_custom_call.1} parent=1 // pred_check_branch
      %80 = sbr.rel (0) target = $region25
    $region24: #{tpu_custom_call.1} parent=1 // pred_region
      %s82 = ssub.s32 16, 16
      %83 = vsyncadd [#allocation10], %s82
      %s85 = sshll.u32 [#allocation9], 4
      %s86 = int_to_ptr.vmem [resolvable:$true] %s85
      %88 = dma.hbm_to_vmem [thread:$0]  %s5, 16, %s86, [#allocation10]
    $region25: #{tpu_custom_call.1} parent=1 // pred_fallthru
      _
    // Predicated region
    $region26: #{tpu_custom_call.1} parent=1 // pred_check
      _
    $region27: #{tpu_custom_call.1} parent=1 // pred_check_branch
      %90 = sbr.rel (0) target = $region29
    $region28: #{tpu_custom_call.1} parent=1 // pred_region
      %s92 = ssub.s32 16, 16
      %93 = vsyncadd [#allocation10], %s92
      %s95 = sshll.u32 [#allocation11], 4
      %s96 = int_to_ptr.vmem [resolvable:$true] %s95
      %98 = dma.hbm_to_vmem [thread:$0]  %s6, 16, %s96, [#allocation10]
    $region29: #{tpu_custom_call.1} parent=1 // pred_fallthru
      _
    // Predicated region
    $region30: #{tpu_custom_call.1} parent=1 // pred_check
      _
    $region31: #{tpu_custom_call.1} parent=1 // pred_check_branch
      %100 = sbr.rel (0) target = $region33
    $region32: #{tpu_custom_call.1} parent=1 // pred_region
      %s102 = ssub.s32 64, 64
      %103 = vsyncadd [#allocation13], %s102
      %s105 = sshll.u32 [#allocation12], 4
      %s106 = int_to_ptr.vmem [resolvable:$true] %s105
      %108 = dma.hbm_to_vmem [thread:$0]  %s7, 64, %s106, [#allocation13]
    $region33: #{tpu_custom_call.1} parent=1 // pred_fallthru
      _
    // Predicated region
    $region34: #{tpu_custom_call.1} parent=1 // pred_check
      _
    $region35: #{tpu_custom_call.1} parent=1 // pred_check_branch
      %110 = sbr.rel (0) target = $region37
    $region36: #{tpu_custom_call.1} parent=1 // pred_region
      %s112 = ssub.s32 16, 16
      %113 = vsyncadd [#allocation13], %s112
      %s115 = sshll.u32 [#allocation14], 4
      %s116 = int_to_ptr.vmem [resolvable:$true] %s115
      %118 = dma.hbm_to_vmem [thread:$0]  %s8, 16, %s116, [#allocation13]
    $region37: #{tpu_custom_call.1} parent=1 // pred_fallthru
      _
    // Predicated region
    $region38: #{tpu_custom_call.1} parent=1 // pred_check
      _
    $region39: #{tpu_custom_call.1} parent=1 // pred_check_branch
      %120 = sbr.rel (0) target = $region41
    $region40: #{tpu_custom_call.1} parent=1 // pred_region
      %s122 = ssub.s32 16, 16
      %123 = vsyncadd [#allocation16], %s122
      %s125 = sshll.u32 [#allocation15], 4
      %s126 = int_to_ptr.vmem [resolvable:$true] %s125
      %128 = dma.hbm_to_vmem [thread:$0]  %s9, 16, %s126, [#allocation16]
    $region41: #{tpu_custom_call.1} parent=1 // pred_fallthru
      _
    // Predicated region
    $region42: #{tpu_custom_call.1} parent=1 // pred_check
      _
    $region43: #{tpu_custom_call.1} parent=1 // pred_check_branch
      %130 = sbr.rel (0) target = $region45
    $region44: #{tpu_custom_call.1} parent=1 // pred_region
      %s132 = ssub.s32 16, 16
      %133 = vsyncadd [#allocation16], %s132
      %s135 = sshll.u32 [#allocation17], 4
      %s136 = int_to_ptr.vmem [resolvable:$true] %s135
      %138 = dma.hbm_to_vmem [thread:$0]  %s10, 16, %s136, [#allocation16]
    $region45: #{tpu_custom_call.1} parent=1 // pred_fallthru
      _
    // Predicated region
    $region46: #{tpu_custom_call.1} parent=1 // pred_check
      _
    $region47: #{tpu_custom_call.1} parent=1 // pred_check_branch
      %140 = sbr.rel (0) target = $region49
    $region48: #{tpu_custom_call.1} parent=1 // pred_region
      _
    $region49: #{tpu_custom_call.1} parent=1 // pred_fallthru
      _
    // Predicated region
    $region50: #{tpu_custom_call.1} parent=1 // pred_check
      _
    $region51: #{tpu_custom_call.1} parent=1 // pred_check_branch
      %142 = sbr.rel (0) target = $region53
    $region52: #{tpu_custom_call.1} parent=1 // pred_region
      %s144 = ssub.s32 1024, 1024
      %145 = vsyncadd [#allocation19], %s144
      %s146 = sshll.u32 [#allocation18], 4
      %s147 = int_to_ptr.vmem [resolvable:$true] %s146
      %152 = dma.hbm_to_vmem [thread:$0]  %s12, 1024, %s147, [#allocation19], 128, 128, 8
    $region53: #{tpu_custom_call.1} parent=1 // pred_fallthru
      _
    // Predicated region
    $region54: #{tpu_custom_call.1} parent=1 // pred_check
      _
    $region55: #{tpu_custom_call.1} parent=1 // pred_check_branch
      %154 = sbr.rel (0) target = $region57
    $region56: #{tpu_custom_call.1} parent=1 // pred_region
      %s156 = ssub.s32 32, 32
      %157 = vsyncadd [#allocation19], %s156
      %s158 = sshll.u32 [#allocation20], 4
      %s159 = int_to_ptr.vmem [resolvable:$true] %s158
      %164 = dma.hbm_to_vmem [thread:$0]  %s13, 32, %s159, [#allocation19], 16, 16, 1
    $region57: #{tpu_custom_call.1} parent=1 // pred_fallthru
      _
    // Predicated region
    $region58: #{tpu_custom_call.1} parent=1 // pred_check
      _
    $region59: #{tpu_custom_call.1} parent=1 // pred_check_branch
      %166 = sbr.rel (0) target = $region61
    $region60: #{tpu_custom_call.1} parent=1 // pred_region
      _
    $region61: #{tpu_custom_call.1} parent=1 // pred_fallthru
      _
    // Predicated region
    $region62: #{tpu_custom_call.1} parent=1 // pred_check
      _
    $region63: #{tpu_custom_call.1} parent=1 // pred_check_branch
      %168 = sbr.rel (0) target = $region65
    $region64: #{tpu_custom_call.1} parent=1 // pred_region
      _
    $region65: #{tpu_custom_call.1} parent=1 // pred_fallthru
      _
    // Predicated region
    $region66: #{tpu_custom_call.1} parent=1 // pred_check
      _
    $region67: #{tpu_custom_call.1} parent=1 // pred_check_branch
      %170 = sbr.rel (0) target = $region69
    $region68: #{tpu_custom_call.1} parent=1 // pred_region
      _
    $region69: #{tpu_custom_call.1} parent=1 // pred_fallthru
      _
    // Predicated region
    $region70: #{tpu_custom_call.1} parent=1 // pred_check
      _
    $region71: #{tpu_custom_call.1} parent=1 // pred_check_branch
      %172 = sbr.rel (0) target = $region73
    $region72: #{tpu_custom_call.1} parent=1 // pred_region
      _
    $region73: #{tpu_custom_call.1} parent=1 // pred_fallthru
      _
    // Predicated region
    $region74: #{tpu_custom_call.1} parent=1 // pred_check
      _
    $region75: #{tpu_custom_call.1} parent=1 // pred_check_branch
      %174 = sbr.rel (0) target = $region77
    $region76: #{tpu_custom_call.1} parent=1 // pred_region
      _
    $region77: #{tpu_custom_call.1} parent=1 // pred_fallthru
      _
    // Predicated region
    $region78: #{tpu_custom_call.1} parent=1 // pred_check
      _
    $region79: #{tpu_custom_call.1} parent=1 // pred_check_branch
      %176 = sbr.rel (0) target = $region81
    $region80: #{tpu_custom_call.1} parent=1 // pred_region
      _
    $region81: #{tpu_custom_call.1} parent=1 // pred_fallthru
      _
    // Predicated region
    $region82: #{tpu_custom_call.1} parent=1 // pred_check
      _
    $region83: #{tpu_custom_call.1} parent=1 // pred_check_branch
      %178 = sbr.rel (0) target = $region85
    $region84: #{tpu_custom_call.1} parent=1 // pred_region
      %s180 = ssub.s32 512, 512
      %181 = vsyncadd [#allocation22], %s180
      %s182 = sshll.u32 [#allocation21], 4
      %s183 = int_to_ptr.vmem [resolvable:$true] %s182
      %188 = dma.hbm_to_vmem [thread:$0]  %s20, 512, %s183, [#allocation22], 128, 128, 8
    $region85: #{tpu_custom_call.1} parent=1 // pred_fallthru
      _
    // Predicated region
    $region86: #{tpu_custom_call.1} parent=1 // pred_check
      _
    $region87: #{tpu_custom_call.1} parent=1 // pred_check_branch
      %190 = sbr.rel (0) target = $region89
    $region88: #{tpu_custom_call.1} parent=1 // pred_region
      _
    $region89: #{tpu_custom_call.1} parent=1 // pred_fallthru
      _
    // Predicated region
    $region90: #{tpu_custom_call.1} parent=1 // pred_check
      _
    $region91: #{tpu_custom_call.1} parent=1 // pred_check_branch
      %192 = sbr.rel (0) target = $region93
    $region92: #{tpu_custom_call.1} parent=1 // pred_region
      %s194 = ssub.s32 512, 512
      %195 = vsyncadd [#allocation22], %s194
      %s196 = sshll.u32 [#allocation23], 4
      %s197 = int_to_ptr.vmem [resolvable:$true] %s196
      %202 = dma.hbm_to_vmem [thread:$0]  %s22, 512, %s197, [#allocation22], 128, 128, 8
    $region93: #{tpu_custom_call.1} parent=1 // pred_fallthru
      _
    // Predicated region
    $region94: #{tpu_custom_call.1} parent=1 // pred_check
      _
    $region95: #{tpu_custom_call.1} parent=1 // pred_check_branch
      %204 = sbr.rel (0) target = $region97
    $region96: #{tpu_custom_call.1} parent=1 // pred_region
      _
    $region97: #{tpu_custom_call.1} parent=1 // pred_fallthru
      _
    // Predicated region
    $region98: #{tpu_custom_call.1} parent=1 // pred_check
      _
    $region99: #{tpu_custom_call.1} parent=1 // pred_check_branch
      %206 = sbr.rel (0) target = $region101
    $region100: #{tpu_custom_call.1} parent=1 // pred_region
      _
    $region101: #{tpu_custom_call.1} parent=1 // pred_fallthru
      _
    // Predicated region
    $region102: #{tpu_custom_call.1} parent=1 // pred_check
      _
    $region103: #{tpu_custom_call.1} parent=1 // pred_check_branch
      %208 = sbr.rel (0) target = $region105
    $region104: #{tpu_custom_call.1} parent=1 // pred_region
      _
    $region105: #{tpu_custom_call.1} parent=1 // pred_fallthru
      _
    // Predicated region
    $region106: #{tpu_custom_call.1} parent=1 // pred_check
      _
    $region107: #{tpu_custom_call.1} parent=1 // pred_check_branch
      %210 = sbr.rel (0) target = $region109
    $region108: #{tpu_custom_call.1} parent=1 // pred_region
      _
    $region109: #{tpu_custom_call.1} parent=1 // pred_fallthru
      _
    // Predicated region
    $region110: #{tpu_custom_call.1} parent=1 // pred_check
      _
    $region111: #{tpu_custom_call.1} parent=1 // pred_check_branch
      %212 = sbr.rel (0) target = $region113
    $region112: #{tpu_custom_call.1} parent=1 // pred_region
      _
    $region113: #{tpu_custom_call.1} parent=1 // pred_fallthru
      _
    // Predicated region
    $region114: #{tpu_custom_call.1} parent=1 // pred_check
      _
    $region115: #{tpu_custom_call.1} parent=1 // pred_check_branch
      %214 = sbr.rel (0) target = $region117
    $region116: #{tpu_custom_call.1} parent=1 // pred_region
      %215 = dma.done [#allocation4], 256
    $region117: #{tpu_custom_call.1} parent=1 // pred_fallthru
      _
    // Predicated region
    $region118: #{tpu_custom_call.1} parent=1 // pred_check
      _
    $region119: #{tpu_custom_call.1} parent=1 // pred_check_branch
      %217 = sbr.rel (0) target = $region121
    $region120: #{tpu_custom_call.1} parent=1 // pred_region
      %218 = dma.done [#allocation7], 32
    $region121: #{tpu_custom_call.1} parent=1 // pred_fallthru
      _
    // Predicated region
    $region122: #{tpu_custom_call.1} parent=1 // pred_check
      _
    $region123: #{tpu_custom_call.1} parent=1 // pred_check_branch
      %220 = sbr.rel (0) target = $region125
    $region124: #{tpu_custom_call.1} parent=1 // pred_region
      %221 = dma.done [#allocation7], 16
    $region125: #{tpu_custom_call.1} parent=1 // pred_fallthru
      _
    // Predicated region
    $region126: #{tpu_custom_call.1} parent=1 // pred_check
      _
    $region127: #{tpu_custom_call.1} parent=1 // pred_check_branch
      %223 = sbr.rel (0) target = $region129
    $region128: #{tpu_custom_call.1} parent=1 // pred_region
      %224 = dma.done [#allocation10], 16
    $region129: #{tpu_custom_call.1} parent=1 // pred_fallthru
      _
    // Predicated region
    $region130: #{tpu_custom_call.1} parent=1 // pred_check
      _
    $region131: #{tpu_custom_call.1} parent=1 // pred_check_branch
      %226 = sbr.rel (0) target = $region133
    $region132: #{tpu_custom_call.1} parent=1 // pred_region
      %227 = dma.done [#allocation10], 16
    $region133: #{tpu_custom_call.1} parent=1 // pred_fallthru
      _
    // Predicated region
    $region134: #{tpu_custom_call.1} parent=1 // pred_check
      _
    $region135: #{tpu_custom_call.1} parent=1 // pred_check_branch
      %229 = sbr.rel (0) target = $region137
    $region136: #{tpu_custom_call.1} parent=1 // pred_region
      %230 = dma.done [#allocation13], 64
    $region137: #{tpu_custom_call.1} parent=1 // pred_fallthru
      _
    // Predicated region
    $region138: #{tpu_custom_call.1} parent=1 // pred_check
      _
    $region139: #{tpu_custom_call.1} parent=1 // pred_check_branch
      %232 = sbr.rel (0) target = $region141
    $region140: #{tpu_custom_call.1} parent=1 // pred_region
      %233 = dma.done [#allocation13], 16
    $region141: #{tpu_custom_call.1} parent=1 // pred_fallthru
      _
    // Predicated region
    $region142: #{tpu_custom_call.1} parent=1 // pred_check
      _
    $region143: #{tpu_custom_call.1} parent=1 // pred_check_branch
      %235 = sbr.rel (0) target = $region145
    $region144: #{tpu_custom_call.1} parent=1 // pred_region
      %236 = dma.done [#allocation16], 16
    $region145: #{tpu_custom_call.1} parent=1 // pred_fallthru
      _
    // Predicated region
    $region146: #{tpu_custom_call.1} parent=1 // pred_check
      _
    $region147: #{tpu_custom_call.1} parent=1 // pred_check_branch
      %238 = sbr.rel (0) target = $region149
    $region148: #{tpu_custom_call.1} parent=1 // pred_region
      %239 = dma.done [#allocation16], 16
    $region149: #{tpu_custom_call.1} parent=1 // pred_fallthru
      _
    // Predicated region
    $region150: #{tpu_custom_call.1} parent=1 // pred_check
      _
    $region151: #{tpu_custom_call.1} parent=1 // pred_check_branch
      %241 = sbr.rel (0) target = $region153
    $region152: #{tpu_custom_call.1} parent=1 // pred_region
      %242 = dma.done [#allocation19], 1024
    $region153: #{tpu_custom_call.1} parent=1 // pred_fallthru
      _
    // Predicated region
    $region154: #{tpu_custom_call.1} parent=1 // pred_check
      _
    $region155: #{tpu_custom_call.1} parent=1 // pred_check_branch
      %244 = sbr.rel (0) target = $region157
    $region156: #{tpu_custom_call.1} parent=1 // pred_region
      %245 = dma.done [#allocation19], 32
    $region157: #{tpu_custom_call.1} parent=1 // pred_fallthru
      _
    // Predicated region
    $region158: #{tpu_custom_call.1} parent=1 // pred_check
      _
    $region159: #{tpu_custom_call.1} parent=1 // pred_check_branch
      %247 = sbr.rel (0) target = $region161
    $region160: #{tpu_custom_call.1} parent=1 // pred_region
      %248 = dma.done [#allocation22], 512
    $region161: #{tpu_custom_call.1} parent=1 // pred_fallthru
      _
    // Predicated region
    $region162: #{tpu_custom_call.1} parent=1 // pred_check
      _
    $region163: #{tpu_custom_call.1} parent=1 // pred_check_branch
      %250 = sbr.rel (0) target = $region165
    $region164: #{tpu_custom_call.1} parent=1 // pred_region
      %251 = dma.done [#allocation22], 512
    $region165: #{tpu_custom_call.1} parent=1 // pred_fallthru
      _
    %v252 = vld [vmem:[#allocation3] sm:$0xff]
    %v253 = vld [vmem:[#allocation3 + $0x8] sm:$0xff]
    %v254 = vld [vmem:[%s3] sm:$0xff]
    %v255 = vld [vmem:[%s3 + $0x8] sm:$0xff]
    %v256 = vld [vmem:[%s3 + $0x10] sm:$0xff]
    %v257 = vld [vmem:[%s3 + $0x18] sm:$0x3f]
    %v258 = vld [vmem:[#allocation8] sm:$0x1]
    %v260 = vlaneseq
    %v261 = vshrl.u32 %v260, 7
    %v262 = vsub.s32 0, %v261
    %v263 = vrot.slane %v258, %v262
    %vm265 = vcmask 244736
    %v267 = vsel %vm265, %v252, 0
    %v270 = vsel %vm265, %v253, 0
    %vm272 = vcmask 1045504
    %v274 = vsel %vm272, %v257, 0
    %276 = vmatprep.subr.mxu0 0.0
    %277 = vmatpush1.msra.mxu0 %v254
    %278 = vmatprep.subr.mxu0 0.0
    %279 = vmatpush1.msra.mxu0 %v255
    %280 = vmatprep.subr.mxu0 0.0
    %281 = vmatpush1.msra.mxu0 %v256
    %282 = vmatprep.subr.mxu0 0.0
    %283 = vmatpush1.msra.mxu0 %v274
    %284 = vmatprep.subr.mxu0 0.0
    %285 = vmatpush1.msra.mxu0 0.0
    %286 = vmatprep.subr.mxu0 0.0
    %287 = vmatpush1.msra.mxu0 0.0
    %288 = vmatprep.subr.mxu0 0.0
    %289 = vmatpush1.msra.mxu0 0.0
    %290 = vmatprep.subr.mxu0 0.0
    %291 = vmatpush1.msra.mxu0 0.0
    %292 = vmatprep.subr.mxu0 0.0
    %293 = vmatpush1.msra.mxu0 0.0
    %294 = vmatprep.subr.mxu0 0.0
    %295 = vmatpush1.msra.mxu0 0.0
    %296 = vmatprep.subr.mxu0 0.0
    %297 = vmatpush1.msra.mxu0 0.0
    %298 = vmatprep.subr.mxu0 0.0
    %299 = vmatpush1.msra.mxu0 0.0
    %300 = vmatprep.subr.mxu0 0.0
    %301 = vmatpush1.msra.mxu0 0.0
    %302 = vmatprep.subr.mxu0 0.0
    %303 = vmatpush1.msra.mxu0 0.0
    %304 = vmatprep.subr.mxu0 0.0
    %305 = vmatpush1.msra.mxu0 0.0
    %306 = vmatprep.subr.mxu0 0.0
    %307 = vmatpush1.msra.mxu0 0.0
    %308 = vmatprep.subr.mxu0 0.0
    %309 = vmatpush1.msra.mxu0 0.0
    %310 = vmatprep.subr.mxu0 0.0
    %311 = vmatpush1.msra.mxu0 0.0
    %312 = vmatprep.subr.mxu0 0.0
    %313 = vmatpush1.msra.mxu0 0.0
    %314 = vmatprep.subr.mxu0 0.0
    %315 = vmatpush1.msra.mxu0 0.0
    %316 = vmatprep.subr.mxu0 0.0
    %317 = vmatpush1.msra.mxu0 0.0
    %318 = vmatprep.subr.mxu0 0.0
    %319 = vmatpush1.msra.mxu0 0.0
    %320 = vmatprep.subr.mxu0 0.0
    %321 = vmatpush1.msra.mxu0 0.0
    %322 = vmatprep.subr.mxu0 0.0
    %323 = vmatpush1.msra.mxu0 0.0
    %324 = vmatprep.subr.mxu0 0.0
    %325 = vmatpush1.msra.mxu0 0.0
    %326 = vmatprep.subr.mxu0 0.0
    %327 = vmatpush1.msra.mxu0 0.0
    %328 = vmatprep.subr.mxu0 0.0
    %329 = vmatpush1.msra.mxu0 0.0
    %330 = vmatprep.subr.mxu0 0.0
    %331 = vmatpush1.msra.mxu0 0.0
    %332 = vmatprep.subr.mxu0 0.0
    %333 = vmatpush1.msra.mxu0 0.0
    %334 = vmatprep.subr.mxu0 0.0
    %335 = vmatpush1.msra.mxu0 0.0
    %336 = vmatprep.subr.mxu0 0.0
    %337 = vmatpush1.msra.mxu0 0.0
    %338 = vmatprep.subr.mxu0 0.0
    %339 = vmatpush1.msra.mxu0 0.0
    %340 = vmatprep.mubr.f32.mxu0 0.0
    %341 = vmatmul.mubr.f32.gmra.mrb[0].mxu0 %v267
    %v342 = vpop.f32.mrb[0].mxu0
    %v343 = vadd.f32 %v263, %v342
    %v344 = vpop.f32.mrb[0].mxu0
    %345 = vmatprep.mubr.f32.mxu0 0.0
    %346 = vmatmul.mubr.f32.gmra.mrb[0].mxu0 %v270
    %v347 = vpop.f32.mrb[0].mxu0
    %v348 = vadd.f32 %v263, %v347
    %v349 = vpop.f32.mrb[0].mxu0
    %350 = vdwg.mxu0
    %v351 = vld [vmem:[#allocation9] sm:$0x1]
    %v352 = vld [vmem:[#allocation11] sm:$0x1]
    %vm353 = vcmask 130048
    %v354 = vsel %vm353, %v343, 0.0
    %355 = vadd.xlane.f32.xlu0 %v354
    %v356 = vpop.xlane.xlu0 %355
    %v357 = vsel %vm353, %v348, 0.0
    %358 = vadd.xlane.f32.xlu0 %v357
    %v359 = vpop.xlane.xlu0 %358
    %v360 = vrcp.pop 16.0
    %v361 = vmul.f32 %v356, %v360
    %v362 = vmul.f32 %v359, %v360
    %v363 = vsub.f32 %v343, %v361
    %v364 = vsub.f32 %v348, %v362
    %v365 = vmul.f32 %v363, %v363
    %v366 = vmul.f32 %v364, %v364
    %v367 = vsel %vm353, %v365, 0.0
    %368 = vadd.xlane.f32.xlu0 %v367
    %v369 = vpop.xlane.xlu0 %368
    %v370 = vsel %vm353, %v366, 0.0
    %371 = vadd.xlane.f32.xlu0 %v370
    %v372 = vpop.xlane.xlu0 %371
    %v373 = vmul.f32 %v369, %v360
    %v374 = vmul.f32 %v372, %v360
    %v375 = vadd.f32 %v373, 1e-05
    %v376 = vadd.f32 %v374, 1e-05
    %v377 = vrsqrt.pop %v375
    %v378 = vrsqrt.pop %v376
    %v379 = vmul.f32 %v363, %v377
    %v380 = vmul.f32 %v364, %v378
    %v382 = vlaneseq
    %v383 = vshrl.u32 %v382, 7
    %v384 = vsub.s32 0, %v383
    %v385 = vrot.slane %v351, %v384
    %v387 = vmul.f32 %v379, %v385
    %v388 = vmul.f32 %v380, %v385
    %v390 = vlaneseq
    %v391 = vshrl.u32 %v390, 7
    %v392 = vsub.s32 0, %v391
    %v393 = vrot.slane %v352, %v392
    %v395 = vadd.f32 %v387, %v393
    %v396 = vadd.f32 %v388, %v393
    %v397 = vld [vmem:[%s1] sm:$0xff]
    %v398 = vld [vmem:[%s1 + $0x8] sm:$0xff]
    %v399 = vld [vmem:[#allocation12] sm:$0xf]
    %v400 = vld [vmem:[#allocation14] sm:$0x1]
    %v402 = vlaneseq
    %v403 = vshrl.u32 %v402, 7
    %v404 = vsub.s32 0, %v403
    %v405 = vrot.slane %v400, %v404
    %vm407 = vcmask 31744
    %v409 = vsel %vm407, %v397, 0
    %v412 = vsel %vm407, %v398, 0
    %vm414 = vcmask 1043456
    %v416 = vsel %vm414, %v399, 0
    %418 = vmatprep.subr.mxu0 0.0
    %419 = vmatpush1.msra.mxu0 %v416
    %420 = vmatprep.subr.mxu0 0.0
    %421 = vmatpush1.msra.mxu0 0.0
    %422 = vmatprep.subr.mxu0 0.0
    %423 = vmatpush1.msra.mxu0 0.0
    %424 = vmatprep.subr.mxu0 0.0
    %425 = vmatpush1.msra.mxu0 0.0
    %426 = vmatprep.subr.mxu0 0.0
    %427 = vmatpush1.msra.mxu0 0.0
    %428 = vmatprep.subr.mxu0 0.0
    %429 = vmatpush1.msra.mxu0 0.0
    %430 = vmatprep.subr.mxu0 0.0
    %431 = vmatpush1.msra.mxu0 0.0
    %432 = vmatprep.subr.mxu0 0.0
    %433 = vmatpush1.msra.mxu0 0.0
    %434 = vmatprep.subr.mxu0 0.0
    %435 = vmatpush1.msra.mxu0 0.0
    %436 = vmatprep.subr.mxu0 0.0
    %437 = vmatpush1.msra.mxu0 0.0
    %438 = vmatprep.subr.mxu0 0.0
    %439 = vmatpush1.msra.mxu0 0.0
    %440 = vmatprep.subr.mxu0 0.0
    %441 = vmatpush1.msra.mxu0 0.0
    %442 = vmatprep.subr.mxu0 0.0
    %443 = vmatpush1.msra.mxu0 0.0
    %444 = vmatprep.subr.mxu0 0.0
    %445 = vmatpush1.msra.mxu0 0.0
    %446 = vmatprep.subr.mxu0 0.0
    %447 = vmatpush1.msra.mxu0 0.0
    %448 = vmatprep.subr.mxu0 0.0
    %449 = vmatpush1.msra.mxu0 0.0
    %450 = vmatprep.subr.mxu0 0.0
    %451 = vmatpush1.msra.mxu0 0.0
    %452 = vmatprep.subr.mxu0 0.0
    %453 = vmatpush1.msra.mxu0 0.0
    %454 = vmatprep.subr.mxu0 0.0
    %455 = vmatpush1.msra.mxu0 0.0
    %456 = vmatprep.subr.mxu0 0.0
    %457 = vmatpush1.msra.mxu0 0.0
    %458 = vmatprep.subr.mxu0 0.0
    %459 = vmatpush1.msra.mxu0 0.0
    %460 = vmatprep.subr.mxu0 0.0
    %461 = vmatpush1.msra.mxu0 0.0
    %462 = vmatprep.subr.mxu0 0.0
    %463 = vmatpush1.msra.mxu0 0.0
    %464 = vmatprep.subr.mxu0 0.0
    %465 = vmatpush1.msra.mxu0 0.0
    %466 = vmatprep.subr.mxu0 0.0
    %467 = vmatpush1.msra.mxu0 0.0
    %468 = vmatprep.subr.mxu0 0.0
    %469 = vmatpush1.msra.mxu0 0.0
    %470 = vmatprep.subr.mxu0 0.0
    %471 = vmatpush1.msra.mxu0 0.0
    %472 = vmatprep.subr.mxu0 0.0
    %473 = vmatpush1.msra.mxu0 0.0
    %474 = vmatprep.subr.mxu0 0.0
    %475 = vmatpush1.msra.mxu0 0.0
    %476 = vmatprep.subr.mxu0 0.0
    %477 = vmatpush1.msra.mxu0 0.0
    %478 = vmatprep.subr.mxu0 0.0
    %479 = vmatpush1.msra.mxu0 0.0
    %480 = vmatprep.subr.mxu0 0.0
    %481 = vmatpush1.msra.mxu0 0.0
    %482 = vmatprep.mubr.f32.mxu0 0.0
    %483 = vmatmul.mubr.f32.gmra.mrb[0].mxu0 %v409
    %v484 = vpop.f32.mrb[0].mxu0
    %v485 = vadd.f32 %v405, %v484
    %v486 = vpop.f32.mrb[0].mxu0
    %487 = vmatprep.mubr.f32.mxu0 0.0
    %488 = vmatmul.mubr.f32.gmra.mrb[0].mxu0 %v412
    %v489 = vpop.f32.mrb[0].mxu0
    %v490 = vadd.f32 %v405, %v489
    %v491 = vpop.f32.mrb[0].mxu0
    %492 = vdwg.mxu0
    %v493 = vld [vmem:[#allocation15] sm:$0x1]
    %v494 = vld [vmem:[#allocation17] sm:$0x1]
    %v495 = vsel %vm353, %v485, 0.0
    %496 = vadd.xlane.f32.xlu0 %v495
    %v497 = vpop.xlane.xlu0 %496
    %v498 = vsel %vm353, %v490, 0.0
    %499 = vadd.xlane.f32.xlu0 %v498
    %v500 = vpop.xlane.xlu0 %499
    %v501 = vmul.f32 %v497, %v360
    %v502 = vmul.f32 %v500, %v360
    %v503 = vsub.f32 %v485, %v501
    %v504 = vsub.f32 %v490, %v502
    %v505 = vmul.f32 %v503, %v503
    %v506 = vmul.f32 %v504, %v504
    %v507 = vsel %vm353, %v505, 0.0
    %508 = vadd.xlane.f32.xlu0 %v507
    %v509 = vpop.xlane.xlu0 %508
    %v510 = vsel %vm353, %v506, 0.0
    %511 = vadd.xlane.f32.xlu0 %v510
    %v512 = vpop.xlane.xlu0 %511
    %v513 = vmul.f32 %v509, %v360
    %v514 = vmul.f32 %v512, %v360
    %v515 = vadd.f32 %v513, 1e-05
    %v516 = vadd.f32 %v514, 1e-05
    %v517 = vrsqrt.pop %v515
    %v518 = vrsqrt.pop %v516
    %v519 = vmul.f32 %v503, %v517
    %v520 = vmul.f32 %v504, %v518
    %v522 = vlaneseq
    %v523 = vshrl.u32 %v522, 7
    %v524 = vsub.s32 0, %v523
    %v525 = vrot.slane %v493, %v524
    %v527 = vmul.f32 %v519, %v525
    %v528 = vmul.f32 %v520, %v525
    %v530 = vlaneseq
    %v531 = vshrl.u32 %v530, 7
    %v532 = vsub.s32 0, %v531
    %v533 = vrot.slane %v494, %v532
    %v535 = vadd.f32 %v527, %v533
    %v536 = vadd.f32 %v528, %v533
    %539 = vrot.lane.b32.xlu0 %v535, 16
    %v540 = vpop.permute.xlu0 %539
    %541 = vrot.lane.b32.xlu0 %v536, 16
    %v542 = vpop.permute.xlu0 %541
    %v545 = vsel %vm353, %v395, %v540
    %v546 = vsel %vm353, %v396, %v542
    %v547 = vlaneseq
    %v548 = vshrl.u32 %v547, 7
    %v549 = vld [vmem:[#allocation18] sm:$0xff]
    %v550 = vld [vmem:[#allocation18 + $0x8] sm:$0xff]
    %v551 = vld [vmem:[#allocation18 + $0x10] sm:$0xff]
    %v552 = vld [vmem:[#allocation18 + $0x18] sm:$0xff]
    %v553 = vld [vmem:[%s11] sm:$0xff]
    %v554 = vld [vmem:[%s11 + $0x8] sm:$0xff]
    %v555 = vld [vmem:[%s11 + $0x10] sm:$0xff]
    %v556 = vld [vmem:[%s11 + $0x18] sm:$0xff]
    %v557 = vld [vmem:[#allocation20] sm:$0x1]
    %v559 = vlaneseq
    %v560 = vshrl.u32 %v559, 7
    %v561 = vsub.s32 0, %v560
    %v562 = vrot.slane %v557, %v561
    %vm564 = vcmask 261120
    %v566 = vsel %vm564, %v545, 0
    %v569 = vsel %vm564, %v546, 0
    %571 = vmatprep.subr.mxu0 0.0
    %572 = vmatpush1.msra.mxu0 %v553
    %573 = vmatprep.subr.mxu0 0.0
    %574 = vmatpush1.msra.mxu0 %v554
    %575 = vmatprep.subr.mxu0 0.0
    %576 = vmatpush1.msra.mxu0 %v555
    %577 = vmatprep.subr.mxu0 0.0
    %578 = vmatpush1.msra.mxu0 %v556
    %579 = vmatprep.subr.mxu0 0.0
    %580 = vmatpush1.msra.mxu0 0.0
    %581 = vmatprep.subr.mxu0 0.0
    %582 = vmatpush1.msra.mxu0 0.0
    %583 = vmatprep.subr.mxu0 0.0
    %584 = vmatpush1.msra.mxu0 0.0
    %585 = vmatprep.subr.mxu0 0.0
    %586 = vmatpush1.msra.mxu0 0.0
    %587 = vmatprep.subr.mxu0 0.0
    %588 = vmatpush1.msra.mxu0 0.0
    %589 = vmatprep.subr.mxu0 0.0
    %590 = vmatpush1.msra.mxu0 0.0
    %591 = vmatprep.subr.mxu0 0.0
    %592 = vmatpush1.msra.mxu0 0.0
    %593 = vmatprep.subr.mxu0 0.0
    %594 = vmatpush1.msra.mxu0 0.0
    %595 = vmatprep.subr.mxu0 0.0
    %596 = vmatpush1.msra.mxu0 0.0
    %597 = vmatprep.subr.mxu0 0.0
    %598 = vmatpush1.msra.mxu0 0.0
    %599 = vmatprep.subr.mxu0 0.0
    %600 = vmatpush1.msra.mxu0 0.0
    %601 = vmatprep.subr.mxu0 0.0
    %602 = vmatpush1.msra.mxu0 0.0
    %603 = vmatprep.subr.mxu0 0.0
    %604 = vmatpush1.msra.mxu0 0.0
    %605 = vmatprep.subr.mxu0 0.0
    %606 = vmatpush1.msra.mxu0 0.0
    %607 = vmatprep.subr.mxu0 0.0
    %608 = vmatpush1.msra.mxu0 0.0
    %609 = vmatprep.subr.mxu0 0.0
    %610 = vmatpush1.msra.mxu0 0.0
    %611 = vmatprep.subr.mxu0 0.0
    %612 = vmatpush1.msra.mxu0 0.0
    %613 = vmatprep.subr.mxu0 0.0
    %614 = vmatpush1.msra.mxu0 0.0
    %615 = vmatprep.subr.mxu0 0.0
    %616 = vmatpush1.msra.mxu0 0.0
    %617 = vmatprep.subr.mxu0 0.0
    %618 = vmatpush1.msra.mxu0 0.0
    %619 = vmatprep.subr.mxu0 0.0
    %620 = vmatpush1.msra.mxu0 0.0
    %621 = vmatprep.subr.mxu0 0.0
    %622 = vmatpush1.msra.mxu0 0.0
    %623 = vmatprep.subr.mxu0 0.0
    %624 = vmatpush1.msra.mxu0 0.0
    %625 = vmatprep.subr.mxu0 0.0
    %626 = vmatpush1.msra.mxu0 0.0
    %627 = vmatprep.subr.mxu0 0.0
    %628 = vmatpush1.msra.mxu0 0.0
    %629 = vmatprep.subr.mxu0 0.0
    %630 = vmatpush1.msra.mxu0 0.0
    %631 = vmatprep.subr.mxu0 0.0
    %632 = vmatpush1.msra.mxu0 0.0
    %633 = vmatprep.subr.mxu0 0.0
    %634 = vmatpush1.msra.mxu0 0.0
    %635 = vmatprep.mubr.f32.mxu0 0.0
    %636 = vmatmul.mubr.f32.gmra.mrb[0].mxu0 %v566
    %v637 = vpop.f32.mrb[0].mxu0
    %v638 = vadd.f32 %v562, %v637
    %v639 = vpop.f32.mrb[0].mxu0
    %640 = vmatprep.mubr.f32.mxu0 0.0
    %641 = vmatmul.mubr.f32.gmra.mrb[0].mxu0 %v569
    %v642 = vpop.f32.mrb[0].mxu0
    %v643 = vadd.f32 %v562, %v642
    %v644 = vpop.f32.mrb[0].mxu0
    %645 = vdwg.mxu0
    %v647 = vsel %vm564, 0.0, 0
    %649 = vmatprep.subr.mxu0 0.0
    %650 = vmatpush1.msra.mxu0 %v549
    %651 = vmatprep.subr.mxu0 0.0
    %652 = vmatpush1.msra.mxu0 %v550
    %653 = vmatprep.subr.mxu0 0.0
    %654 = vmatpush1.msra.mxu0 %v551
    %655 = vmatprep.subr.mxu0 0.0
    %656 = vmatpush1.msra.mxu0 %v552
    %657 = vmatprep.subr.mxu0 0.0
    %658 = vmatpush1.msra.mxu0 0.0
    %659 = vmatprep.subr.mxu0 0.0
    %660 = vmatpush1.msra.mxu0 0.0
    %661 = vmatprep.subr.mxu0 0.0
    %662 = vmatpush1.msra.mxu0 0.0
    %663 = vmatprep.subr.mxu0 0.0
    %664 = vmatpush1.msra.mxu0 0.0
    %665 = vmatprep.subr.mxu0 0.0
    %666 = vmatpush1.msra.mxu0 0.0
    %667 = vmatprep.subr.mxu0 0.0
    %668 = vmatpush1.msra.mxu0 0.0
    %669 = vmatprep.subr.mxu0 0.0
    %670 = vmatpush1.msra.mxu0 0.0
    %671 = vmatprep.subr.mxu0 0.0
    %672 = vmatpush1.msra.mxu0 0.0
    %673 = vmatprep.subr.mxu0 0.0
    %674 = vmatpush1.msra.mxu0 0.0
    %675 = vmatprep.subr.mxu0 0.0
    %676 = vmatpush1.msra.mxu0 0.0
    %677 = vmatprep.subr.mxu0 0.0
    %678 = vmatpush1.msra.mxu0 0.0
    %679 = vmatprep.subr.mxu0 0.0
    %680 = vmatpush1.msra.mxu0 0.0
    %681 = vmatprep.subr.mxu0 0.0
    %682 = vmatpush1.msra.mxu0 0.0
    %683 = vmatprep.subr.mxu0 0.0
    %684 = vmatpush1.msra.mxu0 0.0
    %685 = vmatprep.subr.mxu0 0.0
    %686 = vmatpush1.msra.mxu0 0.0
    %687 = vmatprep.subr.mxu0 0.0
    %688 = vmatpush1.msra.mxu0 0.0
    %689 = vmatprep.subr.mxu0 0.0
    %690 = vmatpush1.msra.mxu0 0.0
    %691 = vmatprep.subr.mxu0 0.0
    %692 = vmatpush1.msra.mxu0 0.0
    %693 = vmatprep.subr.mxu0 0.0
    %694 = vmatpush1.msra.mxu0 0.0
    %695 = vmatprep.subr.mxu0 0.0
    %696 = vmatpush1.msra.mxu0 0.0
    %697 = vmatprep.subr.mxu0 0.0
    %698 = vmatpush1.msra.mxu0 0.0
    %699 = vmatprep.subr.mxu0 0.0
    %700 = vmatpush1.msra.mxu0 0.0
    %701 = vmatprep.subr.mxu0 0.0
    %702 = vmatpush1.msra.mxu0 0.0
    %703 = vmatprep.subr.mxu0 0.0
    %704 = vmatpush1.msra.mxu0 0.0
    %705 = vmatprep.subr.mxu0 0.0
    %706 = vmatpush1.msra.mxu0 0.0
    %707 = vmatprep.subr.mxu0 0.0
    %708 = vmatpush1.msra.mxu0 0.0
    %709 = vmatprep.subr.mxu0 0.0
    %710 = vmatpush1.msra.mxu0 0.0
    %711 = vmatprep.subr.mxu0 0.0
    %712 = vmatpush1.msra.mxu0 0.0
    %713 = vmatprep.mubr.f32.mxu0 0.0
    %714 = vmatmul.mubr.f32.gmra.mrb[0].mxu0 %v647
    %v715 = vpop.f32.mrb[0].mxu0
    %v716 = vadd.f32 0.0, %v715
    %v717 = vpop.f32.mrb[0].mxu0
    %718 = vdwg.mxu0
    %v720 = vrot.slane %v716, 1
    %v723 = vadd.f32 %v638, %v716
    %v724 = vadd.f32 %v643, %v720
    %v725 = vmul.f32 %v723, 0.5
    %v726 = vmul.f32 %v724, 0.5
    %v727 = vtanh.pop %v725
    %v728 = vtanh.pop %v726
    %v729 = vadd.f32 %v727, 1.0
    %v730 = vadd.f32 %v728, 1.0
    %v731 = vmul.f32 %v729, 0.5
    %v732 = vmul.f32 %v730, 0.5
    %v733 = vtanh.pop %v723
    %v734 = vtanh.pop %v724
    %v735 = vmul.f32 %v731, 0.0
    %v736 = vmul.f32 %v732, 0.0
    %739 = vrot.lane.b32.xlu0 %v733, 64
    %v740 = vpop.permute.xlu0 %739
    %741 = vrot.lane.b32.xlu0 %v734, 64
    %v742 = vpop.permute.xlu0 %741
    %v745 = vmul.f32 %v731, %v740
    %v746 = vmul.f32 %v732, %v742
    %749 = vrot.lane.b32.xlu0 %v745, 32
    %v750 = vpop.permute.xlu0 %749
    %751 = vrot.lane.b32.xlu0 %v746, 32
    %v752 = vpop.permute.xlu0 %751
    %v755 = vadd.f32 %v735, %v750
    %v756 = vadd.f32 %v736, %v752
    %v757 = vtanh.pop %v755
    %v758 = vtanh.pop %v756
    %761 = vrot.lane.b32.xlu0 %v757, 64
    %v762 = vpop.permute.xlu0 %761
    %763 = vrot.lane.b32.xlu0 %v758, 64
    %v764 = vpop.permute.xlu0 %763
    %v767 = vmul.f32 %v731, %v762
    %v768 = vmul.f32 %v732, %v764
    %vm769 = vcmp.eq.s32.totalorder %v548, 0
    %v770 = vsel %vm769, 1, 0
    %v771 = vcvt.s32.f32 %v770
    %v772 = vlaneseq
    %v773 = vshrl.u32 %v772, 7
    %v774 = vsub.s32 0, %v773
    %v775 = vrot.slane %v767, %v774
    %v776 = vlaneseq
    %v777 = vshrl.u32 %v776, 7
    %v778 = vsub.s32 0, %v777
    %v779 = vrot.slane %v768, %v778
    %v780 = vmul.f32 %v771, %v775
    %v781 = vmul.f32 %v771, %v779
    %v782 = vadd.f32 %v780, 0.0
    %v783 = vadd.f32 %v781, 0.0
    %v786 = vrot.slane %v768, 7
    %vm787 = vcmask 1041409
    %v788 = vsel %vm787, %v786, %v767
    %789 = vrot.lane.b32.xlu0 %v788, 32
    %v790 = vpop.permute.xlu0 %789
    %v791 = vsel %vm564, %v790, 0
    %793 = vmatprep.subr.mxu0 0.0
    %794 = vmatpush1.msra.mxu0 %v549
    %795 = vmatprep.subr.mxu0 0.0
    %796 = vmatpush1.msra.mxu0 %v550
    %797 = vmatprep.subr.mxu0 0.0
    %798 = vmatpush1.msra.mxu0 %v551
    %799 = vmatprep.subr.mxu0 0.0
    %800 = vmatpush1.msra.mxu0 %v552
    %801 = vmatprep.subr.mxu0 0.0
    %802 = vmatpush1.msra.mxu0 0.0
    %803 = vmatprep.subr.mxu0 0.0
    %804 = vmatpush1.msra.mxu0 0.0
    %805 = vmatprep.subr.mxu0 0.0
    %806 = vmatpush1.msra.mxu0 0.0
    %807 = vmatprep.subr.mxu0 0.0
    %808 = vmatpush1.msra.mxu0 0.0
    %809 = vmatprep.subr.mxu0 0.0
    %810 = vmatpush1.msra.mxu0 0.0
    %811 = vmatprep.subr.mxu0 0.0
    %812 = vmatpush1.msra.mxu0 0.0
    %813 = vmatprep.subr.mxu0 0.0
    %814 = vmatpush1.msra.mxu0 0.0
    %815 = vmatprep.subr.mxu0 0.0
    %816 = vmatpush1.msra.mxu0 0.0
    %817 = vmatprep.subr.mxu0 0.0
    %818 = vmatpush1.msra.mxu0 0.0
    %819 = vmatprep.subr.mxu0 0.0
    %820 = vmatpush1.msra.mxu0 0.0
    %821 = vmatprep.subr.mxu0 0.0
    %822 = vmatpush1.msra.mxu0 0.0
    %823 = vmatprep.subr.mxu0 0.0
    %824 = vmatpush1.msra.mxu0 0.0
    %825 = vmatprep.subr.mxu0 0.0
    %826 = vmatpush1.msra.mxu0 0.0
    %827 = vmatprep.subr.mxu0 0.0
    %828 = vmatpush1.msra.mxu0 0.0
    %829 = vmatprep.subr.mxu0 0.0
    %830 = vmatpush1.msra.mxu0 0.0
    %831 = vmatprep.subr.mxu0 0.0
    %832 = vmatpush1.msra.mxu0 0.0
    %833 = vmatprep.subr.mxu0 0.0
    %834 = vmatpush1.msra.mxu0 0.0
    %835 = vmatprep.subr.mxu0 0.0
    %836 = vmatpush1.msra.mxu0 0.0
    %837 = vmatprep.subr.mxu0 0.0
    %838 = vmatpush1.msra.mxu0 0.0
    %839 = vmatprep.subr.mxu0 0.0
    %840 = vmatpush1.msra.mxu0 0.0
    %841 = vmatprep.subr.mxu0 0.0
    %842 = vmatpush1.msra.mxu0 0.0
    %843 = vmatprep.subr.mxu0 0.0
    %844 = vmatpush1.msra.mxu0 0.0
    %845 = vmatprep.subr.mxu0 0.0
    %846 = vmatpush1.msra.mxu0 0.0
    %847 = vmatprep.subr.mxu0 0.0
    %848 = vmatpush1.msra.mxu0 0.0
    %849 = vmatprep.subr.mxu0 0.0
    %850 = vmatpush1.msra.mxu0 0.0
    %851 = vmatprep.subr.mxu0 0.0
    %852 = vmatpush1.msra.mxu0 0.0
    %853 = vmatprep.subr.mxu0 0.0
    %854 = vmatpush1.msra.mxu0 0.0
    %855 = vmatprep.subr.mxu0 0.0
    %856 = vmatpush1.msra.mxu0 0.0
    %857 = vmatprep.mubr.f32.mxu0 0.0
    %858 = vmatmul.mubr.f32.gmra.mrb[0].mxu0 %v791
    %v859 = vpop.f32.mrb[0].mxu0
    %v860 = vadd.f32 0.0, %v859
    %v861 = vpop.f32.mrb[0].mxu0
    %862 = vdwg.mxu0
    %v864 = vrot.slane %v860, 7
    %v867 = vadd.f32 %v638, %v864
    %v868 = vadd.f32 %v643, %v860
    %v869 = vmul.f32 %v867, 0.5
    %v870 = vmul.f32 %v868, 0.5
    %v871 = vtanh.pop %v869
    %v872 = vtanh.pop %v870
    %v873 = vadd.f32 %v871, 1.0
    %v874 = vadd.f32 %v872, 1.0
    %v875 = vmul.f32 %v873, 0.5
    %v876 = vmul.f32 %v874, 0.5
    %v877 = vtanh.pop %v867
    %v878 = vtanh.pop %v868
    %v881 = vrot.slane %v755, 7
    %v882 = vrot.slane %v756, 7
    %v885 = vmul.f32 %v875, %v881
    %v886 = vmul.f32 %v876, %v882
    %889 = vrot.lane.b32.xlu0 %v877, 64
    %v890 = vpop.permute.xlu0 %889
    %891 = vrot.lane.b32.xlu0 %v878, 64
    %v892 = vpop.permute.xlu0 %891
    %v895 = vmul.f32 %v875, %v890
    %v896 = vmul.f32 %v876, %v892
    %899 = vrot.lane.b32.xlu0 %v895, 32
    %v900 = vpop.permute.xlu0 %899
    %901 = vrot.lane.b32.xlu0 %v896, 32
    %v902 = vpop.permute.xlu0 %901
    %v905 = vadd.f32 %v885, %v900
    %v906 = vadd.f32 %v886, %v902
    %v907 = vtanh.pop %v905
    %v908 = vtanh.pop %v906
    %911 = vrot.lane.b32.xlu0 %v907, 64
    %v912 = vpop.permute.xlu0 %911
    %913 = vrot.lane.b32.xlu0 %v908, 64
    %v914 = vpop.permute.xlu0 %913
    %v917 = vmul.f32 %v875, %v912
    %v918 = vmul.f32 %v876, %v914
    %vm919 = vcmp.eq.s32.totalorder %v548, 1
    %v920 = vsel %vm919, 1, 0
    %v921 = vcvt.s32.f32 %v920
    %v922 = vlaneseq
    %v923 = vshrl.u32 %v922, 7
    %v924 = vsub.s32 1, %v923
    %v925 = vrot.slane %v917, %v924
    %v926 = vlaneseq
    %v927 = vshrl.u32 %v926, 7
    %v928 = vsub.s32 1, %v927
    %v929 = vrot.slane %v918, %v928
    %v930 = vmul.f32 %v921, %v925
    %v931 = vmul.f32 %v921, %v929
    %v932 = vadd.f32 %v782, %v930
    %v933 = vadd.f32 %v783, %v931
    %v936 = vrot.slane %v917, 1
    %v937 = vsel %vm787, %v918, %v936
    %938 = vrot.lane.b32.xlu0 %v937, 32
    %v939 = vpop.permute.xlu0 %938
    %v940 = vsel %vm564, %v939, 0
    %942 = vmatprep.subr.mxu0 0.0
    %943 = vmatpush1.msra.mxu0 %v549
    %944 = vmatprep.subr.mxu0 0.0
    %945 = vmatpush1.msra.mxu0 %v550
    %946 = vmatprep.subr.mxu0 0.0
    %947 = vmatpush1.msra.mxu0 %v551
    %948 = vmatprep.subr.mxu0 0.0
    %949 = vmatpush1.msra.mxu0 %v552
    %950 = vmatprep.subr.mxu0 0.0
    %951 = vmatpush1.msra.mxu0 0.0
    %952 = vmatprep.subr.mxu0 0.0
    %953 = vmatpush1.msra.mxu0 0.0
    %954 = vmatprep.subr.mxu0 0.0
    %955 = vmatpush1.msra.mxu0 0.0
    %956 = vmatprep.subr.mxu0 0.0
    %957 = vmatpush1.msra.mxu0 0.0
    %958 = vmatprep.subr.mxu0 0.0
    %959 = vmatpush1.msra.mxu0 0.0
    %960 = vmatprep.subr.mxu0 0.0
    %961 = vmatpush1.msra.mxu0 0.0
    %962 = vmatprep.subr.mxu0 0.0
    %963 = vmatpush1.msra.mxu0 0.0
    %964 = vmatprep.subr.mxu0 0.0
    %965 = vmatpush1.msra.mxu0 0.0
    %966 = vmatprep.subr.mxu0 0.0
    %967 = vmatpush1.msra.mxu0 0.0
    %968 = vmatprep.subr.mxu0 0.0
    %969 = vmatpush1.msra.mxu0 0.0
    %970 = vmatprep.subr.mxu0 0.0
    %971 = vmatpush1.msra.mxu0 0.0
    %972 = vmatprep.subr.mxu0 0.0
    %973 = vmatpush1.msra.mxu0 0.0
    %974 = vmatprep.subr.mxu0 0.0
    %975 = vmatpush1.msra.mxu0 0.0
    %976 = vmatprep.subr.mxu0 0.0
    %977 = vmatpush1.msra.mxu0 0.0
    %978 = vmatprep.subr.mxu0 0.0
    %979 = vmatpush1.msra.mxu0 0.0
    %980 = vmatprep.subr.mxu0 0.0
    %981 = vmatpush1.msra.mxu0 0.0
    %982 = vmatprep.subr.mxu0 0.0
    %983 = vmatpush1.msra.mxu0 0.0
    %984 = vmatprep.subr.mxu0 0.0
    %985 = vmatpush1.msra.mxu0 0.0
    %986 = vmatprep.subr.mxu0 0.0
    %987 = vmatpush1.msra.mxu0 0.0
    %988 = vmatprep.subr.mxu0 0.0
    %989 = vmatpush1.msra.mxu0 0.0
    %990 = vmatprep.subr.mxu0 0.0
    %991 = vmatpush1.msra.mxu0 0.0
    %992 = vmatprep.subr.mxu0 0.0
    %993 = vmatpush1.msra.mxu0 0.0
    %994 = vmatprep.subr.mxu0 0.0
    %995 = vmatpush1.msra.mxu0 0.0
    %996 = vmatprep.subr.mxu0 0.0
    %997 = vmatpush1.msra.mxu0 0.0
    %998 = vmatprep.subr.mxu0 0.0
    %999 = vmatpush1.msra.mxu0 0.0
    %1000 = vmatprep.subr.mxu0 0.0
    %1001 = vmatpush1.msra.mxu0 0.0
    %1002 = vmatprep.subr.mxu0 0.0
    %1003 = vmatpush1.msra.mxu0 0.0
    %1004 = vmatprep.subr.mxu0 0.0
    %1005 = vmatpush1.msra.mxu0 0.0
    %1006 = vmatprep.mubr.f32.mxu0 0.0
    %1007 = vmatmul.mubr.f32.gmra.mrb[0].mxu0 %v940
    %v1008 = vpop.f32.mrb[0].mxu0
    %v1009 = vadd.f32 0.0, %v1008
    %v1010 = vpop.f32.mrb[0].mxu0
    %1011 = vdwg.mxu0
    %v1013 = vrot.slane %v1009, 6
    %v1014 = vrot.slane %v1009, 7
    %v1017 = vadd.f32 %v638, %v1013
    %v1018 = vadd.f32 %v643, %v1014
    %v1019 = vmul.f32 %v1017, 0.5
    %v1020 = vmul.f32 %v1018, 0.5
    %v1021 = vtanh.pop %v1019
    %v1022 = vtanh.pop %v1020
    %v1023 = vadd.f32 %v1021, 1.0
    %v1024 = vadd.f32 %v1022, 1.0
    %v1025 = vmul.f32 %v1023, 0.5
    %v1026 = vmul.f32 %v1024, 0.5
    %v1027 = vtanh.pop %v1017
    %v1028 = vtanh.pop %v1018
    %v1031 = vrot.slane %v905, 7
    %v1032 = vrot.slane %v906, 7
    %v1035 = vmul.f32 %v1025, %v1031
    %v1036 = vmul.f32 %v1026, %v1032
    %1039 = vrot.lane.b32.xlu0 %v1027, 64
    %v1040 = vpop.permute.xlu0 %1039
    %1041 = vrot.lane.b32.xlu0 %v1028, 64
    %v1042 = vpop.permute.xlu0 %1041
    %v1045 = vmul.f32 %v1025, %v1040
    %v1046 = vmul.f32 %v1026, %v1042
    %1049 = vrot.lane.b32.xlu0 %v1045, 32
    %v1050 = vpop.permute.xlu0 %1049
    %1051 = vrot.lane.b32.xlu0 %v1046, 32
    %v1052 = vpop.permute.xlu0 %1051
    %v1055 = vadd.f32 %v1035, %v1050
    %v1056 = vadd.f32 %v1036, %v1052
    %v1057 = vtanh.pop %v1055
    %v1058 = vtanh.pop %v1056
    %1061 = vrot.lane.b32.xlu0 %v1057, 64
    %v1062 = vpop.permute.xlu0 %1061
    %1063 = vrot.lane.b32.xlu0 %v1058, 64
    %v1064 = vpop.permute.xlu0 %1063
    %v1067 = vmul.f32 %v1025, %v1062
    %v1068 = vmul.f32 %v1026, %v1064
    %vm1069 = vcmp.eq.s32.totalorder %v548, 2
    %v1070 = vsel %vm1069, 1, 0
    %v1071 = vcvt.s32.f32 %v1070
    %v1072 = vlaneseq
    %v1073 = vshrl.u32 %v1072, 7
    %v1074 = vsub.s32 2, %v1073
    %v1075 = vrot.slane %v1067, %v1074
    %v1076 = vlaneseq
    %v1077 = vshrl.u32 %v1076, 7
    %v1078 = vsub.s32 2, %v1077
    %v1079 = vrot.slane %v1068, %v1078
    %v1080 = vmul.f32 %v1071, %v1075
    %v1081 = vmul.f32 %v1071, %v1079
    %v1082 = vadd.f32 %v932, %v1080
    %v1083 = vadd.f32 %v933, %v1081
    %v1086 = vrot.slane %v1067, 2
    %v1087 = vrot.slane %v1068, 1
    %v1088 = vsel %vm787, %v1087, %v1086
    %1089 = vrot.lane.b32.xlu0 %v1088, 32
    %v1090 = vpop.permute.xlu0 %1089
    %v1091 = vsel %vm564, %v1090, 0
    %1093 = vmatprep.subr.mxu0 0.0
    %1094 = vmatpush1.msra.mxu0 %v549
    %1095 = vmatprep.subr.mxu0 0.0
    %1096 = vmatpush1.msra.mxu0 %v550
    %1097 = vmatprep.subr.mxu0 0.0
    %1098 = vmatpush1.msra.mxu0 %v551
    %1099 = vmatprep.subr.mxu0 0.0
    %1100 = vmatpush1.msra.mxu0 %v552
    %1101 = vmatprep.subr.mxu0 0.0
    %1102 = vmatpush1.msra.mxu0 0.0
    %1103 = vmatprep.subr.mxu0 0.0
    %1104 = vmatpush1.msra.mxu0 0.0
    %1105 = vmatprep.subr.mxu0 0.0
    %1106 = vmatpush1.msra.mxu0 0.0
    %1107 = vmatprep.subr.mxu0 0.0
    %1108 = vmatpush1.msra.mxu0 0.0
    %1109 = vmatprep.subr.mxu0 0.0
    %1110 = vmatpush1.msra.mxu0 0.0
    %1111 = vmatprep.subr.mxu0 0.0
    %1112 = vmatpush1.msra.mxu0 0.0
    %1113 = vmatprep.subr.mxu0 0.0
    %1114 = vmatpush1.msra.mxu0 0.0
    %1115 = vmatprep.subr.mxu0 0.0
    %1116 = vmatpush1.msra.mxu0 0.0
    %1117 = vmatprep.subr.mxu0 0.0
    %1118 = vmatpush1.msra.mxu0 0.0
    %1119 = vmatprep.subr.mxu0 0.0
    %1120 = vmatpush1.msra.mxu0 0.0
    %1121 = vmatprep.subr.mxu0 0.0
    %1122 = vmatpush1.msra.mxu0 0.0
    %1123 = vmatprep.subr.mxu0 0.0
    %1124 = vmatpush1.msra.mxu0 0.0
    %1125 = vmatprep.subr.mxu0 0.0
    %1126 = vmatpush1.msra.mxu0 0.0
    %1127 = vmatprep.subr.mxu0 0.0
    %1128 = vmatpush1.msra.mxu0 0.0
    %1129 = vmatprep.subr.mxu0 0.0
    %1130 = vmatpush1.msra.mxu0 0.0
    %1131 = vmatprep.subr.mxu0 0.0
    %1132 = vmatpush1.msra.mxu0 0.0
    %1133 = vmatprep.subr.mxu0 0.0
    %1134 = vmatpush1.msra.mxu0 0.0
    %1135 = vmatprep.subr.mxu0 0.0
    %1136 = vmatpush1.msra.mxu0 0.0
    %1137 = vmatprep.subr.mxu0 0.0
    %1138 = vmatpush1.msra.mxu0 0.0
    %1139 = vmatprep.subr.mxu0 0.0
    %1140 = vmatpush1.msra.mxu0 0.0
    %1141 = vmatprep.subr.mxu0 0.0
    %1142 = vmatpush1.msra.mxu0 0.0
    %1143 = vmatprep.subr.mxu0 0.0
    %1144 = vmatpush1.msra.mxu0 0.0
    %1145 = vmatprep.subr.mxu0 0.0
    %1146 = vmatpush1.msra.mxu0 0.0
    %1147 = vmatprep.subr.mxu0 0.0
    %1148 = vmatpush1.msra.mxu0 0.0
    %1149 = vmatprep.subr.mxu0 0.0
    %1150 = vmatpush1.msra.mxu0 0.0
    %1151 = vmatprep.subr.mxu0 0.0
    %1152 = vmatpush1.msra.mxu0 0.0
    %1153 = vmatprep.subr.mxu0 0.0
    %1154 = vmatpush1.msra.mxu0 0.0
    %1155 = vmatprep.subr.mxu0 0.0
    %1156 = vmatpush1.msra.mxu0 0.0
    %1157 = vmatprep.mubr.f32.mxu0 0.0
    %1158 = vmatmul.mubr.f32.gmra.mrb[0].mxu0 %v1091
    %v1159 = vpop.f32.mrb[0].mxu0
    %v1160 = vadd.f32 0.0, %v1159
    %v1161 = vpop.f32.mrb[0].mxu0
    %1162 = vdwg.mxu0
    %v1164 = vrot.slane %v1160, 5
    %v1165 = vrot.slane %v1160, 6
    %v1168 = vadd.f32 %v638, %v1164
    %v1169 = vadd.f32 %v643, %v1165
    %v1170 = vmul.f32 %v1168, 0.5
    %v1171 = vmul.f32 %v1169, 0.5
    %v1172 = vtanh.pop %v1170
    %v1173 = vtanh.pop %v1171
    %v1174 = vadd.f32 %v1172, 1.0
    %v1175 = vadd.f32 %v1173, 1.0
    %v1176 = vmul.f32 %v1174, 0.5
    %v1177 = vmul.f32 %v1175, 0.5
    %v1178 = vtanh.pop %v1168
    %v1179 = vtanh.pop %v1169
    %v1182 = vrot.slane %v1055, 7
    %v1183 = vrot.slane %v1056, 7
    %v1186 = vmul.f32 %v1176, %v1182
    %v1187 = vmul.f32 %v1177, %v1183
    %1190 = vrot.lane.b32.xlu0 %v1178, 64
    %v1191 = vpop.permute.xlu0 %1190
    %1192 = vrot.lane.b32.xlu0 %v1179, 64
    %v1193 = vpop.permute.xlu0 %1192
    %v1196 = vmul.f32 %v1176, %v1191
    %v1197 = vmul.f32 %v1177, %v1193
    %1200 = vrot.lane.b32.xlu0 %v1196, 32
    %v1201 = vpop.permute.xlu0 %1200
    %1202 = vrot.lane.b32.xlu0 %v1197, 32
    %v1203 = vpop.permute.xlu0 %1202
    %v1206 = vadd.f32 %v1186, %v1201
    %v1207 = vadd.f32 %v1187, %v1203
    %v1208 = vtanh.pop %v1206
    %v1209 = vtanh.pop %v1207
    %1212 = vrot.lane.b32.xlu0 %v1208, 64
    %v1213 = vpop.permute.xlu0 %1212
    %1214 = vrot.lane.b32.xlu0 %v1209, 64
    %v1215 = vpop.permute.xlu0 %1214
    %v1218 = vmul.f32 %v1176, %v1213
    %v1219 = vmul.f32 %v1177, %v1215
    %vm1220 = vcmp.eq.s32.totalorder %v548, 3
    %v1221 = vsel %vm1220, 1, 0
    %v1222 = vcvt.s32.f32 %v1221
    %v1223 = vlaneseq
    %v1224 = vshrl.u32 %v1223, 7
    %v1225 = vsub.s32 3, %v1224
    %v1226 = vrot.slane %v1218, %v1225
    %v1227 = vlaneseq
    %v1228 = vshrl.u32 %v1227, 7
    %v1229 = vsub.s32 3, %v1228
    %v1230 = vrot.slane %v1219, %v1229
    %v1231 = vmul.f32 %v1222, %v1226
    %v1232 = vmul.f32 %v1222, %v1230
    %v1233 = vadd.f32 %v1082, %v1231
    %v1234 = vadd.f32 %v1083, %v1232
    %v1237 = vrot.slane %v1218, 3
    %v1238 = vrot.slane %v1219, 2
    %v1239 = vsel %vm787, %v1238, %v1237
    %1240 = vrot.lane.b32.xlu0 %v1239, 32
    %v1241 = vpop.permute.xlu0 %1240
    %v1242 = vsel %vm564, %v1241, 0
    %1244 = vmatprep.subr.mxu0 0.0
    %1245 = vmatpush1.msra.mxu0 %v549
    %1246 = vmatprep.subr.mxu0 0.0
    %1247 = vmatpush1.msra.mxu0 %v550
    %1248 = vmatprep.subr.mxu0 0.0
    %1249 = vmatpush1.msra.mxu0 %v551
    %1250 = vmatprep.subr.mxu0 0.0
    %1251 = vmatpush1.msra.mxu0 %v552
    %1252 = vmatprep.subr.mxu0 0.0
    %1253 = vmatpush1.msra.mxu0 0.0
    %1254 = vmatprep.subr.mxu0 0.0
    %1255 = vmatpush1.msra.mxu0 0.0
    %1256 = vmatprep.subr.mxu0 0.0
    %1257 = vmatpush1.msra.mxu0 0.0
    %1258 = vmatprep.subr.mxu0 0.0
    %1259 = vmatpush1.msra.mxu0 0.0
    %1260 = vmatprep.subr.mxu0 0.0
    %1261 = vmatpush1.msra.mxu0 0.0
    %1262 = vmatprep.subr.mxu0 0.0
    %1263 = vmatpush1.msra.mxu0 0.0
    %1264 = vmatprep.subr.mxu0 0.0
    %1265 = vmatpush1.msra.mxu0 0.0
    %1266 = vmatprep.subr.mxu0 0.0
    %1267 = vmatpush1.msra.mxu0 0.0
    %1268 = vmatprep.subr.mxu0 0.0
    %1269 = vmatpush1.msra.mxu0 0.0
    %1270 = vmatprep.subr.mxu0 0.0
    %1271 = vmatpush1.msra.mxu0 0.0
    %1272 = vmatprep.subr.mxu0 0.0
    %1273 = vmatpush1.msra.mxu0 0.0
    %1274 = vmatprep.subr.mxu0 0.0
    %1275 = vmatpush1.msra.mxu0 0.0
    %1276 = vmatprep.subr.mxu0 0.0
    %1277 = vmatpush1.msra.mxu0 0.0
    %1278 = vmatprep.subr.mxu0 0.0
    %1279 = vmatpush1.msra.mxu0 0.0
    %1280 = vmatprep.subr.mxu0 0.0
    %1281 = vmatpush1.msra.mxu0 0.0
    %1282 = vmatprep.subr.mxu0 0.0
    %1283 = vmatpush1.msra.mxu0 0.0
    %1284 = vmatprep.subr.mxu0 0.0
    %1285 = vmatpush1.msra.mxu0 0.0
    %1286 = vmatprep.subr.mxu0 0.0
    %1287 = vmatpush1.msra.mxu0 0.0
    %1288 = vmatprep.subr.mxu0 0.0
    %1289 = vmatpush1.msra.mxu0 0.0
    %1290 = vmatprep.subr.mxu0 0.0
    %1291 = vmatpush1.msra.mxu0 0.0
    %1292 = vmatprep.subr.mxu0 0.0
    %1293 = vmatpush1.msra.mxu0 0.0
    %1294 = vmatprep.subr.mxu0 0.0
    %1295 = vmatpush1.msra.mxu0 0.0
    %1296 = vmatprep.subr.mxu0 0.0
    %1297 = vmatpush1.msra.mxu0 0.0
    %1298 = vmatprep.subr.mxu0 0.0
    %1299 = vmatpush1.msra.mxu0 0.0
    %1300 = vmatprep.subr.mxu0 0.0
    %1301 = vmatpush1.msra.mxu0 0.0
    %1302 = vmatprep.subr.mxu0 0.0
    %1303 = vmatpush1.msra.mxu0 0.0
    %1304 = vmatprep.subr.mxu0 0.0
    %1305 = vmatpush1.msra.mxu0 0.0
    %1306 = vmatprep.subr.mxu0 0.0
    %1307 = vmatpush1.msra.mxu0 0.0
    %1308 = vmatprep.mubr.f32.mxu0 0.0
    %1309 = vmatmul.mubr.f32.gmra.mrb[0].mxu0 %v1242
    %v1310 = vpop.f32.mrb[0].mxu0
    %v1311 = vadd.f32 0.0, %v1310
    %v1312 = vpop.f32.mrb[0].mxu0
    %1313 = vdwg.mxu0
    %v1315 = vrot.slane %v1311, 4
    %v1316 = vrot.slane %v1311, 5
    %v1319 = vadd.f32 %v638, %v1315
    %v1320 = vadd.f32 %v643, %v1316
    %v1321 = vmul.f32 %v1319, 0.5
    %v1322 = vmul.f32 %v1320, 0.5
    %v1323 = vtanh.pop %v1321
    %v1324 = vtanh.pop %v1322
    %v1325 = vadd.f32 %v1323, 1.0
    %v1326 = vadd.f32 %v1324, 1.0
    %v1327 = vmul.f32 %v1325, 0.5
    %v1328 = vmul.f32 %v1326, 0.5
    %v1329 = vtanh.pop %v1319
    %v1330 = vtanh.pop %v1320
    %v1333 = vrot.slane %v1206, 7
    %v1334 = vrot.slane %v1207, 7
    %v1337 = vmul.f32 %v1327, %v1333
    %v1338 = vmul.f32 %v1328, %v1334
    %1341 = vrot.lane.b32.xlu0 %v1329, 64
    %v1342 = vpop.permute.xlu0 %1341
    %1343 = vrot.lane.b32.xlu0 %v1330, 64
    %v1344 = vpop.permute.xlu0 %1343
    %v1347 = vmul.f32 %v1327, %v1342
    %v1348 = vmul.f32 %v1328, %v1344
    %1351 = vrot.lane.b32.xlu0 %v1347, 32
    %v1352 = vpop.permute.xlu0 %1351
    %1353 = vrot.lane.b32.xlu0 %v1348, 32
    %v1354 = vpop.permute.xlu0 %1353
    %v1357 = vadd.f32 %v1337, %v1352
    %v1358 = vadd.f32 %v1338, %v1354
    %v1359 = vtanh.pop %v1357
    %v1360 = vtanh.pop %v1358
    %1363 = vrot.lane.b32.xlu0 %v1359, 64
    %v1364 = vpop.permute.xlu0 %1363
    %1365 = vrot.lane.b32.xlu0 %v1360, 64
    %v1366 = vpop.permute.xlu0 %1365
    %v1369 = vmul.f32 %v1327, %v1364
    %v1370 = vmul.f32 %v1328, %v1366
    %vm1371 = vcmp.eq.s32.totalorder %v548, 4
    %v1372 = vsel %vm1371, 1, 0
    %v1373 = vcvt.s32.f32 %v1372
    %v1374 = vlaneseq
    %v1375 = vshrl.u32 %v1374, 7
    %v1376 = vsub.s32 4, %v1375
    %v1377 = vrot.slane %v1369, %v1376
    %v1378 = vlaneseq
    %v1379 = vshrl.u32 %v1378, 7
    %v1380 = vsub.s32 4, %v1379
    %v1381 = vrot.slane %v1370, %v1380
    %v1382 = vmul.f32 %v1373, %v1377
    %v1383 = vmul.f32 %v1373, %v1381
    %v1384 = vadd.f32 %v1233, %v1382
    %v1385 = vadd.f32 %v1234, %v1383
    %v1388 = vrot.slane %v1369, 4
    %v1389 = vrot.slane %v1370, 3
    %v1390 = vsel %vm787, %v1389, %v1388
    %1391 = vrot.lane.b32.xlu0 %v1390, 32
    %v1392 = vpop.permute.xlu0 %1391
    %v1393 = vsel %vm564, %v1392, 0
    %1395 = vmatprep.subr.mxu0 0.0
    %1396 = vmatpush1.msra.mxu0 %v549
    %1397 = vmatprep.subr.mxu0 0.0
    %1398 = vmatpush1.msra.mxu0 %v550
    %1399 = vmatprep.subr.mxu0 0.0
    %1400 = vmatpush1.msra.mxu0 %v551
    %1401 = vmatprep.subr.mxu0 0.0
    %1402 = vmatpush1.msra.mxu0 %v552
    %1403 = vmatprep.subr.mxu0 0.0
    %1404 = vmatpush1.msra.mxu0 0.0
    %1405 = vmatprep.subr.mxu0 0.0
    %1406 = vmatpush1.msra.mxu0 0.0
    %1407 = vmatprep.subr.mxu0 0.0
    %1408 = vmatpush1.msra.mxu0 0.0
    %1409 = vmatprep.subr.mxu0 0.0
    %1410 = vmatpush1.msra.mxu0 0.0
    %1411 = vmatprep.subr.mxu0 0.0
    %1412 = vmatpush1.msra.mxu0 0.0
    %1413 = vmatprep.subr.mxu0 0.0
    %1414 = vmatpush1.msra.mxu0 0.0
    %1415 = vmatprep.subr.mxu0 0.0
    %1416 = vmatpush1.msra.mxu0 0.0
    %1417 = vmatprep.subr.mxu0 0.0
    %1418 = vmatpush1.msra.mxu0 0.0
    %1419 = vmatprep.subr.mxu0 0.0
    %1420 = vmatpush1.msra.mxu0 0.0
    %1421 = vmatprep.subr.mxu0 0.0
    %1422 = vmatpush1.msra.mxu0 0.0
    %1423 = vmatprep.subr.mxu0 0.0
    %1424 = vmatpush1.msra.mxu0 0.0
    %1425 = vmatprep.subr.mxu0 0.0
    %1426 = vmatpush1.msra.mxu0 0.0
    %1427 = vmatprep.subr.mxu0 0.0
    %1428 = vmatpush1.msra.mxu0 0.0
    %1429 = vmatprep.subr.mxu0 0.0
    %1430 = vmatpush1.msra.mxu0 0.0
    %1431 = vmatprep.subr.mxu0 0.0
    %1432 = vmatpush1.msra.mxu0 0.0
    %1433 = vmatprep.subr.mxu0 0.0
    %1434 = vmatpush1.msra.mxu0 0.0
    %1435 = vmatprep.subr.mxu0 0.0
    %1436 = vmatpush1.msra.mxu0 0.0
    %1437 = vmatprep.subr.mxu0 0.0
    %1438 = vmatpush1.msra.mxu0 0.0
    %1439 = vmatprep.subr.mxu0 0.0
    %1440 = vmatpush1.msra.mxu0 0.0
    %1441 = vmatprep.subr.mxu0 0.0
    %1442 = vmatpush1.msra.mxu0 0.0
    %1443 = vmatprep.subr.mxu0 0.0
    %1444 = vmatpush1.msra.mxu0 0.0
    %1445 = vmatprep.subr.mxu0 0.0
    %1446 = vmatpush1.msra.mxu0 0.0
    %1447 = vmatprep.subr.mxu0 0.0
    %1448 = vmatpush1.msra.mxu0 0.0
    %1449 = vmatprep.subr.mxu0 0.0
    %1450 = vmatpush1.msra.mxu0 0.0
    %1451 = vmatprep.subr.mxu0 0.0
    %1452 = vmatpush1.msra.mxu0 0.0
    %1453 = vmatprep.subr.mxu0 0.0
    %1454 = vmatpush1.msra.mxu0 0.0
    %1455 = vmatprep.subr.mxu0 0.0
    %1456 = vmatpush1.msra.mxu0 0.0
    %1457 = vmatprep.subr.mxu0 0.0
    %1458 = vmatpush1.msra.mxu0 0.0
    %1459 = vmatprep.mubr.f32.mxu0 0.0
    %1460 = vmatmul.mubr.f32.gmra.mrb[0].mxu0 %v1393
    %v1461 = vpop.f32.mrb[0].mxu0
    %v1462 = vadd.f32 0.0, %v1461
    %v1463 = vpop.f32.mrb[0].mxu0
    %1464 = vdwg.mxu0
    %v1466 = vrot.slane %v1462, 3
    %v1467 = vrot.slane %v1462, 4
    %v1470 = vadd.f32 %v638, %v1466
    %v1471 = vadd.f32 %v643, %v1467
    %v1472 = vmul.f32 %v1470, 0.5
    %v1473 = vmul.f32 %v1471, 0.5
    %v1474 = vtanh.pop %v1472
    %v1475 = vtanh.pop %v1473
    %v1476 = vadd.f32 %v1474, 1.0
    %v1477 = vadd.f32 %v1475, 1.0
    %v1478 = vmul.f32 %v1476, 0.5
    %v1479 = vmul.f32 %v1477, 0.5
    %v1480 = vtanh.pop %v1470
    %v1481 = vtanh.pop %v1471
    %v1484 = vrot.slane %v1357, 7
    %v1485 = vrot.slane %v1358, 7
    %v1488 = vmul.f32 %v1478, %v1484
    %v1489 = vmul.f32 %v1479, %v1485
    %1492 = vrot.lane.b32.xlu0 %v1480, 64
    %v1493 = vpop.permute.xlu0 %1492
    %1494 = vrot.lane.b32.xlu0 %v1481, 64
    %v1495 = vpop.permute.xlu0 %1494
    %v1498 = vmul.f32 %v1478, %v1493
    %v1499 = vmul.f32 %v1479, %v1495
    %1502 = vrot.lane.b32.xlu0 %v1498, 32
    %v1503 = vpop.permute.xlu0 %1502
    %1504 = vrot.lane.b32.xlu0 %v1499, 32
    %v1505 = vpop.permute.xlu0 %1504
    %v1508 = vadd.f32 %v1488, %v1503
    %v1509 = vadd.f32 %v1489, %v1505
    %v1510 = vtanh.pop %v1508
    %v1511 = vtanh.pop %v1509
    %1514 = vrot.lane.b32.xlu0 %v1510, 64
    %v1515 = vpop.permute.xlu0 %1514
    %1516 = vrot.lane.b32.xlu0 %v1511, 64
    %v1517 = vpop.permute.xlu0 %1516
    %v1520 = vmul.f32 %v1478, %v1515
    %v1521 = vmul.f32 %v1479, %v1517
    %vm1522 = vcmp.eq.s32.totalorder %v548, 5
    %v1523 = vsel %vm1522, 1, 0
    %v1524 = vcvt.s32.f32 %v1523
    %v1525 = vlaneseq
    %v1526 = vshrl.u32 %v1525, 7
    %v1527 = vsub.s32 5, %v1526
    %v1528 = vrot.slane %v1520, %v1527
    %v1529 = vlaneseq
    %v1530 = vshrl.u32 %v1529, 7
    %v1531 = vsub.s32 5, %v1530
    %v1532 = vrot.slane %v1521, %v1531
    %v1533 = vmul.f32 %v1524, %v1528
    %v1534 = vmul.f32 %v1524, %v1532
    %v1535 = vadd.f32 %v1384, %v1533
    %v1536 = vadd.f32 %v1385, %v1534
    %v1539 = vrot.slane %v1520, 5
    %v1540 = vrot.slane %v1521, 4
    %v1541 = vsel %vm787, %v1540, %v1539
    %1542 = vrot.lane.b32.xlu0 %v1541, 32
    %v1543 = vpop.permute.xlu0 %1542
    %v1544 = vsel %vm564, %v1543, 0
    %1546 = vmatprep.subr.mxu0 0.0
    %1547 = vmatpush1.msra.mxu0 %v549
    %1548 = vmatprep.subr.mxu0 0.0
    %1549 = vmatpush1.msra.mxu0 %v550
    %1550 = vmatprep.subr.mxu0 0.0
    %1551 = vmatpush1.msra.mxu0 %v551
    %1552 = vmatprep.subr.mxu0 0.0
    %1553 = vmatpush1.msra.mxu0 %v552
    %1554 = vmatprep.subr.mxu0 0.0
    %1555 = vmatpush1.msra.mxu0 0.0
    %1556 = vmatprep.subr.mxu0 0.0
    %1557 = vmatpush1.msra.mxu0 0.0
    %1558 = vmatprep.subr.mxu0 0.0
    %1559 = vmatpush1.msra.mxu0 0.0
    %1560 = vmatprep.subr.mxu0 0.0
    %1561 = vmatpush1.msra.mxu0 0.0
    %1562 = vmatprep.subr.mxu0 0.0
    %1563 = vmatpush1.msra.mxu0 0.0
    %1564 = vmatprep.subr.mxu0 0.0
    %1565 = vmatpush1.msra.mxu0 0.0
    %1566 = vmatprep.subr.mxu0 0.0
    %1567 = vmatpush1.msra.mxu0 0.0
    %1568 = vmatprep.subr.mxu0 0.0
    %1569 = vmatpush1.msra.mxu0 0.0
    %1570 = vmatprep.subr.mxu0 0.0
    %1571 = vmatpush1.msra.mxu0 0.0
    %1572 = vmatprep.subr.mxu0 0.0
    %1573 = vmatpush1.msra.mxu0 0.0
    %1574 = vmatprep.subr.mxu0 0.0
    %1575 = vmatpush1.msra.mxu0 0.0
    %1576 = vmatprep.subr.mxu0 0.0
    %1577 = vmatpush1.msra.mxu0 0.0
    %1578 = vmatprep.subr.mxu0 0.0
    %1579 = vmatpush1.msra.mxu0 0.0
    %1580 = vmatprep.subr.mxu0 0.0
    %1581 = vmatpush1.msra.mxu0 0.0
    %1582 = vmatprep.subr.mxu0 0.0
    %1583 = vmatpush1.msra.mxu0 0.0
    %1584 = vmatprep.subr.mxu0 0.0
    %1585 = vmatpush1.msra.mxu0 0.0
    %1586 = vmatprep.subr.mxu0 0.0
    %1587 = vmatpush1.msra.mxu0 0.0
    %1588 = vmatprep.subr.mxu0 0.0
    %1589 = vmatpush1.msra.mxu0 0.0
    %1590 = vmatprep.subr.mxu0 0.0
    %1591 = vmatpush1.msra.mxu0 0.0
    %1592 = vmatprep.subr.mxu0 0.0
    %1593 = vmatpush1.msra.mxu0 0.0
    %1594 = vmatprep.subr.mxu0 0.0
    %1595 = vmatpush1.msra.mxu0 0.0
    %1596 = vmatprep.subr.mxu0 0.0
    %1597 = vmatpush1.msra.mxu0 0.0
    %1598 = vmatprep.subr.mxu0 0.0
    %1599 = vmatpush1.msra.mxu0 0.0
    %1600 = vmatprep.subr.mxu0 0.0
    %1601 = vmatpush1.msra.mxu0 0.0
    %1602 = vmatprep.subr.mxu0 0.0
    %1603 = vmatpush1.msra.mxu0 0.0
    %1604 = vmatprep.subr.mxu0 0.0
    %1605 = vmatpush1.msra.mxu0 0.0
    %1606 = vmatprep.subr.mxu0 0.0
    %1607 = vmatpush1.msra.mxu0 0.0
    %1608 = vmatprep.subr.mxu0 0.0
    %1609 = vmatpush1.msra.mxu0 0.0
    %1610 = vmatprep.mubr.f32.mxu0 0.0
    %1611 = vmatmul.mubr.f32.gmra.mrb[0].mxu0 %v1544
    %v1612 = vpop.f32.mrb[0].mxu0
    %v1613 = vadd.f32 0.0, %v1612
    %v1614 = vpop.f32.mrb[0].mxu0
    %1615 = vdwg.mxu0
    %v1617 = vrot.slane %v1613, 2
    %v1618 = vrot.slane %v1613, 3
    %v1621 = vadd.f32 %v638, %v1617
    %v1622 = vadd.f32 %v643, %v1618
    %v1623 = vmul.f32 %v1621, 0.5
    %v1624 = vmul.f32 %v1622, 0.5
    %v1625 = vtanh.pop %v1623
    %v1626 = vtanh.pop %v1624
    %v1627 = vadd.f32 %v1625, 1.0
    %v1628 = vadd.f32 %v1626, 1.0
    %v1629 = vmul.f32 %v1627, 0.5
    %v1630 = vmul.f32 %v1628, 0.5
    %v1631 = vtanh.pop %v1621
    %v1632 = vtanh.pop %v1622
    %v1635 = vrot.slane %v1508, 7
    %v1636 = vrot.slane %v1509, 7
    %v1639 = vmul.f32 %v1629, %v1635
    %v1640 = vmul.f32 %v1630, %v1636
    %1643 = vrot.lane.b32.xlu0 %v1631, 64
    %v1644 = vpop.permute.xlu0 %1643
    %1645 = vrot.lane.b32.xlu0 %v1632, 64
    %v1646 = vpop.permute.xlu0 %1645
    %v1649 = vmul.f32 %v1629, %v1644
    %v1650 = vmul.f32 %v1630, %v1646
    %1653 = vrot.lane.b32.xlu0 %v1649, 32
    %v1654 = vpop.permute.xlu0 %1653
    %1655 = vrot.lane.b32.xlu0 %v1650, 32
    %v1656 = vpop.permute.xlu0 %1655
    %v1659 = vadd.f32 %v1639, %v1654
    %v1660 = vadd.f32 %v1640, %v1656
    %v1661 = vtanh.pop %v1659
    %v1662 = vtanh.pop %v1660
    %1665 = vrot.lane.b32.xlu0 %v1661, 64
    %v1666 = vpop.permute.xlu0 %1665
    %1667 = vrot.lane.b32.xlu0 %v1662, 64
    %v1668 = vpop.permute.xlu0 %1667
    %v1671 = vmul.f32 %v1629, %v1666
    %v1672 = vmul.f32 %v1630, %v1668
    %vm1673 = vcmp.eq.s32.totalorder %v548, 6
    %v1674 = vsel %vm1673, 1, 0
    %v1675 = vcvt.s32.f32 %v1674
    %v1676 = vlaneseq
    %v1677 = vshrl.u32 %v1676, 7
    %v1678 = vsub.s32 6, %v1677
    %v1679 = vrot.slane %v1671, %v1678
    %v1680 = vlaneseq
    %v1681 = vshrl.u32 %v1680, 7
    %v1682 = vsub.s32 6, %v1681
    %v1683 = vrot.slane %v1672, %v1682
    %v1684 = vmul.f32 %v1675, %v1679
    %v1685 = vmul.f32 %v1675, %v1683
    %v1686 = vadd.f32 %v1535, %v1684
    %v1687 = vadd.f32 %v1536, %v1685
    %v1690 = vrot.slane %v1671, 6
    %v1691 = vrot.slane %v1672, 5
    %v1692 = vsel %vm787, %v1691, %v1690
    %1693 = vrot.lane.b32.xlu0 %v1692, 32
    %v1694 = vpop.permute.xlu0 %1693
    %v1695 = vsel %vm564, %v1694, 0
    %1697 = vmatprep.subr.mxu0 0.0
    %1698 = vmatpush1.msra.mxu0 %v549
    %1699 = vmatprep.subr.mxu0 0.0
    %1700 = vmatpush1.msra.mxu0 %v550
    %1701 = vmatprep.subr.mxu0 0.0
    %1702 = vmatpush1.msra.mxu0 %v551
    %1703 = vmatprep.subr.mxu0 0.0
    %1704 = vmatpush1.msra.mxu0 %v552
    %1705 = vmatprep.subr.mxu0 0.0
    %1706 = vmatpush1.msra.mxu0 0.0
    %1707 = vmatprep.subr.mxu0 0.0
    %1708 = vmatpush1.msra.mxu0 0.0
    %1709 = vmatprep.subr.mxu0 0.0
    %1710 = vmatpush1.msra.mxu0 0.0
    %1711 = vmatprep.subr.mxu0 0.0
    %1712 = vmatpush1.msra.mxu0 0.0
    %1713 = vmatprep.subr.mxu0 0.0
    %1714 = vmatpush1.msra.mxu0 0.0
    %1715 = vmatprep.subr.mxu0 0.0
    %1716 = vmatpush1.msra.mxu0 0.0
    %1717 = vmatprep.subr.mxu0 0.0
    %1718 = vmatpush1.msra.mxu0 0.0
    %1719 = vmatprep.subr.mxu0 0.0
    %1720 = vmatpush1.msra.mxu0 0.0
    %1721 = vmatprep.subr.mxu0 0.0
    %1722 = vmatpush1.msra.mxu0 0.0
    %1723 = vmatprep.subr.mxu0 0.0
    %1724 = vmatpush1.msra.mxu0 0.0
    %1725 = vmatprep.subr.mxu0 0.0
    %1726 = vmatpush1.msra.mxu0 0.0
    %1727 = vmatprep.subr.mxu0 0.0
    %1728 = vmatpush1.msra.mxu0 0.0
    %1729 = vmatprep.subr.mxu0 0.0
    %1730 = vmatpush1.msra.mxu0 0.0
    %1731 = vmatprep.subr.mxu0 0.0
    %1732 = vmatpush1.msra.mxu0 0.0
    %1733 = vmatprep.subr.mxu0 0.0
    %1734 = vmatpush1.msra.mxu0 0.0
    %1735 = vmatprep.subr.mxu0 0.0
    %1736 = vmatpush1.msra.mxu0 0.0
    %1737 = vmatprep.subr.mxu0 0.0
    %1738 = vmatpush1.msra.mxu0 0.0
    %1739 = vmatprep.subr.mxu0 0.0
    %1740 = vmatpush1.msra.mxu0 0.0
    %1741 = vmatprep.subr.mxu0 0.0
    %1742 = vmatpush1.msra.mxu0 0.0
    %1743 = vmatprep.subr.mxu0 0.0
    %1744 = vmatpush1.msra.mxu0 0.0
    %1745 = vmatprep.subr.mxu0 0.0
    %1746 = vmatpush1.msra.mxu0 0.0
    %1747 = vmatprep.subr.mxu0 0.0
    %1748 = vmatpush1.msra.mxu0 0.0
    %1749 = vmatprep.subr.mxu0 0.0
    %1750 = vmatpush1.msra.mxu0 0.0
    %1751 = vmatprep.subr.mxu0 0.0
    %1752 = vmatpush1.msra.mxu0 0.0
    %1753 = vmatprep.subr.mxu0 0.0
    %1754 = vmatpush1.msra.mxu0 0.0
    %1755 = vmatprep.subr.mxu0 0.0
    %1756 = vmatpush1.msra.mxu0 0.0
    %1757 = vmatprep.subr.mxu0 0.0
    %1758 = vmatpush1.msra.mxu0 0.0
    %1759 = vmatprep.subr.mxu0 0.0
    %1760 = vmatpush1.msra.mxu0 0.0
    %1761 = vmatprep.mubr.f32.mxu0 0.0
    %1762 = vmatmul.mubr.f32.gmra.mrb[0].mxu0 %v1695
    %v1763 = vpop.f32.mrb[0].mxu0
    %v1764 = vadd.f32 0.0, %v1763
    %v1765 = vpop.f32.mrb[0].mxu0
    %1766 = vdwg.mxu0
    %v1768 = vrot.slane %v1764, 1
    %v1769 = vrot.slane %v1764, 2
    %v1772 = vadd.f32 %v638, %v1768
    %v1773 = vadd.f32 %v643, %v1769
    %v1774 = vmul.f32 %v1772, 0.5
    %v1775 = vmul.f32 %v1773, 0.5
    %v1776 = vtanh.pop %v1774
    %v1777 = vtanh.pop %v1775
    %v1778 = vadd.f32 %v1776, 1.0
    %v1779 = vadd.f32 %v1777, 1.0
    %v1780 = vmul.f32 %v1778, 0.5
    %v1781 = vmul.f32 %v1779, 0.5
    %v1782 = vtanh.pop %v1772
    %v1783 = vtanh.pop %v1773
    %v1786 = vrot.slane %v1659, 7
    %v1787 = vrot.slane %v1660, 7
    %v1790 = vmul.f32 %v1780, %v1786
    %v1791 = vmul.f32 %v1781, %v1787
    %1794 = vrot.lane.b32.xlu0 %v1782, 64
    %v1795 = vpop.permute.xlu0 %1794
    %1796 = vrot.lane.b32.xlu0 %v1783, 64
    %v1797 = vpop.permute.xlu0 %1796
    %v1800 = vmul.f32 %v1780, %v1795
    %v1801 = vmul.f32 %v1781, %v1797
    %1804 = vrot.lane.b32.xlu0 %v1800, 32
    %v1805 = vpop.permute.xlu0 %1804
    %1806 = vrot.lane.b32.xlu0 %v1801, 32
    %v1807 = vpop.permute.xlu0 %1806
    %v1810 = vadd.f32 %v1790, %v1805
    %v1811 = vadd.f32 %v1791, %v1807
    %v1812 = vtanh.pop %v1810
    %v1813 = vtanh.pop %v1811
    %1816 = vrot.lane.b32.xlu0 %v1812, 64
    %v1817 = vpop.permute.xlu0 %1816
    %1818 = vrot.lane.b32.xlu0 %v1813, 64
    %v1819 = vpop.permute.xlu0 %1818
    %v1822 = vmul.f32 %v1780, %v1817
    %v1823 = vmul.f32 %v1781, %v1819
    %vm1824 = vcmp.eq.s32.totalorder %v548, 7
    %v1825 = vsel %vm1824, 1, 0
    %v1826 = vcvt.s32.f32 %v1825
    %v1827 = vlaneseq
    %v1828 = vshrl.u32 %v1827, 7
    %v1829 = vsub.s32 7, %v1828
    %v1830 = vrot.slane %v1822, %v1829
    %v1831 = vlaneseq
    %v1832 = vshrl.u32 %v1831, 7
    %v1833 = vsub.s32 7, %v1832
    %v1834 = vrot.slane %v1823, %v1833
    %v1835 = vmul.f32 %v1826, %v1830
    %v1836 = vmul.f32 %v1826, %v1834
    %v1837 = vadd.f32 %v1686, %v1835
    %v1838 = vadd.f32 %v1687, %v1836
    %s1839 = scalar_lea.vmem [#allocation18], 32
    %v1840 = vld [vmem:[%s1839] sm:$0xff]
    %v1841 = vld [vmem:[%s1839 + $0x8] sm:$0xff]
    %v1842 = vld [vmem:[%s1839 + $0x10] sm:$0xff]
    %v1843 = vld [vmem:[%s1839 + $0x18] sm:$0xff]
    %s1844 = scalar_lea.vmem %s11, 32
    %v1845 = vld [vmem:[%s1844] sm:$0xff]
    %v1846 = vld [vmem:[%s1844 + $0x8] sm:$0xff]
    %v1847 = vld [vmem:[%s1844 + $0x10] sm:$0xff]
    %v1848 = vld [vmem:[%s1844 + $0x18] sm:$0xff]
    %s1849 = scalar_lea.vmem [#allocation20], 1
    %v1850 = vld [vmem:[%s1849] sm:$0x1]
    %v1852 = vlaneseq
    %v1853 = vshrl.u32 %v1852, 7
    %v1854 = vsub.s32 0, %v1853
    %v1855 = vrot.slane %v1850, %v1854
    %1859 = vrot.lane.b32.xlu0 %v1837, 32
    %v1860 = vpop.permute.xlu0 %1859
    %1861 = vrot.lane.b32.xlu0 %v1838, 32
    %v1862 = vpop.permute.xlu0 %1861
    %v1863 = vsel %vm564, %v1860, 0
    %v1865 = vsel %vm564, %v1862, 0
    %1867 = vmatprep.subr.mxu0 0.0
    %1868 = vmatpush1.msra.mxu0 %v1845
    %1869 = vmatprep.subr.mxu0 0.0
    %1870 = vmatpush1.msra.mxu0 %v1846
    %1871 = vmatprep.subr.mxu0 0.0
    %1872 = vmatpush1.msra.mxu0 %v1847
    %1873 = vmatprep.subr.mxu0 0.0
    %1874 = vmatpush1.msra.mxu0 %v1848
    %1875 = vmatprep.subr.mxu0 0.0
    %1876 = vmatpush1.msra.mxu0 0.0
    %1877 = vmatprep.subr.mxu0 0.0
    %1878 = vmatpush1.msra.mxu0 0.0
    %1879 = vmatprep.subr.mxu0 0.0
    %1880 = vmatpush1.msra.mxu0 0.0
    %1881 = vmatprep.subr.mxu0 0.0
    %1882 = vmatpush1.msra.mxu0 0.0
    %1883 = vmatprep.subr.mxu0 0.0
    %1884 = vmatpush1.msra.mxu0 0.0
    %1885 = vmatprep.subr.mxu0 0.0
    %1886 = vmatpush1.msra.mxu0 0.0
    %1887 = vmatprep.subr.mxu0 0.0
    %1888 = vmatpush1.msra.mxu0 0.0
    %1889 = vmatprep.subr.mxu0 0.0
    %1890 = vmatpush1.msra.mxu0 0.0
    %1891 = vmatprep.subr.mxu0 0.0
    %1892 = vmatpush1.msra.mxu0 0.0
    %1893 = vmatprep.subr.mxu0 0.0
    %1894 = vmatpush1.msra.mxu0 0.0
    %1895 = vmatprep.subr.mxu0 0.0
    %1896 = vmatpush1.msra.mxu0 0.0
    %1897 = vmatprep.subr.mxu0 0.0
    %1898 = vmatpush1.msra.mxu0 0.0
    %1899 = vmatprep.subr.mxu0 0.0
    %1900 = vmatpush1.msra.mxu0 0.0
    %1901 = vmatprep.subr.mxu0 0.0
    %1902 = vmatpush1.msra.mxu0 0.0
    %1903 = vmatprep.subr.mxu0 0.0
    %1904 = vmatpush1.msra.mxu0 0.0
    %1905 = vmatprep.subr.mxu0 0.0
    %1906 = vmatpush1.msra.mxu0 0.0
    %1907 = vmatprep.subr.mxu0 0.0
    %1908 = vmatpush1.msra.mxu0 0.0
    %1909 = vmatprep.subr.mxu0 0.0
    %1910 = vmatpush1.msra.mxu0 0.0
    %1911 = vmatprep.subr.mxu0 0.0
    %1912 = vmatpush1.msra.mxu0 0.0
    %1913 = vmatprep.subr.mxu0 0.0
    %1914 = vmatpush1.msra.mxu0 0.0
    %1915 = vmatprep.subr.mxu0 0.0
    %1916 = vmatpush1.msra.mxu0 0.0
    %1917 = vmatprep.subr.mxu0 0.0
    %1918 = vmatpush1.msra.mxu0 0.0
    %1919 = vmatprep.subr.mxu0 0.0
    %1920 = vmatpush1.msra.mxu0 0.0
    %1921 = vmatprep.subr.mxu0 0.0
    %1922 = vmatpush1.msra.mxu0 0.0
    %1923 = vmatprep.subr.mxu0 0.0
    %1924 = vmatpush1.msra.mxu0 0.0
    %1925 = vmatprep.subr.mxu0 0.0
    %1926 = vmatpush1.msra.mxu0 0.0
    %1927 = vmatprep.subr.mxu0 0.0
    %1928 = vmatpush1.msra.mxu0 0.0
    %1929 = vmatprep.subr.mxu0 0.0
    %1930 = vmatpush1.msra.mxu0 0.0
    %1931 = vmatprep.mubr.f32.mxu0 0.0
    %1932 = vmatmul.mubr.f32.gmra.mrb[0].mxu0 %v1863
    %v1933 = vpop.f32.mrb[0].mxu0
    %v1934 = vadd.f32 %v1855, %v1933
    %v1935 = vpop.f32.mrb[0].mxu0
    %1936 = vmatprep.mubr.f32.mxu0 0.0
    %1937 = vmatmul.mubr.f32.gmra.mrb[0].mxu0 %v1865
    %v1938 = vpop.f32.mrb[0].mxu0
    %v1939 = vadd.f32 %v1855, %v1938
    %v1940 = vpop.f32.mrb[0].mxu0
    %1941 = vdwg.mxu0
    %1942 = vmatprep.subr.mxu0 0.0
    %1943 = vmatpush1.msra.mxu0 %v1840
    %1944 = vmatprep.subr.mxu0 0.0
    %1945 = vmatpush1.msra.mxu0 %v1841
    %1946 = vmatprep.subr.mxu0 0.0
    %1947 = vmatpush1.msra.mxu0 %v1842
    %1948 = vmatprep.subr.mxu0 0.0
    %1949 = vmatpush1.msra.mxu0 %v1843
    %1950 = vmatprep.subr.mxu0 0.0
    %1951 = vmatpush1.msra.mxu0 0.0
    %1952 = vmatprep.subr.mxu0 0.0
    %1953 = vmatpush1.msra.mxu0 0.0
    %1954 = vmatprep.subr.mxu0 0.0
    %1955 = vmatpush1.msra.mxu0 0.0
    %1956 = vmatprep.subr.mxu0 0.0
    %1957 = vmatpush1.msra.mxu0 0.0
    %1958 = vmatprep.subr.mxu0 0.0
    %1959 = vmatpush1.msra.mxu0 0.0
    %1960 = vmatprep.subr.mxu0 0.0
    %1961 = vmatpush1.msra.mxu0 0.0
    %1962 = vmatprep.subr.mxu0 0.0
    %1963 = vmatpush1.msra.mxu0 0.0
    %1964 = vmatprep.subr.mxu0 0.0
    %1965 = vmatpush1.msra.mxu0 0.0
    %1966 = vmatprep.subr.mxu0 0.0
    %1967 = vmatpush1.msra.mxu0 0.0
    %1968 = vmatprep.subr.mxu0 0.0
    %1969 = vmatpush1.msra.mxu0 0.0
    %1970 = vmatprep.subr.mxu0 0.0
    %1971 = vmatpush1.msra.mxu0 0.0
    %1972 = vmatprep.subr.mxu0 0.0
    %1973 = vmatpush1.msra.mxu0 0.0
    %1974 = vmatprep.subr.mxu0 0.0
    %1975 = vmatpush1.msra.mxu0 0.0
    %1976 = vmatprep.subr.mxu0 0.0
    %1977 = vmatpush1.msra.mxu0 0.0
    %1978 = vmatprep.subr.mxu0 0.0
    %1979 = vmatpush1.msra.mxu0 0.0
    %1980 = vmatprep.subr.mxu0 0.0
    %1981 = vmatpush1.msra.mxu0 0.0
    %1982 = vmatprep.subr.mxu0 0.0
    %1983 = vmatpush1.msra.mxu0 0.0
    %1984 = vmatprep.subr.mxu0 0.0
    %1985 = vmatpush1.msra.mxu0 0.0
    %1986 = vmatprep.subr.mxu0 0.0
    %1987 = vmatpush1.msra.mxu0 0.0
    %1988 = vmatprep.subr.mxu0 0.0
    %1989 = vmatpush1.msra.mxu0 0.0
    %1990 = vmatprep.subr.mxu0 0.0
    %1991 = vmatpush1.msra.mxu0 0.0
    %1992 = vmatprep.subr.mxu0 0.0
    %1993 = vmatpush1.msra.mxu0 0.0
    %1994 = vmatprep.subr.mxu0 0.0
    %1995 = vmatpush1.msra.mxu0 0.0
    %1996 = vmatprep.subr.mxu0 0.0
    %1997 = vmatpush1.msra.mxu0 0.0
    %1998 = vmatprep.subr.mxu0 0.0
    %1999 = vmatpush1.msra.mxu0 0.0
    %2000 = vmatprep.subr.mxu0 0.0
    %2001 = vmatpush1.msra.mxu0 0.0
    %2002 = vmatprep.subr.mxu0 0.0
    %2003 = vmatpush1.msra.mxu0 0.0
    %2004 = vmatprep.subr.mxu0 0.0
    %2005 = vmatpush1.msra.mxu0 0.0
    %2006 = vmatprep.mubr.f32.mxu0 0.0
    %2007 = vmatmul.mubr.f32.gmra.mrb[0].mxu0 %v647
    %v2008 = vpop.f32.mrb[0].mxu0
    %v2009 = vadd.f32 0.0, %v2008
    %v2010 = vpop.f32.mrb[0].mxu0
    %2011 = vdwg.mxu0
    %v2013 = vrot.slane %v2009, 1
    %v2016 = vadd.f32 %v1934, %v2009
    %v2017 = vadd.f32 %v1939, %v2013
    %v2018 = vmul.f32 %v2016, 0.5
    %v2019 = vmul.f32 %v2017, 0.5
    %v2020 = vtanh.pop %v2018
    %v2021 = vtanh.pop %v2019
    %v2022 = vadd.f32 %v2020, 1.0
    %v2023 = vadd.f32 %v2021, 1.0
    %v2024 = vmul.f32 %v2022, 0.5
    %v2025 = vmul.f32 %v2023, 0.5
    %v2026 = vtanh.pop %v2016
    %v2027 = vtanh.pop %v2017
    %v2028 = vmul.f32 %v2024, 0.0
    %v2029 = vmul.f32 %v2025, 0.0
    %2032 = vrot.lane.b32.xlu0 %v2026, 64
    %v2033 = vpop.permute.xlu0 %2032
    %2034 = vrot.lane.b32.xlu0 %v2027, 64
    %v2035 = vpop.permute.xlu0 %2034
    %v2038 = vmul.f32 %v2024, %v2033
    %v2039 = vmul.f32 %v2025, %v2035
    %2042 = vrot.lane.b32.xlu0 %v2038, 32
    %v2043 = vpop.permute.xlu0 %2042
    %2044 = vrot.lane.b32.xlu0 %v2039, 32
    %v2045 = vpop.permute.xlu0 %2044
    %v2048 = vadd.f32 %v2028, %v2043
    %v2049 = vadd.f32 %v2029, %v2045
    %v2050 = vtanh.pop %v2048
    %v2051 = vtanh.pop %v2049
    %2054 = vrot.lane.b32.xlu0 %v2050, 64
    %v2055 = vpop.permute.xlu0 %2054
    %2056 = vrot.lane.b32.xlu0 %v2051, 64
    %v2057 = vpop.permute.xlu0 %2056
    %v2060 = vmul.f32 %v2024, %v2055
    %v2061 = vmul.f32 %v2025, %v2057
    %v2062 = vlaneseq
    %v2063 = vshrl.u32 %v2062, 7
    %v2064 = vsub.s32 0, %v2063
    %v2065 = vrot.slane %v2060, %v2064
    %v2066 = vlaneseq
    %v2067 = vshrl.u32 %v2066, 7
    %v2068 = vsub.s32 0, %v2067
    %v2069 = vrot.slane %v2061, %v2068
    %v2070 = vmul.f32 %v771, %v2065
    %v2071 = vmul.f32 %v771, %v2069
    %v2072 = vadd.f32 %v2070, 0.0
    %v2073 = vadd.f32 %v2071, 0.0
    %v2076 = vrot.slane %v2061, 7
    %v2077 = vsel %vm787, %v2076, %v2060
    %2078 = vrot.lane.b32.xlu0 %v2077, 32
    %v2079 = vpop.permute.xlu0 %2078
    %v2080 = vsel %vm564, %v2079, 0
    %2082 = vmatprep.subr.mxu0 0.0
    %2083 = vmatpush1.msra.mxu0 %v1840
    %2084 = vmatprep.subr.mxu0 0.0
    %2085 = vmatpush1.msra.mxu0 %v1841
    %2086 = vmatprep.subr.mxu0 0.0
    %2087 = vmatpush1.msra.mxu0 %v1842
    %2088 = vmatprep.subr.mxu0 0.0
    %2089 = vmatpush1.msra.mxu0 %v1843
    %2090 = vmatprep.subr.mxu0 0.0
    %2091 = vmatpush1.msra.mxu0 0.0
    %2092 = vmatprep.subr.mxu0 0.0
    %2093 = vmatpush1.msra.mxu0 0.0
    %2094 = vmatprep.subr.mxu0 0.0
    %2095 = vmatpush1.msra.mxu0 0.0
    %2096 = vmatprep.subr.mxu0 0.0
    %2097 = vmatpush1.msra.mxu0 0.0
    %2098 = vmatprep.subr.mxu0 0.0
    %2099 = vmatpush1.msra.mxu0 0.0
    %2100 = vmatprep.subr.mxu0 0.0
    %2101 = vmatpush1.msra.mxu0 0.0
    %2102 = vmatprep.subr.mxu0 0.0
    %2103 = vmatpush1.msra.mxu0 0.0
    %2104 = vmatprep.subr.mxu0 0.0
    %2105 = vmatpush1.msra.mxu0 0.0
    %2106 = vmatprep.subr.mxu0 0.0
    %2107 = vmatpush1.msra.mxu0 0.0
    %2108 = vmatprep.subr.mxu0 0.0
    %2109 = vmatpush1.msra.mxu0 0.0
    %2110 = vmatprep.subr.mxu0 0.0
    %2111 = vmatpush1.msra.mxu0 0.0
    %2112 = vmatprep.subr.mxu0 0.0
    %2113 = vmatpush1.msra.mxu0 0.0
    %2114 = vmatprep.subr.mxu0 0.0
    %2115 = vmatpush1.msra.mxu0 0.0
    %2116 = vmatprep.subr.mxu0 0.0
    %2117 = vmatpush1.msra.mxu0 0.0
    %2118 = vmatprep.subr.mxu0 0.0
    %2119 = vmatpush1.msra.mxu0 0.0
    %2120 = vmatprep.subr.mxu0 0.0
    %2121 = vmatpush1.msra.mxu0 0.0
    %2122 = vmatprep.subr.mxu0 0.0
    %2123 = vmatpush1.msra.mxu0 0.0
    %2124 = vmatprep.subr.mxu0 0.0
    %2125 = vmatpush1.msra.mxu0 0.0
    %2126 = vmatprep.subr.mxu0 0.0
    %2127 = vmatpush1.msra.mxu0 0.0
    %2128 = vmatprep.subr.mxu0 0.0
    %2129 = vmatpush1.msra.mxu0 0.0
    %2130 = vmatprep.subr.mxu0 0.0
    %2131 = vmatpush1.msra.mxu0 0.0
    %2132 = vmatprep.subr.mxu0 0.0
    %2133 = vmatpush1.msra.mxu0 0.0
    %2134 = vmatprep.subr.mxu0 0.0
    %2135 = vmatpush1.msra.mxu0 0.0
    %2136 = vmatprep.subr.mxu0 0.0
    %2137 = vmatpush1.msra.mxu0 0.0
    %2138 = vmatprep.subr.mxu0 0.0
    %2139 = vmatpush1.msra.mxu0 0.0
    %2140 = vmatprep.subr.mxu0 0.0
    %2141 = vmatpush1.msra.mxu0 0.0
    %2142 = vmatprep.subr.mxu0 0.0
    %2143 = vmatpush1.msra.mxu0 0.0
    %2144 = vmatprep.subr.mxu0 0.0
    %2145 = vmatpush1.msra.mxu0 0.0
    %2146 = vmatprep.mubr.f32.mxu0 0.0
    %2147 = vmatmul.mubr.f32.gmra.mrb[0].mxu0 %v2080
    %v2148 = vpop.f32.mrb[0].mxu0
    %v2149 = vadd.f32 0.0, %v2148
    %v2150 = vpop.f32.mrb[0].mxu0
    %2151 = vdwg.mxu0
    %v2153 = vrot.slane %v2149, 7
    %v2156 = vadd.f32 %v1934, %v2153
    %v2157 = vadd.f32 %v1939, %v2149
    %v2158 = vmul.f32 %v2156, 0.5
    %v2159 = vmul.f32 %v2157, 0.5
    %v2160 = vtanh.pop %v2158
    %v2161 = vtanh.pop %v2159
    %v2162 = vadd.f32 %v2160, 1.0
    %v2163 = vadd.f32 %v2161, 1.0
    %v2164 = vmul.f32 %v2162, 0.5
    %v2165 = vmul.f32 %v2163, 0.5
    %v2166 = vtanh.pop %v2156
    %v2167 = vtanh.pop %v2157
    %v2170 = vrot.slane %v2048, 7
    %v2171 = vrot.slane %v2049, 7
    %v2174 = vmul.f32 %v2164, %v2170
    %v2175 = vmul.f32 %v2165, %v2171
    %2178 = vrot.lane.b32.xlu0 %v2166, 64
    %v2179 = vpop.permute.xlu0 %2178
    %2180 = vrot.lane.b32.xlu0 %v2167, 64
    %v2181 = vpop.permute.xlu0 %2180
    %v2184 = vmul.f32 %v2164, %v2179
    %v2185 = vmul.f32 %v2165, %v2181
    %2188 = vrot.lane.b32.xlu0 %v2184, 32
    %v2189 = vpop.permute.xlu0 %2188
    %2190 = vrot.lane.b32.xlu0 %v2185, 32
    %v2191 = vpop.permute.xlu0 %2190
    %v2194 = vadd.f32 %v2174, %v2189
    %v2195 = vadd.f32 %v2175, %v2191
    %v2196 = vtanh.pop %v2194
    %v2197 = vtanh.pop %v2195
    %2200 = vrot.lane.b32.xlu0 %v2196, 64
    %v2201 = vpop.permute.xlu0 %2200
    %2202 = vrot.lane.b32.xlu0 %v2197, 64
    %v2203 = vpop.permute.xlu0 %2202
    %v2206 = vmul.f32 %v2164, %v2201
    %v2207 = vmul.f32 %v2165, %v2203
    %v2208 = vlaneseq
    %v2209 = vshrl.u32 %v2208, 7
    %v2210 = vsub.s32 1, %v2209
    %v2211 = vrot.slane %v2206, %v2210
    %v2212 = vlaneseq
    %v2213 = vshrl.u32 %v2212, 7
    %v2214 = vsub.s32 1, %v2213
    %v2215 = vrot.slane %v2207, %v2214
    %v2216 = vmul.f32 %v921, %v2211
    %v2217 = vmul.f32 %v921, %v2215
    %v2218 = vadd.f32 %v2072, %v2216
    %v2219 = vadd.f32 %v2073, %v2217
    %v2222 = vrot.slane %v2206, 1
    %v2223 = vsel %vm787, %v2207, %v2222
    %2224 = vrot.lane.b32.xlu0 %v2223, 32
    %v2225 = vpop.permute.xlu0 %2224
    %v2226 = vsel %vm564, %v2225, 0
    %2228 = vmatprep.subr.mxu0 0.0
    %2229 = vmatpush1.msra.mxu0 %v1840
    %2230 = vmatprep.subr.mxu0 0.0
    %2231 = vmatpush1.msra.mxu0 %v1841
    %2232 = vmatprep.subr.mxu0 0.0
    %2233 = vmatpush1.msra.mxu0 %v1842
    %2234 = vmatprep.subr.mxu0 0.0
    %2235 = vmatpush1.msra.mxu0 %v1843
    %2236 = vmatprep.subr.mxu0 0.0
    %2237 = vmatpush1.msra.mxu0 0.0
    %2238 = vmatprep.subr.mxu0 0.0
    %2239 = vmatpush1.msra.mxu0 0.0
    %2240 = vmatprep.subr.mxu0 0.0
    %2241 = vmatpush1.msra.mxu0 0.0
    %2242 = vmatprep.subr.mxu0 0.0
    %2243 = vmatpush1.msra.mxu0 0.0
    %2244 = vmatprep.subr.mxu0 0.0
    %2245 = vmatpush1.msra.mxu0 0.0
    %2246 = vmatprep.subr.mxu0 0.0
    %2247 = vmatpush1.msra.mxu0 0.0
    %2248 = vmatprep.subr.mxu0 0.0
    %2249 = vmatpush1.msra.mxu0 0.0
    %2250 = vmatprep.subr.mxu0 0.0
    %2251 = vmatpush1.msra.mxu0 0.0
    %2252 = vmatprep.subr.mxu0 0.0
    %2253 = vmatpush1.msra.mxu0 0.0
    %2254 = vmatprep.subr.mxu0 0.0
    %2255 = vmatpush1.msra.mxu0 0.0
    %2256 = vmatprep.subr.mxu0 0.0
    %2257 = vmatpush1.msra.mxu0 0.0
    %2258 = vmatprep.subr.mxu0 0.0
    %2259 = vmatpush1.msra.mxu0 0.0
    %2260 = vmatprep.subr.mxu0 0.0
    %2261 = vmatpush1.msra.mxu0 0.0
    %2262 = vmatprep.subr.mxu0 0.0
    %2263 = vmatpush1.msra.mxu0 0.0
    %2264 = vmatprep.subr.mxu0 0.0
    %2265 = vmatpush1.msra.mxu0 0.0
    %2266 = vmatprep.subr.mxu0 0.0
    %2267 = vmatpush1.msra.mxu0 0.0
    %2268 = vmatprep.subr.mxu0 0.0
    %2269 = vmatpush1.msra.mxu0 0.0
    %2270 = vmatprep.subr.mxu0 0.0
    %2271 = vmatpush1.msra.mxu0 0.0
    %2272 = vmatprep.subr.mxu0 0.0
    %2273 = vmatpush1.msra.mxu0 0.0
    %2274 = vmatprep.subr.mxu0 0.0
    %2275 = vmatpush1.msra.mxu0 0.0
    %2276 = vmatprep.subr.mxu0 0.0
    %2277 = vmatpush1.msra.mxu0 0.0
    %2278 = vmatprep.subr.mxu0 0.0
    %2279 = vmatpush1.msra.mxu0 0.0
    %2280 = vmatprep.subr.mxu0 0.0
    %2281 = vmatpush1.msra.mxu0 0.0
    %2282 = vmatprep.subr.mxu0 0.0
    %2283 = vmatpush1.msra.mxu0 0.0
    %2284 = vmatprep.subr.mxu0 0.0
    %2285 = vmatpush1.msra.mxu0 0.0
    %2286 = vmatprep.subr.mxu0 0.0
    %2287 = vmatpush1.msra.mxu0 0.0
    %2288 = vmatprep.subr.mxu0 0.0
    %2289 = vmatpush1.msra.mxu0 0.0
    %2290 = vmatprep.subr.mxu0 0.0
    %2291 = vmatpush1.msra.mxu0 0.0
    %2292 = vmatprep.mubr.f32.mxu0 0.0
    %2293 = vmatmul.mubr.f32.gmra.mrb[0].mxu0 %v2226
    %v2294 = vpop.f32.mrb[0].mxu0
    %v2295 = vadd.f32 0.0, %v2294
    %v2296 = vpop.f32.mrb[0].mxu0
    %2297 = vdwg.mxu0
    %v2299 = vrot.slane %v2295, 6
    %v2300 = vrot.slane %v2295, 7
    %v2303 = vadd.f32 %v1934, %v2299
    %v2304 = vadd.f32 %v1939, %v2300
    %v2305 = vmul.f32 %v2303, 0.5
    %v2306 = vmul.f32 %v2304, 0.5
    %v2307 = vtanh.pop %v2305
    %v2308 = vtanh.pop %v2306
    %v2309 = vadd.f32 %v2307, 1.0
    %v2310 = vadd.f32 %v2308, 1.0
    %v2311 = vmul.f32 %v2309, 0.5
    %v2312 = vmul.f32 %v2310, 0.5
    %v2313 = vtanh.pop %v2303
    %v2314 = vtanh.pop %v2304
    %v2317 = vrot.slane %v2194, 7
    %v2318 = vrot.slane %v2195, 7
    %v2321 = vmul.f32 %v2311, %v2317
    %v2322 = vmul.f32 %v2312, %v2318
    %2325 = vrot.lane.b32.xlu0 %v2313, 64
    %v2326 = vpop.permute.xlu0 %2325
    %2327 = vrot.lane.b32.xlu0 %v2314, 64
    %v2328 = vpop.permute.xlu0 %2327
    %v2331 = vmul.f32 %v2311, %v2326
    %v2332 = vmul.f32 %v2312, %v2328
    %2335 = vrot.lane.b32.xlu0 %v2331, 32
    %v2336 = vpop.permute.xlu0 %2335
    %2337 = vrot.lane.b32.xlu0 %v2332, 32
    %v2338 = vpop.permute.xlu0 %2337
    %v2341 = vadd.f32 %v2321, %v2336
    %v2342 = vadd.f32 %v2322, %v2338
    %v2343 = vtanh.pop %v2341
    %v2344 = vtanh.pop %v2342
    %2347 = vrot.lane.b32.xlu0 %v2343, 64
    %v2348 = vpop.permute.xlu0 %2347
    %2349 = vrot.lane.b32.xlu0 %v2344, 64
    %v2350 = vpop.permute.xlu0 %2349
    %v2353 = vmul.f32 %v2311, %v2348
    %v2354 = vmul.f32 %v2312, %v2350
    %v2355 = vlaneseq
    %v2356 = vshrl.u32 %v2355, 7
    %v2357 = vsub.s32 2, %v2356
    %v2358 = vrot.slane %v2353, %v2357
    %v2359 = vlaneseq
    %v2360 = vshrl.u32 %v2359, 7
    %v2361 = vsub.s32 2, %v2360
    %v2362 = vrot.slane %v2354, %v2361
    %v2363 = vmul.f32 %v1071, %v2358
    %v2364 = vmul.f32 %v1071, %v2362
    %v2365 = vadd.f32 %v2218, %v2363
    %v2366 = vadd.f32 %v2219, %v2364
    %v2369 = vrot.slane %v2353, 2
    %v2370 = vrot.slane %v2354, 1
    %v2371 = vsel %vm787, %v2370, %v2369
    %2372 = vrot.lane.b32.xlu0 %v2371, 32
    %v2373 = vpop.permute.xlu0 %2372
    %v2374 = vsel %vm564, %v2373, 0
    %2376 = vmatprep.subr.mxu0 0.0
    %2377 = vmatpush1.msra.mxu0 %v1840
    %2378 = vmatprep.subr.mxu0 0.0
    %2379 = vmatpush1.msra.mxu0 %v1841
    %2380 = vmatprep.subr.mxu0 0.0
    %2381 = vmatpush1.msra.mxu0 %v1842
    %2382 = vmatprep.subr.mxu0 0.0
    %2383 = vmatpush1.msra.mxu0 %v1843
    %2384 = vmatprep.subr.mxu0 0.0
    %2385 = vmatpush1.msra.mxu0 0.0
    %2386 = vmatprep.subr.mxu0 0.0
    %2387 = vmatpush1.msra.mxu0 0.0
    %2388 = vmatprep.subr.mxu0 0.0
    %2389 = vmatpush1.msra.mxu0 0.0
    %2390 = vmatprep.subr.mxu0 0.0
    %2391 = vmatpush1.msra.mxu0 0.0
    %2392 = vmatprep.subr.mxu0 0.0
    %2393 = vmatpush1.msra.mxu0 0.0
    %2394 = vmatprep.subr.mxu0 0.0
    %2395 = vmatpush1.msra.mxu0 0.0
    %2396 = vmatprep.subr.mxu0 0.0
    %2397 = vmatpush1.msra.mxu0 0.0
    %2398 = vmatprep.subr.mxu0 0.0
    %2399 = vmatpush1.msra.mxu0 0.0
    %2400 = vmatprep.subr.mxu0 0.0
    %2401 = vmatpush1.msra.mxu0 0.0
    %2402 = vmatprep.subr.mxu0 0.0
    %2403 = vmatpush1.msra.mxu0 0.0
    %2404 = vmatprep.subr.mxu0 0.0
    %2405 = vmatpush1.msra.mxu0 0.0
    %2406 = vmatprep.subr.mxu0 0.0
    %2407 = vmatpush1.msra.mxu0 0.0
    %2408 = vmatprep.subr.mxu0 0.0
    %2409 = vmatpush1.msra.mxu0 0.0
    %2410 = vmatprep.subr.mxu0 0.0
    %2411 = vmatpush1.msra.mxu0 0.0
    %2412 = vmatprep.subr.mxu0 0.0
    %2413 = vmatpush1.msra.mxu0 0.0
    %2414 = vmatprep.subr.mxu0 0.0
    %2415 = vmatpush1.msra.mxu0 0.0
    %2416 = vmatprep.subr.mxu0 0.0
    %2417 = vmatpush1.msra.mxu0 0.0
    %2418 = vmatprep.subr.mxu0 0.0
    %2419 = vmatpush1.msra.mxu0 0.0
    %2420 = vmatprep.subr.mxu0 0.0
    %2421 = vmatpush1.msra.mxu0 0.0
    %2422 = vmatprep.subr.mxu0 0.0
    %2423 = vmatpush1.msra.mxu0 0.0
    %2424 = vmatprep.subr.mxu0 0.0
    %2425 = vmatpush1.msra.mxu0 0.0
    %2426 = vmatprep.subr.mxu0 0.0
    %2427 = vmatpush1.msra.mxu0 0.0
    %2428 = vmatprep.subr.mxu0 0.0
    %2429 = vmatpush1.msra.mxu0 0.0
    %2430 = vmatprep.subr.mxu0 0.0
    %2431 = vmatpush1.msra.mxu0 0.0
    %2432 = vmatprep.subr.mxu0 0.0
    %2433 = vmatpush1.msra.mxu0 0.0
    %2434 = vmatprep.subr.mxu0 0.0
    %2435 = vmatpush1.msra.mxu0 0.0
    %2436 = vmatprep.subr.mxu0 0.0
    %2437 = vmatpush1.msra.mxu0 0.0
    %2438 = vmatprep.subr.mxu0 0.0
    %2439 = vmatpush1.msra.mxu0 0.0
    %2440 = vmatprep.mubr.f32.mxu0 0.0
    %2441 = vmatmul.mubr.f32.gmra.mrb[0].mxu0 %v2374
    %v2442 = vpop.f32.mrb[0].mxu0
    %v2443 = vadd.f32 0.0, %v2442
    %v2444 = vpop.f32.mrb[0].mxu0
    %2445 = vdwg.mxu0
    %v2447 = vrot.slane %v2443, 5
    %v2448 = vrot.slane %v2443, 6
    %v2451 = vadd.f32 %v1934, %v2447
    %v2452 = vadd.f32 %v1939, %v2448
    %v2453 = vmul.f32 %v2451, 0.5
    %v2454 = vmul.f32 %v2452, 0.5
    %v2455 = vtanh.pop %v2453
    %v2456 = vtanh.pop %v2454
    %v2457 = vadd.f32 %v2455, 1.0
    %v2458 = vadd.f32 %v2456, 1.0
    %v2459 = vmul.f32 %v2457, 0.5
    %v2460 = vmul.f32 %v2458, 0.5
    %v2461 = vtanh.pop %v2451
    %v2462 = vtanh.pop %v2452
    %v2465 = vrot.slane %v2341, 7
    %v2466 = vrot.slane %v2342, 7
    %v2469 = vmul.f32 %v2459, %v2465
    %v2470 = vmul.f32 %v2460, %v2466
    %2473 = vrot.lane.b32.xlu0 %v2461, 64
    %v2474 = vpop.permute.xlu0 %2473
    %2475 = vrot.lane.b32.xlu0 %v2462, 64
    %v2476 = vpop.permute.xlu0 %2475
    %v2479 = vmul.f32 %v2459, %v2474
    %v2480 = vmul.f32 %v2460, %v2476
    %2483 = vrot.lane.b32.xlu0 %v2479, 32
    %v2484 = vpop.permute.xlu0 %2483
    %2485 = vrot.lane.b32.xlu0 %v2480, 32
    %v2486 = vpop.permute.xlu0 %2485
    %v2489 = vadd.f32 %v2469, %v2484
    %v2490 = vadd.f32 %v2470, %v2486
    %v2491 = vtanh.pop %v2489
    %v2492 = vtanh.pop %v2490
    %2495 = vrot.lane.b32.xlu0 %v2491, 64
    %v2496 = vpop.permute.xlu0 %2495
    %2497 = vrot.lane.b32.xlu0 %v2492, 64
    %v2498 = vpop.permute.xlu0 %2497
    %v2501 = vmul.f32 %v2459, %v2496
    %v2502 = vmul.f32 %v2460, %v2498
    %v2503 = vlaneseq
    %v2504 = vshrl.u32 %v2503, 7
    %v2505 = vsub.s32 3, %v2504
    %v2506 = vrot.slane %v2501, %v2505
    %v2507 = vlaneseq
    %v2508 = vshrl.u32 %v2507, 7
    %v2509 = vsub.s32 3, %v2508
    %v2510 = vrot.slane %v2502, %v2509
    %v2511 = vmul.f32 %v1222, %v2506
    %v2512 = vmul.f32 %v1222, %v2510
    %v2513 = vadd.f32 %v2365, %v2511
    %v2514 = vadd.f32 %v2366, %v2512
    %v2517 = vrot.slane %v2501, 3
    %v2518 = vrot.slane %v2502, 2
    %v2519 = vsel %vm787, %v2518, %v2517
    %2520 = vrot.lane.b32.xlu0 %v2519, 32
    %v2521 = vpop.permute.xlu0 %2520
    %v2522 = vsel %vm564, %v2521, 0
    %2524 = vmatprep.subr.mxu0 0.0
    %2525 = vmatpush1.msra.mxu0 %v1840
    %2526 = vmatprep.subr.mxu0 0.0
    %2527 = vmatpush1.msra.mxu0 %v1841
    %2528 = vmatprep.subr.mxu0 0.0
    %2529 = vmatpush1.msra.mxu0 %v1842
    %2530 = vmatprep.subr.mxu0 0.0
    %2531 = vmatpush1.msra.mxu0 %v1843
    %2532 = vmatprep.subr.mxu0 0.0
    %2533 = vmatpush1.msra.mxu0 0.0
    %2534 = vmatprep.subr.mxu0 0.0
    %2535 = vmatpush1.msra.mxu0 0.0
    %2536 = vmatprep.subr.mxu0 0.0
    %2537 = vmatpush1.msra.mxu0 0.0
    %2538 = vmatprep.subr.mxu0 0.0
    %2539 = vmatpush1.msra.mxu0 0.0
    %2540 = vmatprep.subr.mxu0 0.0
    %2541 = vmatpush1.msra.mxu0 0.0
    %2542 = vmatprep.subr.mxu0 0.0
    %2543 = vmatpush1.msra.mxu0 0.0
    %2544 = vmatprep.subr.mxu0 0.0
    %2545 = vmatpush1.msra.mxu0 0.0
    %2546 = vmatprep.subr.mxu0 0.0
    %2547 = vmatpush1.msra.mxu0 0.0
    %2548 = vmatprep.subr.mxu0 0.0
    %2549 = vmatpush1.msra.mxu0 0.0
    %2550 = vmatprep.subr.mxu0 0.0
    %2551 = vmatpush1.msra.mxu0 0.0
    %2552 = vmatprep.subr.mxu0 0.0
    %2553 = vmatpush1.msra.mxu0 0.0
    %2554 = vmatprep.subr.mxu0 0.0
    %2555 = vmatpush1.msra.mxu0 0.0
    %2556 = vmatprep.subr.mxu0 0.0
    %2557 = vmatpush1.msra.mxu0 0.0
    %2558 = vmatprep.subr.mxu0 0.0
    %2559 = vmatpush1.msra.mxu0 0.0
    %2560 = vmatprep.subr.mxu0 0.0
    %2561 = vmatpush1.msra.mxu0 0.0
    %2562 = vmatprep.subr.mxu0 0.0
    %2563 = vmatpush1.msra.mxu0 0.0
    %2564 = vmatprep.subr.mxu0 0.0
    %2565 = vmatpush1.msra.mxu0 0.0
    %2566 = vmatprep.subr.mxu0 0.0
    %2567 = vmatpush1.msra.mxu0 0.0
    %2568 = vmatprep.subr.mxu0 0.0
    %2569 = vmatpush1.msra.mxu0 0.0
    %2570 = vmatprep.subr.mxu0 0.0
    %2571 = vmatpush1.msra.mxu0 0.0
    %2572 = vmatprep.subr.mxu0 0.0
    %2573 = vmatpush1.msra.mxu0 0.0
    %2574 = vmatprep.subr.mxu0 0.0
    %2575 = vmatpush1.msra.mxu0 0.0
    %2576 = vmatprep.subr.mxu0 0.0
    %2577 = vmatpush1.msra.mxu0 0.0
    %2578 = vmatprep.subr.mxu0 0.0
    %2579 = vmatpush1.msra.mxu0 0.0
    %2580 = vmatprep.subr.mxu0 0.0
    %2581 = vmatpush1.msra.mxu0 0.0
    %2582 = vmatprep.subr.mxu0 0.0
    %2583 = vmatpush1.msra.mxu0 0.0
    %2584 = vmatprep.subr.mxu0 0.0
    %2585 = vmatpush1.msra.mxu0 0.0
    %2586 = vmatprep.subr.mxu0 0.0
    %2587 = vmatpush1.msra.mxu0 0.0
    %2588 = vmatprep.mubr.f32.mxu0 0.0
    %2589 = vmatmul.mubr.f32.gmra.mrb[0].mxu0 %v2522
    %v2590 = vpop.f32.mrb[0].mxu0
    %v2591 = vadd.f32 0.0, %v2590
    %v2592 = vpop.f32.mrb[0].mxu0
    %2593 = vdwg.mxu0
    %v2595 = vrot.slane %v2591, 4
    %v2596 = vrot.slane %v2591, 5
    %v2599 = vadd.f32 %v1934, %v2595
    %v2600 = vadd.f32 %v1939, %v2596
    %v2601 = vmul.f32 %v2599, 0.5
    %v2602 = vmul.f32 %v2600, 0.5
    %v2603 = vtanh.pop %v2601
    %v2604 = vtanh.pop %v2602
    %v2605 = vadd.f32 %v2603, 1.0
    %v2606 = vadd.f32 %v2604, 1.0
    %v2607 = vmul.f32 %v2605, 0.5
    %v2608 = vmul.f32 %v2606, 0.5
    %v2609 = vtanh.pop %v2599
    %v2610 = vtanh.pop %v2600
    %v2613 = vrot.slane %v2489, 7
    %v2614 = vrot.slane %v2490, 7
    %v2617 = vmul.f32 %v2607, %v2613
    %v2618 = vmul.f32 %v2608, %v2614
    %2621 = vrot.lane.b32.xlu0 %v2609, 64
    %v2622 = vpop.permute.xlu0 %2621
    %2623 = vrot.lane.b32.xlu0 %v2610, 64
    %v2624 = vpop.permute.xlu0 %2623
    %v2627 = vmul.f32 %v2607, %v2622
    %v2628 = vmul.f32 %v2608, %v2624
    %2631 = vrot.lane.b32.xlu0 %v2627, 32
    %v2632 = vpop.permute.xlu0 %2631
    %2633 = vrot.lane.b32.xlu0 %v2628, 32
    %v2634 = vpop.permute.xlu0 %2633
    %v2637 = vadd.f32 %v2617, %v2632
    %v2638 = vadd.f32 %v2618, %v2634
    %v2639 = vtanh.pop %v2637
    %v2640 = vtanh.pop %v2638
    %2643 = vrot.lane.b32.xlu0 %v2639, 64
    %v2644 = vpop.permute.xlu0 %2643
    %2645 = vrot.lane.b32.xlu0 %v2640, 64
    %v2646 = vpop.permute.xlu0 %2645
    %v2649 = vmul.f32 %v2607, %v2644
    %v2650 = vmul.f32 %v2608, %v2646
    %v2651 = vlaneseq
    %v2652 = vshrl.u32 %v2651, 7
    %v2653 = vsub.s32 4, %v2652
    %v2654 = vrot.slane %v2649, %v2653
    %v2655 = vlaneseq
    %v2656 = vshrl.u32 %v2655, 7
    %v2657 = vsub.s32 4, %v2656
    %v2658 = vrot.slane %v2650, %v2657
    %v2659 = vmul.f32 %v1373, %v2654
    %v2660 = vmul.f32 %v1373, %v2658
    %v2661 = vadd.f32 %v2513, %v2659
    %v2662 = vadd.f32 %v2514, %v2660
    %v2665 = vrot.slane %v2649, 4
    %v2666 = vrot.slane %v2650, 3
    %v2667 = vsel %vm787, %v2666, %v2665
    %2668 = vrot.lane.b32.xlu0 %v2667, 32
    %v2669 = vpop.permute.xlu0 %2668
    %v2670 = vsel %vm564, %v2669, 0
    %2672 = vmatprep.subr.mxu0 0.0
    %2673 = vmatpush1.msra.mxu0 %v1840
    %2674 = vmatprep.subr.mxu0 0.0
    %2675 = vmatpush1.msra.mxu0 %v1841
    %2676 = vmatprep.subr.mxu0 0.0
    %2677 = vmatpush1.msra.mxu0 %v1842
    %2678 = vmatprep.subr.mxu0 0.0
    %2679 = vmatpush1.msra.mxu0 %v1843
    %2680 = vmatprep.subr.mxu0 0.0
    %2681 = vmatpush1.msra.mxu0 0.0
    %2682 = vmatprep.subr.mxu0 0.0
    %2683 = vmatpush1.msra.mxu0 0.0
    %2684 = vmatprep.subr.mxu0 0.0
    %2685 = vmatpush1.msra.mxu0 0.0
    %2686 = vmatprep.subr.mxu0 0.0
    %2687 = vmatpush1.msra.mxu0 0.0
    %2688 = vmatprep.subr.mxu0 0.0
    %2689 = vmatpush1.msra.mxu0 0.0
    %2690 = vmatprep.subr.mxu0 0.0
    %2691 = vmatpush1.msra.mxu0 0.0
    %2692 = vmatprep.subr.mxu0 0.0
    %2693 = vmatpush1.msra.mxu0 0.0
    %2694 = vmatprep.subr.mxu0 0.0
    %2695 = vmatpush1.msra.mxu0 0.0
    %2696 = vmatprep.subr.mxu0 0.0
    %2697 = vmatpush1.msra.mxu0 0.0
    %2698 = vmatprep.subr.mxu0 0.0
    %2699 = vmatpush1.msra.mxu0 0.0
    %2700 = vmatprep.subr.mxu0 0.0
    %2701 = vmatpush1.msra.mxu0 0.0
    %2702 = vmatprep.subr.mxu0 0.0
    %2703 = vmatpush1.msra.mxu0 0.0
    %2704 = vmatprep.subr.mxu0 0.0
    %2705 = vmatpush1.msra.mxu0 0.0
    %2706 = vmatprep.subr.mxu0 0.0
    %2707 = vmatpush1.msra.mxu0 0.0
    %2708 = vmatprep.subr.mxu0 0.0
    %2709 = vmatpush1.msra.mxu0 0.0
    %2710 = vmatprep.subr.mxu0 0.0
    %2711 = vmatpush1.msra.mxu0 0.0
    %2712 = vmatprep.subr.mxu0 0.0
    %2713 = vmatpush1.msra.mxu0 0.0
    %2714 = vmatprep.subr.mxu0 0.0
    %2715 = vmatpush1.msra.mxu0 0.0
    %2716 = vmatprep.subr.mxu0 0.0
    %2717 = vmatpush1.msra.mxu0 0.0
    %2718 = vmatprep.subr.mxu0 0.0
    %2719 = vmatpush1.msra.mxu0 0.0
    %2720 = vmatprep.subr.mxu0 0.0
    %2721 = vmatpush1.msra.mxu0 0.0
    %2722 = vmatprep.subr.mxu0 0.0
    %2723 = vmatpush1.msra.mxu0 0.0
    %2724 = vmatprep.subr.mxu0 0.0
    %2725 = vmatpush1.msra.mxu0 0.0
    %2726 = vmatprep.subr.mxu0 0.0
    %2727 = vmatpush1.msra.mxu0 0.0
    %2728 = vmatprep.subr.mxu0 0.0
    %2729 = vmatpush1.msra.mxu0 0.0
    %2730 = vmatprep.subr.mxu0 0.0
    %2731 = vmatpush1.msra.mxu0 0.0
    %2732 = vmatprep.subr.mxu0 0.0
    %2733 = vmatpush1.msra.mxu0 0.0
    %2734 = vmatprep.subr.mxu0 0.0
    %2735 = vmatpush1.msra.mxu0 0.0
    %2736 = vmatprep.mubr.f32.mxu0 0.0
    %2737 = vmatmul.mubr.f32.gmra.mrb[0].mxu0 %v2670
    %v2738 = vpop.f32.mrb[0].mxu0
    %v2739 = vadd.f32 0.0, %v2738
    %v2740 = vpop.f32.mrb[0].mxu0
    %2741 = vdwg.mxu0
    %v2743 = vrot.slane %v2739, 3
    %v2744 = vrot.slane %v2739, 4
    %v2747 = vadd.f32 %v1934, %v2743
    %v2748 = vadd.f32 %v1939, %v2744
    %v2749 = vmul.f32 %v2747, 0.5
    %v2750 = vmul.f32 %v2748, 0.5
    %v2751 = vtanh.pop %v2749
    %v2752 = vtanh.pop %v2750
    %v2753 = vadd.f32 %v2751, 1.0
    %v2754 = vadd.f32 %v2752, 1.0
    %v2755 = vmul.f32 %v2753, 0.5
    %v2756 = vmul.f32 %v2754, 0.5
    %v2757 = vtanh.pop %v2747
    %v2758 = vtanh.pop %v2748
    %v2761 = vrot.slane %v2637, 7
    %v2762 = vrot.slane %v2638, 7
    %v2765 = vmul.f32 %v2755, %v2761
    %v2766 = vmul.f32 %v2756, %v2762
    %2769 = vrot.lane.b32.xlu0 %v2757, 64
    %v2770 = vpop.permute.xlu0 %2769
    %2771 = vrot.lane.b32.xlu0 %v2758, 64
    %v2772 = vpop.permute.xlu0 %2771
    %v2775 = vmul.f32 %v2755, %v2770
    %v2776 = vmul.f32 %v2756, %v2772
    %2779 = vrot.lane.b32.xlu0 %v2775, 32
    %v2780 = vpop.permute.xlu0 %2779
    %2781 = vrot.lane.b32.xlu0 %v2776, 32
    %v2782 = vpop.permute.xlu0 %2781
    %v2785 = vadd.f32 %v2765, %v2780
    %v2786 = vadd.f32 %v2766, %v2782
    %v2787 = vtanh.pop %v2785
    %v2788 = vtanh.pop %v2786
    %2791 = vrot.lane.b32.xlu0 %v2787, 64
    %v2792 = vpop.permute.xlu0 %2791
    %2793 = vrot.lane.b32.xlu0 %v2788, 64
    %v2794 = vpop.permute.xlu0 %2793
    %v2797 = vmul.f32 %v2755, %v2792
    %v2798 = vmul.f32 %v2756, %v2794
    %v2799 = vlaneseq
    %v2800 = vshrl.u32 %v2799, 7
    %v2801 = vsub.s32 5, %v2800
    %v2802 = vrot.slane %v2797, %v2801
    %v2803 = vlaneseq
    %v2804 = vshrl.u32 %v2803, 7
    %v2805 = vsub.s32 5, %v2804
    %v2806 = vrot.slane %v2798, %v2805
    %v2807 = vmul.f32 %v1524, %v2802
    %v2808 = vmul.f32 %v1524, %v2806
    %v2809 = vadd.f32 %v2661, %v2807
    %v2810 = vadd.f32 %v2662, %v2808
    %v2813 = vrot.slane %v2797, 5
    %v2814 = vrot.slane %v2798, 4
    %v2815 = vsel %vm787, %v2814, %v2813
    %2816 = vrot.lane.b32.xlu0 %v2815, 32
    %v2817 = vpop.permute.xlu0 %2816
    %v2818 = vsel %vm564, %v2817, 0
    %2820 = vmatprep.subr.mxu0 0.0
    %2821 = vmatpush1.msra.mxu0 %v1840
    %2822 = vmatprep.subr.mxu0 0.0
    %2823 = vmatpush1.msra.mxu0 %v1841
    %2824 = vmatprep.subr.mxu0 0.0
    %2825 = vmatpush1.msra.mxu0 %v1842
    %2826 = vmatprep.subr.mxu0 0.0
    %2827 = vmatpush1.msra.mxu0 %v1843
    %2828 = vmatprep.subr.mxu0 0.0
    %2829 = vmatpush1.msra.mxu0 0.0
    %2830 = vmatprep.subr.mxu0 0.0
    %2831 = vmatpush1.msra.mxu0 0.0
    %2832 = vmatprep.subr.mxu0 0.0
    %2833 = vmatpush1.msra.mxu0 0.0
    %2834 = vmatprep.subr.mxu0 0.0
    %2835 = vmatpush1.msra.mxu0 0.0
    %2836 = vmatprep.subr.mxu0 0.0
    %2837 = vmatpush1.msra.mxu0 0.0
    %2838 = vmatprep.subr.mxu0 0.0
    %2839 = vmatpush1.msra.mxu0 0.0
    %2840 = vmatprep.subr.mxu0 0.0
    %2841 = vmatpush1.msra.mxu0 0.0
    %2842 = vmatprep.subr.mxu0 0.0
    %2843 = vmatpush1.msra.mxu0 0.0
    %2844 = vmatprep.subr.mxu0 0.0
    %2845 = vmatpush1.msra.mxu0 0.0
    %2846 = vmatprep.subr.mxu0 0.0
    %2847 = vmatpush1.msra.mxu0 0.0
    %2848 = vmatprep.subr.mxu0 0.0
    %2849 = vmatpush1.msra.mxu0 0.0
    %2850 = vmatprep.subr.mxu0 0.0
    %2851 = vmatpush1.msra.mxu0 0.0
    %2852 = vmatprep.subr.mxu0 0.0
    %2853 = vmatpush1.msra.mxu0 0.0
    %2854 = vmatprep.subr.mxu0 0.0
    %2855 = vmatpush1.msra.mxu0 0.0
    %2856 = vmatprep.subr.mxu0 0.0
    %2857 = vmatpush1.msra.mxu0 0.0
    %2858 = vmatprep.subr.mxu0 0.0
    %2859 = vmatpush1.msra.mxu0 0.0
    %2860 = vmatprep.subr.mxu0 0.0
    %2861 = vmatpush1.msra.mxu0 0.0
    %2862 = vmatprep.subr.mxu0 0.0
    %2863 = vmatpush1.msra.mxu0 0.0
    %2864 = vmatprep.subr.mxu0 0.0
    %2865 = vmatpush1.msra.mxu0 0.0
    %2866 = vmatprep.subr.mxu0 0.0
    %2867 = vmatpush1.msra.mxu0 0.0
    %2868 = vmatprep.subr.mxu0 0.0
    %2869 = vmatpush1.msra.mxu0 0.0
    %2870 = vmatprep.subr.mxu0 0.0
    %2871 = vmatpush1.msra.mxu0 0.0
    %2872 = vmatprep.subr.mxu0 0.0
    %2873 = vmatpush1.msra.mxu0 0.0
    %2874 = vmatprep.subr.mxu0 0.0
    %2875 = vmatpush1.msra.mxu0 0.0
    %2876 = vmatprep.subr.mxu0 0.0
    %2877 = vmatpush1.msra.mxu0 0.0
    %2878 = vmatprep.subr.mxu0 0.0
    %2879 = vmatpush1.msra.mxu0 0.0
    %2880 = vmatprep.subr.mxu0 0.0
    %2881 = vmatpush1.msra.mxu0 0.0
    %2882 = vmatprep.subr.mxu0 0.0
    %2883 = vmatpush1.msra.mxu0 0.0
    %2884 = vmatprep.mubr.f32.mxu0 0.0
    %2885 = vmatmul.mubr.f32.gmra.mrb[0].mxu0 %v2818
    %v2886 = vpop.f32.mrb[0].mxu0
    %v2887 = vadd.f32 0.0, %v2886
    %v2888 = vpop.f32.mrb[0].mxu0
    %2889 = vdwg.mxu0
    %v2891 = vrot.slane %v2887, 2
    %v2892 = vrot.slane %v2887, 3
    %v2895 = vadd.f32 %v1934, %v2891
    %v2896 = vadd.f32 %v1939, %v2892
    %v2897 = vmul.f32 %v2895, 0.5
    %v2898 = vmul.f32 %v2896, 0.5
    %v2899 = vtanh.pop %v2897
    %v2900 = vtanh.pop %v2898
    %v2901 = vadd.f32 %v2899, 1.0
    %v2902 = vadd.f32 %v2900, 1.0
    %v2903 = vmul.f32 %v2901, 0.5
    %v2904 = vmul.f32 %v2902, 0.5
    %v2905 = vtanh.pop %v2895
    %v2906 = vtanh.pop %v2896
    %v2909 = vrot.slane %v2785, 7
    %v2910 = vrot.slane %v2786, 7
    %v2913 = vmul.f32 %v2903, %v2909
    %v2914 = vmul.f32 %v2904, %v2910
    %2917 = vrot.lane.b32.xlu0 %v2905, 64
    %v2918 = vpop.permute.xlu0 %2917
    %2919 = vrot.lane.b32.xlu0 %v2906, 64
    %v2920 = vpop.permute.xlu0 %2919
    %v2923 = vmul.f32 %v2903, %v2918
    %v2924 = vmul.f32 %v2904, %v2920
    %2927 = vrot.lane.b32.xlu0 %v2923, 32
    %v2928 = vpop.permute.xlu0 %2927
    %2929 = vrot.lane.b32.xlu0 %v2924, 32
    %v2930 = vpop.permute.xlu0 %2929
    %v2933 = vadd.f32 %v2913, %v2928
    %v2934 = vadd.f32 %v2914, %v2930
    %v2935 = vtanh.pop %v2933
    %v2936 = vtanh.pop %v2934
    %2939 = vrot.lane.b32.xlu0 %v2935, 64
    %v2940 = vpop.permute.xlu0 %2939
    %2941 = vrot.lane.b32.xlu0 %v2936, 64
    %v2942 = vpop.permute.xlu0 %2941
    %v2945 = vmul.f32 %v2903, %v2940
    %v2946 = vmul.f32 %v2904, %v2942
    %v2947 = vlaneseq
    %v2948 = vshrl.u32 %v2947, 7
    %v2949 = vsub.s32 6, %v2948
    %v2950 = vrot.slane %v2945, %v2949
    %v2951 = vlaneseq
    %v2952 = vshrl.u32 %v2951, 7
    %v2953 = vsub.s32 6, %v2952
    %v2954 = vrot.slane %v2946, %v2953
    %v2955 = vmul.f32 %v1675, %v2950
    %v2956 = vmul.f32 %v1675, %v2954
    %v2957 = vadd.f32 %v2809, %v2955
    %v2958 = vadd.f32 %v2810, %v2956
    %v2961 = vrot.slane %v2945, 6
    %v2962 = vrot.slane %v2946, 5
    %v2963 = vsel %vm787, %v2962, %v2961
    %2964 = vrot.lane.b32.xlu0 %v2963, 32
    %v2965 = vpop.permute.xlu0 %2964
    %v2966 = vsel %vm564, %v2965, 0
    %2968 = vmatprep.subr.mxu0 0.0
    %2969 = vmatpush1.msra.mxu0 %v1840
    %2970 = vmatprep.subr.mxu0 0.0
    %2971 = vmatpush1.msra.mxu0 %v1841
    %2972 = vmatprep.subr.mxu0 0.0
    %2973 = vmatpush1.msra.mxu0 %v1842
    %2974 = vmatprep.subr.mxu0 0.0
    %2975 = vmatpush1.msra.mxu0 %v1843
    %2976 = vmatprep.subr.mxu0 0.0
    %2977 = vmatpush1.msra.mxu0 0.0
    %2978 = vmatprep.subr.mxu0 0.0
    %2979 = vmatpush1.msra.mxu0 0.0
    %2980 = vmatprep.subr.mxu0 0.0
    %2981 = vmatpush1.msra.mxu0 0.0
    %2982 = vmatprep.subr.mxu0 0.0
    %2983 = vmatpush1.msra.mxu0 0.0
    %2984 = vmatprep.subr.mxu0 0.0
    %2985 = vmatpush1.msra.mxu0 0.0
    %2986 = vmatprep.subr.mxu0 0.0
    %2987 = vmatpush1.msra.mxu0 0.0
    %2988 = vmatprep.subr.mxu0 0.0
    %2989 = vmatpush1.msra.mxu0 0.0
    %2990 = vmatprep.subr.mxu0 0.0
    %2991 = vmatpush1.msra.mxu0 0.0
    %2992 = vmatprep.subr.mxu0 0.0
    %2993 = vmatpush1.msra.mxu0 0.0
    %2994 = vmatprep.subr.mxu0 0.0
    %2995 = vmatpush1.msra.mxu0 0.0
    %2996 = vmatprep.subr.mxu0 0.0
    %2997 = vmatpush1.msra.mxu0 0.0
    %2998 = vmatprep.subr.mxu0 0.0
    %2999 = vmatpush1.msra.mxu0 0.0
    %3000 = vmatprep.subr.mxu0 0.0
    %3001 = vmatpush1.msra.mxu0 0.0
    %3002 = vmatprep.subr.mxu0 0.0
    %3003 = vmatpush1.msra.mxu0 0.0
    %3004 = vmatprep.subr.mxu0 0.0
    %3005 = vmatpush1.msra.mxu0 0.0
    %3006 = vmatprep.subr.mxu0 0.0
    %3007 = vmatpush1.msra.mxu0 0.0
    %3008 = vmatprep.subr.mxu0 0.0
    %3009 = vmatpush1.msra.mxu0 0.0
    %3010 = vmatprep.subr.mxu0 0.0
    %3011 = vmatpush1.msra.mxu0 0.0
    %3012 = vmatprep.subr.mxu0 0.0
    %3013 = vmatpush1.msra.mxu0 0.0
    %3014 = vmatprep.subr.mxu0 0.0
    %3015 = vmatpush1.msra.mxu0 0.0
    %3016 = vmatprep.subr.mxu0 0.0
    %3017 = vmatpush1.msra.mxu0 0.0
    %3018 = vmatprep.subr.mxu0 0.0
    %3019 = vmatpush1.msra.mxu0 0.0
    %3020 = vmatprep.subr.mxu0 0.0
    %3021 = vmatpush1.msra.mxu0 0.0
    %3022 = vmatprep.subr.mxu0 0.0
    %3023 = vmatpush1.msra.mxu0 0.0
    %3024 = vmatprep.subr.mxu0 0.0
    %3025 = vmatpush1.msra.mxu0 0.0
    %3026 = vmatprep.subr.mxu0 0.0
    %3027 = vmatpush1.msra.mxu0 0.0
    %3028 = vmatprep.subr.mxu0 0.0
    %3029 = vmatpush1.msra.mxu0 0.0
    %3030 = vmatprep.subr.mxu0 0.0
    %3031 = vmatpush1.msra.mxu0 0.0
    %3032 = vmatprep.mubr.f32.mxu0 0.0
    %3033 = vmatmul.mubr.f32.gmra.mrb[0].mxu0 %v2966
    %v3034 = vpop.f32.mrb[0].mxu0
    %v3035 = vadd.f32 0.0, %v3034
    %v3036 = vpop.f32.mrb[0].mxu0
    %3037 = vdwg.mxu0
    %v3039 = vrot.slane %v3035, 1
    %v3040 = vrot.slane %v3035, 2
    %v3043 = vadd.f32 %v1934, %v3039
    %v3044 = vadd.f32 %v1939, %v3040
    %v3045 = vmul.f32 %v3043, 0.5
    %v3046 = vmul.f32 %v3044, 0.5
    %v3047 = vtanh.pop %v3045
    %v3048 = vtanh.pop %v3046
    %v3049 = vadd.f32 %v3047, 1.0
    %v3050 = vadd.f32 %v3048, 1.0
    %v3051 = vmul.f32 %v3049, 0.5
    %v3052 = vmul.f32 %v3050, 0.5
    %v3053 = vtanh.pop %v3043
    %v3054 = vtanh.pop %v3044
    %v3057 = vrot.slane %v2933, 7
    %v3058 = vrot.slane %v2934, 7
    %v3061 = vmul.f32 %v3051, %v3057
    %v3062 = vmul.f32 %v3052, %v3058
    %3065 = vrot.lane.b32.xlu0 %v3053, 64
    %v3066 = vpop.permute.xlu0 %3065
    %3067 = vrot.lane.b32.xlu0 %v3054, 64
    %v3068 = vpop.permute.xlu0 %3067
    %v3071 = vmul.f32 %v3051, %v3066
    %v3072 = vmul.f32 %v3052, %v3068
    %3075 = vrot.lane.b32.xlu0 %v3071, 32
    %v3076 = vpop.permute.xlu0 %3075
    %3077 = vrot.lane.b32.xlu0 %v3072, 32
    %v3078 = vpop.permute.xlu0 %3077
    %v3081 = vadd.f32 %v3061, %v3076
    %v3082 = vadd.f32 %v3062, %v3078
    %v3083 = vtanh.pop %v3081
    %v3084 = vtanh.pop %v3082
    %3087 = vrot.lane.b32.xlu0 %v3083, 64
    %v3088 = vpop.permute.xlu0 %3087
    %3089 = vrot.lane.b32.xlu0 %v3084, 64
    %v3090 = vpop.permute.xlu0 %3089
    %v3093 = vmul.f32 %v3051, %v3088
    %v3094 = vmul.f32 %v3052, %v3090
    %v3095 = vlaneseq
    %v3096 = vshrl.u32 %v3095, 7
    %v3097 = vsub.s32 7, %v3096
    %v3098 = vrot.slane %v3093, %v3097
    %v3099 = vlaneseq
    %v3100 = vshrl.u32 %v3099, 7
    %v3101 = vsub.s32 7, %v3100
    %v3102 = vrot.slane %v3094, %v3101
    %v3103 = vmul.f32 %v1826, %v3098
    %v3104 = vmul.f32 %v1826, %v3102
    %v3105 = vadd.f32 %v2957, %v3103
    %v3106 = vadd.f32 %v2958, %v3104
    %v3107 = vld [vmem:[%s14] sm:$0xff]
    %v3108 = vld [vmem:[%s14 + $0x8] sm:$0xff]
    %v3109 = vld [vmem:[%s14 + $0x10] sm:$0xff]
    %v3110 = vld [vmem:[%s14 + $0x18] sm:$0xff]
    %v3111 = vld [vmem:[%s15] sm:$0x1]
    %v3113 = vlaneseq
    %v3114 = vshrl.u32 %v3113, 7
    %v3115 = vsub.s32 0, %v3114
    %v3116 = vrot.slane %v3111, %v3115
    %3120 = vrot.lane.b32.xlu0 %v3105, 32
    %v3121 = vpop.permute.xlu0 %3120
    %3122 = vrot.lane.b32.xlu0 %v3106, 32
    %v3123 = vpop.permute.xlu0 %3122
    %v3124 = vsel %vm564, %v3121, 0
    %v3126 = vsel %vm564, %v3123, 0
    %3128 = vmatprep.subr.mxu0 0.0
    %3129 = vmatpush1.msra.mxu0 %v3107
    %3130 = vmatprep.subr.mxu0 0.0
    %3131 = vmatpush1.msra.mxu0 %v3108
    %3132 = vmatprep.subr.mxu0 0.0
    %3133 = vmatpush1.msra.mxu0 %v3109
    %3134 = vmatprep.subr.mxu0 0.0
    %3135 = vmatpush1.msra.mxu0 %v3110
    %3136 = vmatprep.subr.mxu0 0.0
    %3137 = vmatpush1.msra.mxu0 0.0
    %3138 = vmatprep.subr.mxu0 0.0
    %3139 = vmatpush1.msra.mxu0 0.0
    %3140 = vmatprep.subr.mxu0 0.0
    %3141 = vmatpush1.msra.mxu0 0.0
    %3142 = vmatprep.subr.mxu0 0.0
    %3143 = vmatpush1.msra.mxu0 0.0
    %3144 = vmatprep.subr.mxu0 0.0
    %3145 = vmatpush1.msra.mxu0 0.0
    %3146 = vmatprep.subr.mxu0 0.0
    %3147 = vmatpush1.msra.mxu0 0.0
    %3148 = vmatprep.subr.mxu0 0.0
    %3149 = vmatpush1.msra.mxu0 0.0
    %3150 = vmatprep.subr.mxu0 0.0
    %3151 = vmatpush1.msra.mxu0 0.0
    %3152 = vmatprep.subr.mxu0 0.0
    %3153 = vmatpush1.msra.mxu0 0.0
    %3154 = vmatprep.subr.mxu0 0.0
    %3155 = vmatpush1.msra.mxu0 0.0
    %3156 = vmatprep.subr.mxu0 0.0
    %3157 = vmatpush1.msra.mxu0 0.0
    %3158 = vmatprep.subr.mxu0 0.0
    %3159 = vmatpush1.msra.mxu0 0.0
    %3160 = vmatprep.subr.mxu0 0.0
    %3161 = vmatpush1.msra.mxu0 0.0
    %3162 = vmatprep.subr.mxu0 0.0
    %3163 = vmatpush1.msra.mxu0 0.0
    %3164 = vmatprep.subr.mxu0 0.0
    %3165 = vmatpush1.msra.mxu0 0.0
    %3166 = vmatprep.subr.mxu0 0.0
    %3167 = vmatpush1.msra.mxu0 0.0
    %3168 = vmatprep.subr.mxu0 0.0
    %3169 = vmatpush1.msra.mxu0 0.0
    %3170 = vmatprep.subr.mxu0 0.0
    %3171 = vmatpush1.msra.mxu0 0.0
    %3172 = vmatprep.subr.mxu0 0.0
    %3173 = vmatpush1.msra.mxu0 0.0
    %3174 = vmatprep.subr.mxu0 0.0
    %3175 = vmatpush1.msra.mxu0 0.0
    %3176 = vmatprep.subr.mxu0 0.0
    %3177 = vmatpush1.msra.mxu0 0.0
    %3178 = vmatprep.subr.mxu0 0.0
    %3179 = vmatpush1.msra.mxu0 0.0
    %3180 = vmatprep.subr.mxu0 0.0
    %3181 = vmatpush1.msra.mxu0 0.0
    %3182 = vmatprep.subr.mxu0 0.0
    %3183 = vmatpush1.msra.mxu0 0.0
    %3184 = vmatprep.subr.mxu0 0.0
    %3185 = vmatpush1.msra.mxu0 0.0
    %3186 = vmatprep.subr.mxu0 0.0
    %3187 = vmatpush1.msra.mxu0 0.0
    %3188 = vmatprep.subr.mxu0 0.0
    %3189 = vmatpush1.msra.mxu0 0.0
    %3190 = vmatprep.subr.mxu0 0.0
    %3191 = vmatpush1.msra.mxu0 0.0
    %3192 = vmatprep.mubr.f32.mxu0 0.0
    %3193 = vmatmul.mubr.f32.gmra.mrb[0].mxu0 %v3124
    %v3194 = vpop.f32.mrb[0].mxu0
    %v3195 = vadd.f32 %v3116, %v3194
    %v3196 = vpop.f32.mrb[0].mxu0
    %3197 = vmatprep.mubr.f32.mxu0 0.0
    %3198 = vmatmul.mubr.f32.gmra.mrb[0].mxu0 %v3126
    %v3199 = vpop.f32.mrb[0].mxu0
    %v3200 = vadd.f32 %v3116, %v3199
    %v3201 = vpop.f32.mrb[0].mxu0
    %3202 = vdwg.mxu0
    %v3203 = vld [vmem:[#allocation6] sm:$0x3]
    %v3204 = vsub.f32 1.0, %v3203
    %v3205 = vmul.f32 %v3204, -10000.0
    %v3208 = vunpack.c.l.s4 1966171168
    %v3209 = vunpack.c.0.s8 %v3208
    %v3210 = vlaneseq
    %v3211 = vshrl.u32 %v3210, 7
    %v3212 = vsub.s32 %v3209, %v3211
    %v3213 = vrot.slane %v3205, %v3212
    %v3214 = vcombine.high %v3213, %v3213
    %v3216 = vunpack.c.l.s4 1966171168
    %v3217 = vunpack.c.0.s8 %v3216
    %v3218 = vlaneseq
    %v3219 = vshrl.u32 %v3218, 7
    %v3220 = vsub.s32 %v3217, %v3219
    %v3221 = vrot.slane %v3213, %v3220
    %v3223 = vunpack.c.l.s4 1966171168
    %v3224 = vunpack.c.0.s8 %v3223
    %v3225 = vlaneseq
    %v3226 = vshrl.u32 %v3225, 7
    %v3227 = vsub.s32 %v3224, %v3226
    %v3228 = vrot.slane %v3214, %v3227
    %3230 = vrot.lane.b32.xlu0 %v3195, 96
    %v3231 = vpop.permute.xlu0 %3230
    %v3232 = vsel %vm353, %v3195, 0
    %v3234 = vsel %vm353, %v3231, 0
    %3236 = vmatprep.subr.mxu0 0.0
    %3237 = vmatpush1.xpose.msra.mxu0 %v3234
    %3238 = vmatprep.subr.mxu0 0.0
    %3239 = vmatpush1.xpose.msra.mxu0 0.0
    %3240 = vmatprep.subr.mxu0 0.0
    %3241 = vmatpush1.xpose.msra.mxu0 0.0
    %3242 = vmatprep.subr.mxu0 0.0
    %3243 = vmatpush1.xpose.msra.mxu0 0.0
    %3244 = vmatprep.subr.mxu0 0.0
    %3245 = vmatpush1.xpose.msra.mxu0 0.0
    %3246 = vmatprep.subr.mxu0 0.0
    %3247 = vmatpush1.xpose.msra.mxu0 0.0
    %3248 = vmatprep.subr.mxu0 0.0
    %3249 = vmatpush1.xpose.msra.mxu0 0.0
    %3250 = vmatprep.subr.mxu0 0.0
    %3251 = vmatpush1.xpose.msra.mxu0 0.0
    %3252 = vmatprep.subr.mxu0 0.0
    %3253 = vmatpush1.xpose.msra.mxu0 0.0
    %3254 = vmatprep.subr.mxu0 0.0
    %3255 = vmatpush1.xpose.msra.mxu0 0.0
    %3256 = vmatprep.subr.mxu0 0.0
    %3257 = vmatpush1.xpose.msra.mxu0 0.0
    %3258 = vmatprep.subr.mxu0 0.0
    %3259 = vmatpush1.xpose.msra.mxu0 0.0
    %3260 = vmatprep.subr.mxu0 0.0
    %3261 = vmatpush1.xpose.msra.mxu0 0.0
    %3262 = vmatprep.subr.mxu0 0.0
    %3263 = vmatpush1.xpose.msra.mxu0 0.0
    %3264 = vmatprep.subr.mxu0 0.0
    %3265 = vmatpush1.xpose.msra.mxu0 0.0
    %3266 = vmatprep.subr.mxu0 0.0
    %3267 = vmatpush1.xpose.msra.mxu0 0.0
    %3268 = vmatprep.subr.mxu0 0.0
    %3269 = vmatpush1.xpose.msra.mxu0 0.0
    %3270 = vmatprep.subr.mxu0 0.0
    %3271 = vmatpush1.xpose.msra.mxu0 0.0
    %3272 = vmatprep.subr.mxu0 0.0
    %3273 = vmatpush1.xpose.msra.mxu0 0.0
    %3274 = vmatprep.subr.mxu0 0.0
    %3275 = vmatpush1.xpose.msra.mxu0 0.0
    %3276 = vmatprep.subr.mxu0 0.0
    %3277 = vmatpush1.xpose.msra.mxu0 0.0
    %3278 = vmatprep.subr.mxu0 0.0
    %3279 = vmatpush1.xpose.msra.mxu0 0.0
    %3280 = vmatprep.subr.mxu0 0.0
    %3281 = vmatpush1.xpose.msra.mxu0 0.0
    %3282 = vmatprep.subr.mxu0 0.0
    %3283 = vmatpush1.xpose.msra.mxu0 0.0
    %3284 = vmatprep.subr.mxu0 0.0
    %3285 = vmatpush1.xpose.msra.mxu0 0.0
    %3286 = vmatprep.subr.mxu0 0.0
    %3287 = vmatpush1.xpose.msra.mxu0 0.0
    %3288 = vmatprep.subr.mxu0 0.0
    %3289 = vmatpush1.xpose.msra.mxu0 0.0
    %3290 = vmatprep.subr.mxu0 0.0
    %3291 = vmatpush1.xpose.msra.mxu0 0.0
    %3292 = vmatprep.subr.mxu0 0.0
    %3293 = vmatpush1.xpose.msra.mxu0 0.0
    %3294 = vmatprep.subr.mxu0 0.0
    %3295 = vmatpush1.xpose.msra.mxu0 0.0
    %3296 = vmatprep.subr.mxu0 0.0
    %3297 = vmatpush1.xpose.msra.mxu0 0.0
    %3298 = vmatprep.subr.mxu0 0.0
    %3299 = vmatpush1.xpose.msra.mxu0 0.0
    %3300 = vmatprep.mubr.f32.mxu0 0.0
    %3301 = vmatmul.mubr.f32.gmra.mrb[0].mxu0 %v3232
    %v3302 = vpop.f32.mrb[0].mxu0
    %v3303 = vadd.f32 0.0, %v3302
    %v3304 = vpop.f32.mrb[0].mxu0
    %3305 = vdwg.mxu0
    %3307 = vrot.lane.b32.xlu0 %v3200, 96
    %v3308 = vpop.permute.xlu0 %3307
    %v3309 = vsel %vm353, %v3200, 0
    %v3311 = vsel %vm353, %v3308, 0
    %3313 = vmatprep.subr.mxu0 0.0
    %3314 = vmatpush1.xpose.msra.mxu0 %v3311
    %3315 = vmatprep.subr.mxu0 0.0
    %3316 = vmatpush1.xpose.msra.mxu0 0.0
    %3317 = vmatprep.subr.mxu0 0.0
    %3318 = vmatpush1.xpose.msra.mxu0 0.0
    %3319 = vmatprep.subr.mxu0 0.0
    %3320 = vmatpush1.xpose.msra.mxu0 0.0
    %3321 = vmatprep.subr.mxu0 0.0
    %3322 = vmatpush1.xpose.msra.mxu0 0.0
    %3323 = vmatprep.subr.mxu0 0.0
    %3324 = vmatpush1.xpose.msra.mxu0 0.0
    %3325 = vmatprep.subr.mxu0 0.0
    %3326 = vmatpush1.xpose.msra.mxu0 0.0
    %3327 = vmatprep.subr.mxu0 0.0
    %3328 = vmatpush1.xpose.msra.mxu0 0.0
    %3329 = vmatprep.subr.mxu0 0.0
    %3330 = vmatpush1.xpose.msra.mxu0 0.0
    %3331 = vmatprep.subr.mxu0 0.0
    %3332 = vmatpush1.xpose.msra.mxu0 0.0
    %3333 = vmatprep.subr.mxu0 0.0
    %3334 = vmatpush1.xpose.msra.mxu0 0.0
    %3335 = vmatprep.subr.mxu0 0.0
    %3336 = vmatpush1.xpose.msra.mxu0 0.0
    %3337 = vmatprep.subr.mxu0 0.0
    %3338 = vmatpush1.xpose.msra.mxu0 0.0
    %3339 = vmatprep.subr.mxu0 0.0
    %3340 = vmatpush1.xpose.msra.mxu0 0.0
    %3341 = vmatprep.subr.mxu0 0.0
    %3342 = vmatpush1.xpose.msra.mxu0 0.0
    %3343 = vmatprep.subr.mxu0 0.0
    %3344 = vmatpush1.xpose.msra.mxu0 0.0
    %3345 = vmatprep.subr.mxu0 0.0
    %3346 = vmatpush1.xpose.msra.mxu0 0.0
    %3347 = vmatprep.subr.mxu0 0.0
    %3348 = vmatpush1.xpose.msra.mxu0 0.0
    %3349 = vmatprep.subr.mxu0 0.0
    %3350 = vmatpush1.xpose.msra.mxu0 0.0
    %3351 = vmatprep.subr.mxu0 0.0
    %3352 = vmatpush1.xpose.msra.mxu0 0.0
    %3353 = vmatprep.subr.mxu0 0.0
    %3354 = vmatpush1.xpose.msra.mxu0 0.0
    %3355 = vmatprep.subr.mxu0 0.0
    %3356 = vmatpush1.xpose.msra.mxu0 0.0
    %3357 = vmatprep.subr.mxu0 0.0
    %3358 = vmatpush1.xpose.msra.mxu0 0.0
    %3359 = vmatprep.subr.mxu0 0.0
    %3360 = vmatpush1.xpose.msra.mxu0 0.0
    %3361 = vmatprep.subr.mxu0 0.0
    %3362 = vmatpush1.xpose.msra.mxu0 0.0
    %3363 = vmatprep.subr.mxu0 0.0
    %3364 = vmatpush1.xpose.msra.mxu0 0.0
    %3365 = vmatprep.subr.mxu0 0.0
    %3366 = vmatpush1.xpose.msra.mxu0 0.0
    %3367 = vmatprep.subr.mxu0 0.0
    %3368 = vmatpush1.xpose.msra.mxu0 0.0
    %3369 = vmatprep.subr.mxu0 0.0
    %3370 = vmatpush1.xpose.msra.mxu0 0.0
    %3371 = vmatprep.subr.mxu0 0.0
    %3372 = vmatpush1.xpose.msra.mxu0 0.0
    %3373 = vmatprep.subr.mxu0 0.0
    %3374 = vmatpush1.xpose.msra.mxu0 0.0
    %3375 = vmatprep.subr.mxu0 0.0
    %3376 = vmatpush1.xpose.msra.mxu0 0.0
    %3377 = vmatprep.mubr.f32.mxu0 0.0
    %3378 = vmatmul.mubr.f32.gmra.mrb[0].mxu0 %v3309
    %v3379 = vpop.f32.mrb[0].mxu0
    %v3380 = vadd.f32 0.0, %v3379
    %v3381 = vpop.f32.mrb[0].mxu0
    %3382 = vdwg.mxu0
    %v3383 = vmul.f32 %v3303, 0.25
    %v3384 = vmul.f32 %v3380, 0.25
    %v3385 = vlaneseq
    %v3386 = vshrl.u32 %v3385, 7
    %v3387 = vsub.s32 0, %v3386
    %v3388 = vrot.slane %v3221, %v3387
    %v3389 = vlaneseq
    %v3390 = vshrl.u32 %v3389, 7
    %v3391 = vsub.s32 0, %v3390
    %v3392 = vrot.slane %v3228, %v3391
    %v3395 = vadd.f32 %v3383, %v3388
    %v3396 = vadd.f32 %v3384, %v3392
    %vm3397 = vcmask 64512
    %v3398 = vsel %vm3397, %v3395, -inf
    %3399 = vmax.xlane.f32.xlu0 %v3398
    %v3400 = vpop.xlane.xlu0 %3399
    %v3401 = vsel %vm3397, %v3396, -inf
    %3402 = vmax.xlane.f32.xlu0 %v3401
    %v3403 = vpop.xlane.xlu0 %3402
    %v3404 = vsub.f32 %v3395, %v3400
    %v3405 = vsub.f32 %v3396, %v3403
    %v3406 = vmul.f32 %v3404, 1.442695
    %v3407 = vpow.pop %v3406
    %v3408 = vmul.f32 %v3405, 1.442695
    %v3409 = vpow.pop %v3408
    %v3410 = vsel %vm3397, %v3407, 0.0
    %3411 = vadd.xlane.f32.xlu0 %v3410
    %v3412 = vpop.xlane.xlu0 %3411
    %v3413 = vsel %vm3397, %v3409, 0.0
    %3414 = vadd.xlane.f32.xlu0 %v3413
    %v3415 = vpop.xlane.xlu0 %3414
    %v3416 = vrcp.pop %v3412
    %v3417 = vrcp.pop %v3415
    %v3418 = vmul.f32 %v3407, %v3416
    %v3419 = vmul.f32 %v3409, %v3417
    %3420 = vrot.lane.b32.xlu0 %v3195, 64
    %v3421 = vpop.permute.xlu0 %3420
    %v3424 = vsel %vm3397, %v3418, 0
    %3426 = vmatprep.subr.mxu0 0.0
    %3427 = vmatpush1.msra.mxu0 %v3421
    %3428 = vmatprep.subr.mxu0 0.0
    %3429 = vmatpush1.msra.mxu0 0.0
    %3430 = vmatprep.subr.mxu0 0.0
    %3431 = vmatpush1.msra.mxu0 0.0
    %3432 = vmatprep.subr.mxu0 0.0
    %3433 = vmatpush1.msra.mxu0 0.0
    %3434 = vmatprep.subr.mxu0 0.0
    %3435 = vmatpush1.msra.mxu0 0.0
    %3436 = vmatprep.subr.mxu0 0.0
    %3437 = vmatpush1.msra.mxu0 0.0
    %3438 = vmatprep.subr.mxu0 0.0
    %3439 = vmatpush1.msra.mxu0 0.0
    %3440 = vmatprep.subr.mxu0 0.0
    %3441 = vmatpush1.msra.mxu0 0.0
    %3442 = vmatprep.subr.mxu0 0.0
    %3443 = vmatpush1.msra.mxu0 0.0
    %3444 = vmatprep.subr.mxu0 0.0
    %3445 = vmatpush1.msra.mxu0 0.0
    %3446 = vmatprep.subr.mxu0 0.0
    %3447 = vmatpush1.msra.mxu0 0.0
    %3448 = vmatprep.subr.mxu0 0.0
    %3449 = vmatpush1.msra.mxu0 0.0
    %3450 = vmatprep.subr.mxu0 0.0
    %3451 = vmatpush1.msra.mxu0 0.0
    %3452 = vmatprep.subr.mxu0 0.0
    %3453 = vmatpush1.msra.mxu0 0.0
    %3454 = vmatprep.subr.mxu0 0.0
    %3455 = vmatpush1.msra.mxu0 0.0
    %3456 = vmatprep.subr.mxu0 0.0
    %3457 = vmatpush1.msra.mxu0 0.0
    %3458 = vmatprep.subr.mxu0 0.0
    %3459 = vmatpush1.msra.mxu0 0.0
    %3460 = vmatprep.subr.mxu0 0.0
    %3461 = vmatpush1.msra.mxu0 0.0
    %3462 = vmatprep.subr.mxu0 0.0
    %3463 = vmatpush1.msra.mxu0 0.0
    %3464 = vmatprep.subr.mxu0 0.0
    %3465 = vmatpush1.msra.mxu0 0.0
    %3466 = vmatprep.subr.mxu0 0.0
    %3467 = vmatpush1.msra.mxu0 0.0
    %3468 = vmatprep.subr.mxu0 0.0
    %3469 = vmatpush1.msra.mxu0 0.0
    %3470 = vmatprep.subr.mxu0 0.0
    %3471 = vmatpush1.msra.mxu0 0.0
    %3472 = vmatprep.subr.mxu0 0.0
    %3473 = vmatpush1.msra.mxu0 0.0
    %3474 = vmatprep.subr.mxu0 0.0
    %3475 = vmatpush1.msra.mxu0 0.0
    %3476 = vmatprep.subr.mxu0 0.0
    %3477 = vmatpush1.msra.mxu0 0.0
    %3478 = vmatprep.subr.mxu0 0.0
    %3479 = vmatpush1.msra.mxu0 0.0
    %3480 = vmatprep.subr.mxu0 0.0
    %3481 = vmatpush1.msra.mxu0 0.0
    %3482 = vmatprep.subr.mxu0 0.0
    %3483 = vmatpush1.msra.mxu0 0.0
    %3484 = vmatprep.subr.mxu0 0.0
    %3485 = vmatpush1.msra.mxu0 0.0
    %3486 = vmatprep.subr.mxu0 0.0
    %3487 = vmatpush1.msra.mxu0 0.0
    %3488 = vmatprep.subr.mxu0 0.0
    %3489 = vmatpush1.msra.mxu0 0.0
    %3490 = vmatprep.mubr.f32.mxu0 0.0
    %3491 = vmatmul.mubr.f32.gmra.mrb[0].mxu0 %v3424
    %v3492 = vpop.f32.mrb[0].mxu0
    %v3493 = vadd.f32 0.0, %v3492
    %v3494 = vpop.f32.mrb[0].mxu0
    %3495 = vdwg.mxu0
    %3496 = vrot.lane.b32.xlu0 %v3200, 64
    %v3497 = vpop.permute.xlu0 %3496
    %v3500 = vsel %vm3397, %v3419, 0
    %3502 = vmatprep.subr.mxu0 0.0
    %3503 = vmatpush1.msra.mxu0 %v3497
    %3504 = vmatprep.subr.mxu0 0.0
    %3505 = vmatpush1.msra.mxu0 0.0
    %3506 = vmatprep.subr.mxu0 0.0
    %3507 = vmatpush1.msra.mxu0 0.0
    %3508 = vmatprep.subr.mxu0 0.0
    %3509 = vmatpush1.msra.mxu0 0.0
    %3510 = vmatprep.subr.mxu0 0.0
    %3511 = vmatpush1.msra.mxu0 0.0
    %3512 = vmatprep.subr.mxu0 0.0
    %3513 = vmatpush1.msra.mxu0 0.0
    %3514 = vmatprep.subr.mxu0 0.0
    %3515 = vmatpush1.msra.mxu0 0.0
    %3516 = vmatprep.subr.mxu0 0.0
    %3517 = vmatpush1.msra.mxu0 0.0
    %3518 = vmatprep.subr.mxu0 0.0
    %3519 = vmatpush1.msra.mxu0 0.0
    %3520 = vmatprep.subr.mxu0 0.0
    %3521 = vmatpush1.msra.mxu0 0.0
    %3522 = vmatprep.subr.mxu0 0.0
    %3523 = vmatpush1.msra.mxu0 0.0
    %3524 = vmatprep.subr.mxu0 0.0
    %3525 = vmatpush1.msra.mxu0 0.0
    %3526 = vmatprep.subr.mxu0 0.0
    %3527 = vmatpush1.msra.mxu0 0.0
    %3528 = vmatprep.subr.mxu0 0.0
    %3529 = vmatpush1.msra.mxu0 0.0
    %3530 = vmatprep.subr.mxu0 0.0
    %3531 = vmatpush1.msra.mxu0 0.0
    %3532 = vmatprep.subr.mxu0 0.0
    %3533 = vmatpush1.msra.mxu0 0.0
    %3534 = vmatprep.subr.mxu0 0.0
    %3535 = vmatpush1.msra.mxu0 0.0
    %3536 = vmatprep.subr.mxu0 0.0
    %3537 = vmatpush1.msra.mxu0 0.0
    %3538 = vmatprep.subr.mxu0 0.0
    %3539 = vmatpush1.msra.mxu0 0.0
    %3540 = vmatprep.subr.mxu0 0.0
    %3541 = vmatpush1.msra.mxu0 0.0
    %3542 = vmatprep.subr.mxu0 0.0
    %3543 = vmatpush1.msra.mxu0 0.0
    %3544 = vmatprep.subr.mxu0 0.0
    %3545 = vmatpush1.msra.mxu0 0.0
    %3546 = vmatprep.subr.mxu0 0.0
    %3547 = vmatpush1.msra.mxu0 0.0
    %3548 = vmatprep.subr.mxu0 0.0
    %3549 = vmatpush1.msra.mxu0 0.0
    %3550 = vmatprep.subr.mxu0 0.0
    %3551 = vmatpush1.msra.mxu0 0.0
    %3552 = vmatprep.subr.mxu0 0.0
    %3553 = vmatpush1.msra.mxu0 0.0
    %3554 = vmatprep.subr.mxu0 0.0
    %3555 = vmatpush1.msra.mxu0 0.0
    %3556 = vmatprep.subr.mxu0 0.0
    %3557 = vmatpush1.msra.mxu0 0.0
    %3558 = vmatprep.subr.mxu0 0.0
    %3559 = vmatpush1.msra.mxu0 0.0
    %3560 = vmatprep.subr.mxu0 0.0
    %3561 = vmatpush1.msra.mxu0 0.0
    %3562 = vmatprep.subr.mxu0 0.0
    %3563 = vmatpush1.msra.mxu0 0.0
    %3564 = vmatprep.subr.mxu0 0.0
    %3565 = vmatpush1.msra.mxu0 0.0
    %3566 = vmatprep.mubr.f32.mxu0 0.0
    %3567 = vmatmul.mubr.f32.gmra.mrb[0].mxu0 %v3500
    %v3568 = vpop.f32.mrb[0].mxu0
    %v3569 = vadd.f32 0.0, %v3568
    %v3570 = vpop.f32.mrb[0].mxu0
    %3571 = vdwg.mxu0
    %v3572 = vld [vmem:[%s16] sm:$0xff]
    %v3573 = vld [vmem:[%s16 + $0x8] sm:$0xff]
    %3574 = vrot.lane.b32.xlu0 %v3195, 112
    %v3575 = vpop.permute.xlu0 %3574
    %3576 = vrot.lane.b32.xlu0 %v3195, 80
    %v3577 = vpop.permute.xlu0 %3576
    %v3578 = vsel %vm353, %v3575, 0
    %v3580 = vsel %vm353, %v3577, 0
    %3582 = vmatprep.subr.mxu0 0.0
    %3583 = vmatpush1.xpose.msra.mxu0 %v3580
    %3584 = vmatprep.subr.mxu0 0.0
    %3585 = vmatpush1.xpose.msra.mxu0 0.0
    %3586 = vmatprep.subr.mxu0 0.0
    %3587 = vmatpush1.xpose.msra.mxu0 0.0
    %3588 = vmatprep.subr.mxu0 0.0
    %3589 = vmatpush1.xpose.msra.mxu0 0.0
    %3590 = vmatprep.subr.mxu0 0.0
    %3591 = vmatpush1.xpose.msra.mxu0 0.0
    %3592 = vmatprep.subr.mxu0 0.0
    %3593 = vmatpush1.xpose.msra.mxu0 0.0
    %3594 = vmatprep.subr.mxu0 0.0
    %3595 = vmatpush1.xpose.msra.mxu0 0.0
    %3596 = vmatprep.subr.mxu0 0.0
    %3597 = vmatpush1.xpose.msra.mxu0 0.0
    %3598 = vmatprep.subr.mxu0 0.0
    %3599 = vmatpush1.xpose.msra.mxu0 0.0
    %3600 = vmatprep.subr.mxu0 0.0
    %3601 = vmatpush1.xpose.msra.mxu0 0.0
    %3602 = vmatprep.subr.mxu0 0.0
    %3603 = vmatpush1.xpose.msra.mxu0 0.0
    %3604 = vmatprep.subr.mxu0 0.0
    %3605 = vmatpush1.xpose.msra.mxu0 0.0
    %3606 = vmatprep.subr.mxu0 0.0
    %3607 = vmatpush1.xpose.msra.mxu0 0.0
    %3608 = vmatprep.subr.mxu0 0.0
    %3609 = vmatpush1.xpose.msra.mxu0 0.0
    %3610 = vmatprep.subr.mxu0 0.0
    %3611 = vmatpush1.xpose.msra.mxu0 0.0
    %3612 = vmatprep.subr.mxu0 0.0
    %3613 = vmatpush1.xpose.msra.mxu0 0.0
    %3614 = vmatprep.subr.mxu0 0.0
    %3615 = vmatpush1.xpose.msra.mxu0 0.0
    %3616 = vmatprep.subr.mxu0 0.0
    %3617 = vmatpush1.xpose.msra.mxu0 0.0
    %3618 = vmatprep.subr.mxu0 0.0
    %3619 = vmatpush1.xpose.msra.mxu0 0.0
    %3620 = vmatprep.subr.mxu0 0.0
    %3621 = vmatpush1.xpose.msra.mxu0 0.0
    %3622 = vmatprep.subr.mxu0 0.0
    %3623 = vmatpush1.xpose.msra.mxu0 0.0
    %3624 = vmatprep.subr.mxu0 0.0
    %3625 = vmatpush1.xpose.msra.mxu0 0.0
    %3626 = vmatprep.subr.mxu0 0.0
    %3627 = vmatpush1.xpose.msra.mxu0 0.0
    %3628 = vmatprep.subr.mxu0 0.0
    %3629 = vmatpush1.xpose.msra.mxu0 0.0
    %3630 = vmatprep.subr.mxu0 0.0
    %3631 = vmatpush1.xpose.msra.mxu0 0.0
    %3632 = vmatprep.subr.mxu0 0.0
    %3633 = vmatpush1.xpose.msra.mxu0 0.0
    %3634 = vmatprep.subr.mxu0 0.0
    %3635 = vmatpush1.xpose.msra.mxu0 0.0
    %3636 = vmatprep.subr.mxu0 0.0
    %3637 = vmatpush1.xpose.msra.mxu0 0.0
    %3638 = vmatprep.subr.mxu0 0.0
    %3639 = vmatpush1.xpose.msra.mxu0 0.0
    %3640 = vmatprep.subr.mxu0 0.0
    %3641 = vmatpush1.xpose.msra.mxu0 0.0
    %3642 = vmatprep.subr.mxu0 0.0
    %3643 = vmatpush1.xpose.msra.mxu0 0.0
    %3644 = vmatprep.subr.mxu0 0.0
    %3645 = vmatpush1.xpose.msra.mxu0 0.0
    %3646 = vmatprep.mubr.f32.mxu0 0.0
    %3647 = vmatmul.mubr.f32.gmra.mrb[0].mxu0 %v3578
    %v3648 = vpop.f32.mrb[0].mxu0
    %v3649 = vadd.f32 0.0, %v3648
    %v3650 = vpop.f32.mrb[0].mxu0
    %3651 = vdwg.mxu0
    %3652 = vrot.lane.b32.xlu0 %v3200, 112
    %v3653 = vpop.permute.xlu0 %3652
    %3654 = vrot.lane.b32.xlu0 %v3200, 80
    %v3655 = vpop.permute.xlu0 %3654
    %v3656 = vsel %vm353, %v3653, 0
    %v3658 = vsel %vm353, %v3655, 0
    %3660 = vmatprep.subr.mxu0 0.0
    %3661 = vmatpush1.xpose.msra.mxu0 %v3658
    %3662 = vmatprep.subr.mxu0 0.0
    %3663 = vmatpush1.xpose.msra.mxu0 0.0
    %3664 = vmatprep.subr.mxu0 0.0
    %3665 = vmatpush1.xpose.msra.mxu0 0.0
    %3666 = vmatprep.subr.mxu0 0.0
    %3667 = vmatpush1.xpose.msra.mxu0 0.0
    %3668 = vmatprep.subr.mxu0 0.0
    %3669 = vmatpush1.xpose.msra.mxu0 0.0
    %3670 = vmatprep.subr.mxu0 0.0
    %3671 = vmatpush1.xpose.msra.mxu0 0.0
    %3672 = vmatprep.subr.mxu0 0.0
    %3673 = vmatpush1.xpose.msra.mxu0 0.0
    %3674 = vmatprep.subr.mxu0 0.0
    %3675 = vmatpush1.xpose.msra.mxu0 0.0
    %3676 = vmatprep.subr.mxu0 0.0
    %3677 = vmatpush1.xpose.msra.mxu0 0.0
    %3678 = vmatprep.subr.mxu0 0.0
    %3679 = vmatpush1.xpose.msra.mxu0 0.0
    %3680 = vmatprep.subr.mxu0 0.0
    %3681 = vmatpush1.xpose.msra.mxu0 0.0
    %3682 = vmatprep.subr.mxu0 0.0
    %3683 = vmatpush1.xpose.msra.mxu0 0.0
    %3684 = vmatprep.subr.mxu0 0.0
    %3685 = vmatpush1.xpose.msra.mxu0 0.0
    %3686 = vmatprep.subr.mxu0 0.0
    %3687 = vmatpush1.xpose.msra.mxu0 0.0
    %3688 = vmatprep.subr.mxu0 0.0
    %3689 = vmatpush1.xpose.msra.mxu0 0.0
    %3690 = vmatprep.subr.mxu0 0.0
    %3691 = vmatpush1.xpose.msra.mxu0 0.0
    %3692 = vmatprep.subr.mxu0 0.0
    %3693 = vmatpush1.xpose.msra.mxu0 0.0
    %3694 = vmatprep.subr.mxu0 0.0
    %3695 = vmatpush1.xpose.msra.mxu0 0.0
    %3696 = vmatprep.subr.mxu0 0.0
    %3697 = vmatpush1.xpose.msra.mxu0 0.0
    %3698 = vmatprep.subr.mxu0 0.0
    %3699 = vmatpush1.xpose.msra.mxu0 0.0
    %3700 = vmatprep.subr.mxu0 0.0
    %3701 = vmatpush1.xpose.msra.mxu0 0.0
    %3702 = vmatprep.subr.mxu0 0.0
    %3703 = vmatpush1.xpose.msra.mxu0 0.0
    %3704 = vmatprep.subr.mxu0 0.0
    %3705 = vmatpush1.xpose.msra.mxu0 0.0
    %3706 = vmatprep.subr.mxu0 0.0
    %3707 = vmatpush1.xpose.msra.mxu0 0.0
    %3708 = vmatprep.subr.mxu0 0.0
    %3709 = vmatpush1.xpose.msra.mxu0 0.0
    %3710 = vmatprep.subr.mxu0 0.0
    %3711 = vmatpush1.xpose.msra.mxu0 0.0
    %3712 = vmatprep.subr.mxu0 0.0
    %3713 = vmatpush1.xpose.msra.mxu0 0.0
    %3714 = vmatprep.subr.mxu0 0.0
    %3715 = vmatpush1.xpose.msra.mxu0 0.0
    %3716 = vmatprep.subr.mxu0 0.0
    %3717 = vmatpush1.xpose.msra.mxu0 0.0
    %3718 = vmatprep.subr.mxu0 0.0
    %3719 = vmatpush1.xpose.msra.mxu0 0.0
    %3720 = vmatprep.subr.mxu0 0.0
    %3721 = vmatpush1.xpose.msra.mxu0 0.0
    %3722 = vmatprep.subr.mxu0 0.0
    %3723 = vmatpush1.xpose.msra.mxu0 0.0
    %3724 = vmatprep.mubr.f32.mxu0 0.0
    %3725 = vmatmul.mubr.f32.gmra.mrb[0].mxu0 %v3656
    %v3726 = vpop.f32.mrb[0].mxu0
    %v3727 = vadd.f32 0.0, %v3726
    %v3728 = vpop.f32.mrb[0].mxu0
    %3729 = vdwg.mxu0
    %v3730 = vmul.f32 %v3649, 0.25
    %v3731 = vmul.f32 %v3727, 0.25
    %v3732 = vadd.f32 %v3730, %v3388
    %v3733 = vadd.f32 %v3731, %v3392
    %v3734 = vsel %vm3397, %v3732, -inf
    %3735 = vmax.xlane.f32.xlu0 %v3734
    %v3736 = vpop.xlane.xlu0 %3735
    %v3737 = vsel %vm3397, %v3733, -inf
    %3738 = vmax.xlane.f32.xlu0 %v3737
    %v3739 = vpop.xlane.xlu0 %3738
    %v3740 = vsub.f32 %v3732, %v3736
    %v3741 = vsub.f32 %v3733, %v3739
    %v3742 = vmul.f32 %v3740, 1.442695
    %v3743 = vpow.pop %v3742
    %v3744 = vmul.f32 %v3741, 1.442695
    %v3745 = vpow.pop %v3744
    %v3746 = vsel %vm3397, %v3743, 0.0
    %3747 = vadd.xlane.f32.xlu0 %v3746
    %v3748 = vpop.xlane.xlu0 %3747
    %v3749 = vsel %vm3397, %v3745, 0.0
    %3750 = vadd.xlane.f32.xlu0 %v3749
    %v3751 = vpop.xlane.xlu0 %3750
    %v3752 = vrcp.pop %v3748
    %v3753 = vrcp.pop %v3751
    %v3754 = vmul.f32 %v3743, %v3752
    %v3755 = vmul.f32 %v3745, %v3753
    %3756 = vrot.lane.b32.xlu0 %v3195, 48
    %v3757 = vpop.permute.xlu0 %3756
    %v3760 = vsel %vm3397, %v3754, 0
    %3762 = vmatprep.subr.mxu0 0.0
    %3763 = vmatpush1.msra.mxu0 %v3757
    %3764 = vmatprep.subr.mxu0 0.0
    %3765 = vmatpush1.msra.mxu0 0.0
    %3766 = vmatprep.subr.mxu0 0.0
    %3767 = vmatpush1.msra.mxu0 0.0
    %3768 = vmatprep.subr.mxu0 0.0
    %3769 = vmatpush1.msra.mxu0 0.0
    %3770 = vmatprep.subr.mxu0 0.0
    %3771 = vmatpush1.msra.mxu0 0.0
    %3772 = vmatprep.subr.mxu0 0.0
    %3773 = vmatpush1.msra.mxu0 0.0
    %3774 = vmatprep.subr.mxu0 0.0
    %3775 = vmatpush1.msra.mxu0 0.0
    %3776 = vmatprep.subr.mxu0 0.0
    %3777 = vmatpush1.msra.mxu0 0.0
    %3778 = vmatprep.subr.mxu0 0.0
    %3779 = vmatpush1.msra.mxu0 0.0
    %3780 = vmatprep.subr.mxu0 0.0
    %3781 = vmatpush1.msra.mxu0 0.0
    %3782 = vmatprep.subr.mxu0 0.0
    %3783 = vmatpush1.msra.mxu0 0.0
    %3784 = vmatprep.subr.mxu0 0.0
    %3785 = vmatpush1.msra.mxu0 0.0
    %3786 = vmatprep.subr.mxu0 0.0
    %3787 = vmatpush1.msra.mxu0 0.0
    %3788 = vmatprep.subr.mxu0 0.0
    %3789 = vmatpush1.msra.mxu0 0.0
    %3790 = vmatprep.subr.mxu0 0.0
    %3791 = vmatpush1.msra.mxu0 0.0
    %3792 = vmatprep.subr.mxu0 0.0
    %3793 = vmatpush1.msra.mxu0 0.0
    %3794 = vmatprep.subr.mxu0 0.0
    %3795 = vmatpush1.msra.mxu0 0.0
    %3796 = vmatprep.subr.mxu0 0.0
    %3797 = vmatpush1.msra.mxu0 0.0
    %3798 = vmatprep.subr.mxu0 0.0
    %3799 = vmatpush1.msra.mxu0 0.0
    %3800 = vmatprep.subr.mxu0 0.0
    %3801 = vmatpush1.msra.mxu0 0.0
    %3802 = vmatprep.subr.mxu0 0.0
    %3803 = vmatpush1.msra.mxu0 0.0
    %3804 = vmatprep.subr.mxu0 0.0
    %3805 = vmatpush1.msra.mxu0 0.0
    %3806 = vmatprep.subr.mxu0 0.0
    %3807 = vmatpush1.msra.mxu0 0.0
    %3808 = vmatprep.subr.mxu0 0.0
    %3809 = vmatpush1.msra.mxu0 0.0
    %3810 = vmatprep.subr.mxu0 0.0
    %3811 = vmatpush1.msra.mxu0 0.0
    %3812 = vmatprep.subr.mxu0 0.0
    %3813 = vmatpush1.msra.mxu0 0.0
    %3814 = vmatprep.subr.mxu0 0.0
    %3815 = vmatpush1.msra.mxu0 0.0
    %3816 = vmatprep.subr.mxu0 0.0
    %3817 = vmatpush1.msra.mxu0 0.0
    %3818 = vmatprep.subr.mxu0 0.0
    %3819 = vmatpush1.msra.mxu0 0.0
    %3820 = vmatprep.subr.mxu0 0.0
    %3821 = vmatpush1.msra.mxu0 0.0
    %3822 = vmatprep.subr.mxu0 0.0
    %3823 = vmatpush1.msra.mxu0 0.0
    %3824 = vmatprep.subr.mxu0 0.0
    %3825 = vmatpush1.msra.mxu0 0.0
    %3826 = vmatprep.mubr.f32.mxu0 0.0
    %3827 = vmatmul.mubr.f32.gmra.mrb[0].mxu0 %v3760
    %v3828 = vpop.f32.mrb[0].mxu0
    %v3829 = vadd.f32 0.0, %v3828
    %v3830 = vpop.f32.mrb[0].mxu0
    %3831 = vdwg.mxu0
    %3832 = vrot.lane.b32.xlu0 %v3200, 48
    %v3833 = vpop.permute.xlu0 %3832
    %v3836 = vsel %vm3397, %v3755, 0
    %3838 = vmatprep.subr.mxu0 0.0
    %3839 = vmatpush1.msra.mxu0 %v3833
    %3840 = vmatprep.subr.mxu0 0.0
    %3841 = vmatpush1.msra.mxu0 0.0
    %3842 = vmatprep.subr.mxu0 0.0
    %3843 = vmatpush1.msra.mxu0 0.0
    %3844 = vmatprep.subr.mxu0 0.0
    %3845 = vmatpush1.msra.mxu0 0.0
    %3846 = vmatprep.subr.mxu0 0.0
    %3847 = vmatpush1.msra.mxu0 0.0
    %3848 = vmatprep.subr.mxu0 0.0
    %3849 = vmatpush1.msra.mxu0 0.0
    %3850 = vmatprep.subr.mxu0 0.0
    %3851 = vmatpush1.msra.mxu0 0.0
    %3852 = vmatprep.subr.mxu0 0.0
    %3853 = vmatpush1.msra.mxu0 0.0
    %3854 = vmatprep.subr.mxu0 0.0
    %3855 = vmatpush1.msra.mxu0 0.0
    %3856 = vmatprep.subr.mxu0 0.0
    %3857 = vmatpush1.msra.mxu0 0.0
    %3858 = vmatprep.subr.mxu0 0.0
    %3859 = vmatpush1.msra.mxu0 0.0
    %3860 = vmatprep.subr.mxu0 0.0
    %3861 = vmatpush1.msra.mxu0 0.0
    %3862 = vmatprep.subr.mxu0 0.0
    %3863 = vmatpush1.msra.mxu0 0.0
    %3864 = vmatprep.subr.mxu0 0.0
    %3865 = vmatpush1.msra.mxu0 0.0
    %3866 = vmatprep.subr.mxu0 0.0
    %3867 = vmatpush1.msra.mxu0 0.0
    %3868 = vmatprep.subr.mxu0 0.0
    %3869 = vmatpush1.msra.mxu0 0.0
    %3870 = vmatprep.subr.mxu0 0.0
    %3871 = vmatpush1.msra.mxu0 0.0
    %3872 = vmatprep.subr.mxu0 0.0
    %3873 = vmatpush1.msra.mxu0 0.0
    %3874 = vmatprep.subr.mxu0 0.0
    %3875 = vmatpush1.msra.mxu0 0.0
    %3876 = vmatprep.subr.mxu0 0.0
    %3877 = vmatpush1.msra.mxu0 0.0
    %3878 = vmatprep.subr.mxu0 0.0
    %3879 = vmatpush1.msra.mxu0 0.0
    %3880 = vmatprep.subr.mxu0 0.0
    %3881 = vmatpush1.msra.mxu0 0.0
    %3882 = vmatprep.subr.mxu0 0.0
    %3883 = vmatpush1.msra.mxu0 0.0
    %3884 = vmatprep.subr.mxu0 0.0
    %3885 = vmatpush1.msra.mxu0 0.0
    %3886 = vmatprep.subr.mxu0 0.0
    %3887 = vmatpush1.msra.mxu0 0.0
    %3888 = vmatprep.subr.mxu0 0.0
    %3889 = vmatpush1.msra.mxu0 0.0
    %3890 = vmatprep.subr.mxu0 0.0
    %3891 = vmatpush1.msra.mxu0 0.0
    %3892 = vmatprep.subr.mxu0 0.0
    %3893 = vmatpush1.msra.mxu0 0.0
    %3894 = vmatprep.subr.mxu0 0.0
    %3895 = vmatpush1.msra.mxu0 0.0
    %3896 = vmatprep.subr.mxu0 0.0
    %3897 = vmatpush1.msra.mxu0 0.0
    %3898 = vmatprep.subr.mxu0 0.0
    %3899 = vmatpush1.msra.mxu0 0.0
    %3900 = vmatprep.subr.mxu0 0.0
    %3901 = vmatpush1.msra.mxu0 0.0
    %3902 = vmatprep.mubr.f32.mxu0 0.0
    %3903 = vmatmul.mubr.f32.gmra.mrb[0].mxu0 %v3836
    %v3904 = vpop.f32.mrb[0].mxu0
    %v3905 = vadd.f32 0.0, %v3904
    %v3906 = vpop.f32.mrb[0].mxu0
    %3907 = vdwg.mxu0
    %v3908 = vld [vmem:[%s16 + $0x10] sm:$0xff]
    %v3909 = vld [vmem:[%s16 + $0x18] sm:$0xff]
    %v3911 = vsel %vm353, %v3829, 0
    %v3914 = vsel %vm353, %v3905, 0
    %3916 = vmatprep.subr.mxu0 0.0
    %3917 = vmatpush1.msra.mxu0 %v3908
    %3918 = vmatprep.subr.mxu0 0.0
    %3919 = vmatpush1.msra.mxu0 %v3909
    %3920 = vmatprep.subr.mxu0 0.0
    %3921 = vmatpush1.msra.mxu0 0.0
    %3922 = vmatprep.subr.mxu0 0.0
    %3923 = vmatpush1.msra.mxu0 0.0
    %3924 = vmatprep.subr.mxu0 0.0
    %3925 = vmatpush1.msra.mxu0 0.0
    %3926 = vmatprep.subr.mxu0 0.0
    %3927 = vmatpush1.msra.mxu0 0.0
    %3928 = vmatprep.subr.mxu0 0.0
    %3929 = vmatpush1.msra.mxu0 0.0
    %3930 = vmatprep.subr.mxu0 0.0
    %3931 = vmatpush1.msra.mxu0 0.0
    %3932 = vmatprep.subr.mxu0 0.0
    %3933 = vmatpush1.msra.mxu0 0.0
    %3934 = vmatprep.subr.mxu0 0.0
    %3935 = vmatpush1.msra.mxu0 0.0
    %3936 = vmatprep.subr.mxu0 0.0
    %3937 = vmatpush1.msra.mxu0 0.0
    %3938 = vmatprep.subr.mxu0 0.0
    %3939 = vmatpush1.msra.mxu0 0.0
    %3940 = vmatprep.subr.mxu0 0.0
    %3941 = vmatpush1.msra.mxu0 0.0
    %3942 = vmatprep.subr.mxu0 0.0
    %3943 = vmatpush1.msra.mxu0 0.0
    %3944 = vmatprep.subr.mxu0 0.0
    %3945 = vmatpush1.msra.mxu0 0.0
    %3946 = vmatprep.subr.mxu0 0.0
    %3947 = vmatpush1.msra.mxu0 0.0
    %3948 = vmatprep.subr.mxu0 0.0
    %3949 = vmatpush1.msra.mxu0 0.0
    %3950 = vmatprep.subr.mxu0 0.0
    %3951 = vmatpush1.msra.mxu0 0.0
    %3952 = vmatprep.subr.mxu0 0.0
    %3953 = vmatpush1.msra.mxu0 0.0
    %3954 = vmatprep.subr.mxu0 0.0
    %3955 = vmatpush1.msra.mxu0 0.0
    %3956 = vmatprep.subr.mxu0 0.0
    %3957 = vmatpush1.msra.mxu0 0.0
    %3958 = vmatprep.subr.mxu0 0.0
    %3959 = vmatpush1.msra.mxu0 0.0
    %3960 = vmatprep.subr.mxu0 0.0
    %3961 = vmatpush1.msra.mxu0 0.0
    %3962 = vmatprep.subr.mxu0 0.0
    %3963 = vmatpush1.msra.mxu0 0.0
    %3964 = vmatprep.subr.mxu0 0.0
    %3965 = vmatpush1.msra.mxu0 0.0
    %3966 = vmatprep.subr.mxu0 0.0
    %3967 = vmatpush1.msra.mxu0 0.0
    %3968 = vmatprep.subr.mxu0 0.0
    %3969 = vmatpush1.msra.mxu0 0.0
    %3970 = vmatprep.subr.mxu0 0.0
    %3971 = vmatpush1.msra.mxu0 0.0
    %3972 = vmatprep.subr.mxu0 0.0
    %3973 = vmatpush1.msra.mxu0 0.0
    %3974 = vmatprep.subr.mxu0 0.0
    %3975 = vmatpush1.msra.mxu0 0.0
    %3976 = vmatprep.subr.mxu0 0.0
    %3977 = vmatpush1.msra.mxu0 0.0
    %3978 = vmatprep.subr.mxu0 0.0
    %3979 = vmatpush1.msra.mxu0 0.0
    %3980 = vmatprep.mubr.f32.mxu0 0.0
    %3981 = vmatmul.mubr.f32.gmra.mrb[0].mxu0 %v3911
    %v3982 = vpop.f32.mrb[0].mxu0
    %v3983 = vadd.f32 0.0, %v3982
    %v3984 = vpop.f32.mrb[0].mxu0
    %3985 = vmatprep.mubr.f32.mxu0 0.0
    %3986 = vmatmul.mubr.f32.gmra.mrb[0].mxu0 %v3914
    %v3987 = vpop.f32.mrb[0].mxu0
    %v3988 = vadd.f32 0.0, %v3987
    %v3989 = vpop.f32.mrb[0].mxu0
    %3990 = vdwg.mxu0
    %v3992 = vsel %vm353, %v3493, 0
    %v3995 = vsel %vm353, %v3569, 0
    %3997 = vmatprep.subr.mxu0 0.0
    %3998 = vmatpush1.msra.mxu0 %v3572
    %3999 = vmatprep.subr.mxu0 0.0
    %4000 = vmatpush1.msra.mxu0 %v3573
    %4001 = vmatprep.subr.mxu0 0.0
    %4002 = vmatpush1.msra.mxu0 0.0
    %4003 = vmatprep.subr.mxu0 0.0
    %4004 = vmatpush1.msra.mxu0 0.0
    %4005 = vmatprep.subr.mxu0 0.0
    %4006 = vmatpush1.msra.mxu0 0.0
    %4007 = vmatprep.subr.mxu0 0.0
    %4008 = vmatpush1.msra.mxu0 0.0
    %4009 = vmatprep.subr.mxu0 0.0
    %4010 = vmatpush1.msra.mxu0 0.0
    %4011 = vmatprep.subr.mxu0 0.0
    %4012 = vmatpush1.msra.mxu0 0.0
    %4013 = vmatprep.subr.mxu0 0.0
    %4014 = vmatpush1.msra.mxu0 0.0
    %4015 = vmatprep.subr.mxu0 0.0
    %4016 = vmatpush1.msra.mxu0 0.0
    %4017 = vmatprep.subr.mxu0 0.0
    %4018 = vmatpush1.msra.mxu0 0.0
    %4019 = vmatprep.subr.mxu0 0.0
    %4020 = vmatpush1.msra.mxu0 0.0
    %4021 = vmatprep.subr.mxu0 0.0
    %4022 = vmatpush1.msra.mxu0 0.0
    %4023 = vmatprep.subr.mxu0 0.0
    %4024 = vmatpush1.msra.mxu0 0.0
    %4025 = vmatprep.subr.mxu0 0.0
    %4026 = vmatpush1.msra.mxu0 0.0
    %4027 = vmatprep.subr.mxu0 0.0
    %4028 = vmatpush1.msra.mxu0 0.0
    %4029 = vmatprep.subr.mxu0 0.0
    %4030 = vmatpush1.msra.mxu0 0.0
    %4031 = vmatprep.subr.mxu0 0.0
    %4032 = vmatpush1.msra.mxu0 0.0
    %4033 = vmatprep.subr.mxu0 0.0
    %4034 = vmatpush1.msra.mxu0 0.0
    %4035 = vmatprep.subr.mxu0 0.0
    %4036 = vmatpush1.msra.mxu0 0.0
    %4037 = vmatprep.subr.mxu0 0.0
    %4038 = vmatpush1.msra.mxu0 0.0
    %4039 = vmatprep.subr.mxu0 0.0
    %4040 = vmatpush1.msra.mxu0 0.0
    %4041 = vmatprep.subr.mxu0 0.0
    %4042 = vmatpush1.msra.mxu0 0.0
    %4043 = vmatprep.subr.mxu0 0.0
    %4044 = vmatpush1.msra.mxu0 0.0
    %4045 = vmatprep.subr.mxu0 0.0
    %4046 = vmatpush1.msra.mxu0 0.0
    %4047 = vmatprep.subr.mxu0 0.0
    %4048 = vmatpush1.msra.mxu0 0.0
    %4049 = vmatprep.subr.mxu0 0.0
    %4050 = vmatpush1.msra.mxu0 0.0
    %4051 = vmatprep.subr.mxu0 0.0
    %4052 = vmatpush1.msra.mxu0 0.0
    %4053 = vmatprep.subr.mxu0 0.0
    %4054 = vmatpush1.msra.mxu0 0.0
    %4055 = vmatprep.subr.mxu0 0.0
    %4056 = vmatpush1.msra.mxu0 0.0
    %4057 = vmatprep.subr.mxu0 0.0
    %4058 = vmatpush1.msra.mxu0 0.0
    %4059 = vmatprep.subr.mxu0 0.0
    %4060 = vmatpush1.msra.mxu0 0.0
    %4061 = vmatprep.mubr.f32.mxu0 0.0
    %4062 = vmatmul.mubr.f32.gmra.mrb[0].mxu0 %v3992
    %v4063 = vpop.f32.mrb[0].mxu0
    %v4064 = vadd.f32 %v3983, %v4063
    %v4065 = vpop.f32.mrb[0].mxu0
    %4066 = vmatprep.mubr.f32.mxu0 0.0
    %4067 = vmatmul.mubr.f32.gmra.mrb[0].mxu0 %v3995
    %v4068 = vpop.f32.mrb[0].mxu0
    %v4069 = vadd.f32 %v3988, %v4068
    %v4070 = vpop.f32.mrb[0].mxu0
    %4071 = vdwg.mxu0
    %v4072 = vld [vmem:[%s17] sm:$0x1]
    %v4074 = vlaneseq
    %v4075 = vshrl.u32 %v4074, 7
    %v4076 = vsub.s32 0, %v4075
    %v4077 = vrot.slane %v4072, %v4076
    %v4079 = vadd.f32 %v4064, %v4077
    %v4080 = vadd.f32 %v4069, %v4077
    %v4083 = vadd.f32 %v4079, %v3121
    %v4084 = vadd.f32 %v4080, %v3123
    %v4085 = vld [vmem:[%s18] sm:$0x1]
    %v4086 = vld [vmem:[%s19] sm:$0x1]
    %v4087 = vsel %vm564, %v4083, 0.0
    %4088 = vadd.xlane.f32.xlu0 %v4087
    %v4089 = vpop.xlane.xlu0 %4088
    %v4090 = vsel %vm564, %v4084, 0.0
    %4091 = vadd.xlane.f32.xlu0 %v4090
    %v4092 = vpop.xlane.xlu0 %4091
    %v4093 = vrcp.pop 32.0
    %v4094 = vmul.f32 %v4089, %v4093
    %v4095 = vmul.f32 %v4092, %v4093
    %v4096 = vsub.f32 %v4083, %v4094
    %v4097 = vsub.f32 %v4084, %v4095
    %v4098 = vmul.f32 %v4096, %v4096
    %v4099 = vmul.f32 %v4097, %v4097
    %v4100 = vsel %vm564, %v4098, 0.0
    %4101 = vadd.xlane.f32.xlu0 %v4100
    %v4102 = vpop.xlane.xlu0 %4101
    %v4103 = vsel %vm564, %v4099, 0.0
    %4104 = vadd.xlane.f32.xlu0 %v4103
    %v4105 = vpop.xlane.xlu0 %4104
    %v4106 = vmul.f32 %v4102, %v4093
    %v4107 = vmul.f32 %v4105, %v4093
    %v4108 = vadd.f32 %v4106, 1e-12
    %v4109 = vadd.f32 %v4107, 1e-12
    %v4110 = vrsqrt.pop %v4108
    %v4111 = vrsqrt.pop %v4109
    %v4112 = vmul.f32 %v4096, %v4110
    %v4113 = vmul.f32 %v4097, %v4111
    %v4115 = vlaneseq
    %v4116 = vshrl.u32 %v4115, 7
    %v4117 = vsub.s32 0, %v4116
    %v4118 = vrot.slane %v4085, %v4117
    %v4120 = vmul.f32 %v4112, %v4118
    %v4121 = vmul.f32 %v4113, %v4118
    %v4123 = vlaneseq
    %v4124 = vshrl.u32 %v4123, 7
    %v4125 = vsub.s32 0, %v4124
    %v4126 = vrot.slane %v4086, %v4125
    %v4128 = vadd.f32 %v4120, %v4126
    %v4129 = vadd.f32 %v4121, %v4126
    %v4130 = vld [vmem:[#allocation21] sm:$0xff]
    %v4131 = vld [vmem:[#allocation21 + $0x8] sm:$0xff]
    %v4132 = vld [vmem:[#allocation21 + $0x10] sm:$0xff]
    %v4133 = vld [vmem:[#allocation21 + $0x18] sm:$0xff]
    %v4134 = vld [vmem:[%s21] sm:$0x1]
    %v4136 = vlaneseq
    %v4137 = vshrl.u32 %v4136, 7
    %v4138 = vsub.s32 0, %v4137
    %v4139 = vrot.slane %v4134, %v4138
    %v4142 = vsel %vm564, %v4128, 0
    %v4145 = vsel %vm564, %v4129, 0
    %4147 = vmatprep.subr.mxu0 0.0
    %4148 = vmatpush1.msra.mxu0 %v4130
    %4149 = vmatprep.subr.mxu0 0.0
    %4150 = vmatpush1.msra.mxu0 %v4131
    %4151 = vmatprep.subr.mxu0 0.0
    %4152 = vmatpush1.msra.mxu0 %v4132
    %4153 = vmatprep.subr.mxu0 0.0
    %4154 = vmatpush1.msra.mxu0 %v4133
    %4155 = vmatprep.subr.mxu0 0.0
    %4156 = vmatpush1.msra.mxu0 0.0
    %4157 = vmatprep.subr.mxu0 0.0
    %4158 = vmatpush1.msra.mxu0 0.0
    %4159 = vmatprep.subr.mxu0 0.0
    %4160 = vmatpush1.msra.mxu0 0.0
    %4161 = vmatprep.subr.mxu0 0.0
    %4162 = vmatpush1.msra.mxu0 0.0
    %4163 = vmatprep.subr.mxu0 0.0
    %4164 = vmatpush1.msra.mxu0 0.0
    %4165 = vmatprep.subr.mxu0 0.0
    %4166 = vmatpush1.msra.mxu0 0.0
    %4167 = vmatprep.subr.mxu0 0.0
    %4168 = vmatpush1.msra.mxu0 0.0
    %4169 = vmatprep.subr.mxu0 0.0
    %4170 = vmatpush1.msra.mxu0 0.0
    %4171 = vmatprep.subr.mxu0 0.0
    %4172 = vmatpush1.msra.mxu0 0.0
    %4173 = vmatprep.subr.mxu0 0.0
    %4174 = vmatpush1.msra.mxu0 0.0
    %4175 = vmatprep.subr.mxu0 0.0
    %4176 = vmatpush1.msra.mxu0 0.0
    %4177 = vmatprep.subr.mxu0 0.0
    %4178 = vmatpush1.msra.mxu0 0.0
    %4179 = vmatprep.subr.mxu0 0.0
    %4180 = vmatpush1.msra.mxu0 0.0
    %4181 = vmatprep.subr.mxu0 0.0
    %4182 = vmatpush1.msra.mxu0 0.0
    %4183 = vmatprep.subr.mxu0 0.0
    %4184 = vmatpush1.msra.mxu0 0.0
    %4185 = vmatprep.subr.mxu0 0.0
    %4186 = vmatpush1.msra.mxu0 0.0
    %4187 = vmatprep.subr.mxu0 0.0
    %4188 = vmatpush1.msra.mxu0 0.0
    %4189 = vmatprep.subr.mxu0 0.0
    %4190 = vmatpush1.msra.mxu0 0.0
    %4191 = vmatprep.subr.mxu0 0.0
    %4192 = vmatpush1.msra.mxu0 0.0
    %4193 = vmatprep.subr.mxu0 0.0
    %4194 = vmatpush1.msra.mxu0 0.0
    %4195 = vmatprep.subr.mxu0 0.0
    %4196 = vmatpush1.msra.mxu0 0.0
    %4197 = vmatprep.subr.mxu0 0.0
    %4198 = vmatpush1.msra.mxu0 0.0
    %4199 = vmatprep.subr.mxu0 0.0
    %4200 = vmatpush1.msra.mxu0 0.0
    %4201 = vmatprep.subr.mxu0 0.0
    %4202 = vmatpush1.msra.mxu0 0.0
    %4203 = vmatprep.subr.mxu0 0.0
    %4204 = vmatpush1.msra.mxu0 0.0
    %4205 = vmatprep.subr.mxu0 0.0
    %4206 = vmatpush1.msra.mxu0 0.0
    %4207 = vmatprep.subr.mxu0 0.0
    %4208 = vmatpush1.msra.mxu0 0.0
    %4209 = vmatprep.subr.mxu0 0.0
    %4210 = vmatpush1.msra.mxu0 0.0
    %4211 = vmatprep.mubr.f32.mxu0 0.0
    %4212 = vmatmul.mubr.f32.gmra.mrb[0].mxu0 %v4142
    %v4213 = vpop.f32.mrb[0].mxu0
    %v4214 = vadd.f32 %v4139, %v4213
    %v4215 = vpop.f32.mrb[0].mxu0
    %4216 = vmatprep.mubr.f32.mxu0 0.0
    %4217 = vmatmul.mubr.f32.gmra.mrb[0].mxu0 %v4145
    %v4218 = vpop.f32.mrb[0].mxu0
    %v4219 = vadd.f32 %v4139, %v4218
    %v4220 = vpop.f32.mrb[0].mxu0
    %4221 = vdwg.mxu0
    %v4222 = vmul.f32 %v4214, 0.5
    %v4223 = vmul.f32 %v4219, 0.5
    %v4224 = vmul.f32 %v4214, 0.044715
    %v4225 = vmul.f32 %v4219, 0.044715
    %v4226 = vmul.f32 %v4224, %v4214
    %v4227 = vmul.f32 %v4225, %v4219
    %v4228 = vmul.f32 %v4226, %v4214
    %v4229 = vmul.f32 %v4227, %v4219
    %v4230 = vadd.f32 %v4214, %v4228
    %v4231 = vadd.f32 %v4219, %v4229
    %v4232 = vmul.f32 %v4230, 0.7978846
    %v4233 = vmul.f32 %v4231, 0.7978846
    %v4234 = vtanh.pop %v4232
    %v4235 = vtanh.pop %v4233
    %v4236 = vadd.f32 %v4234, 1.0
    %v4237 = vadd.f32 %v4235, 1.0
    %v4238 = vmul.f32 %v4222, %v4236
    %v4239 = vmul.f32 %v4223, %v4237
    %v4240 = vld [vmem:[#allocation23] sm:$0xff]
    %v4241 = vld [vmem:[#allocation23 + $0x8] sm:$0xff]
    %v4242 = vld [vmem:[#allocation23 + $0x10] sm:$0xff]
    %v4243 = vld [vmem:[#allocation23 + $0x18] sm:$0xff]
    %v4244 = vld [vmem:[%s23] sm:$0x1]
    %v4246 = vlaneseq
    %v4247 = vshrl.u32 %v4246, 7
    %v4248 = vsub.s32 0, %v4247
    %v4249 = vrot.slane %v4244, %v4248
    %v4252 = vsel %vm564, %v4238, 0
    %v4255 = vsel %vm564, %v4239, 0
    %4257 = vmatprep.subr.mxu0 0.0
    %4258 = vmatpush1.msra.mxu0 %v4240
    %4259 = vmatprep.subr.mxu0 0.0
    %4260 = vmatpush1.msra.mxu0 %v4241
    %4261 = vmatprep.subr.mxu0 0.0
    %4262 = vmatpush1.msra.mxu0 %v4242
    %4263 = vmatprep.subr.mxu0 0.0
    %4264 = vmatpush1.msra.mxu0 %v4243
    %4265 = vmatprep.subr.mxu0 0.0
    %4266 = vmatpush1.msra.mxu0 0.0
    %4267 = vmatprep.subr.mxu0 0.0
    %4268 = vmatpush1.msra.mxu0 0.0
    %4269 = vmatprep.subr.mxu0 0.0
    %4270 = vmatpush1.msra.mxu0 0.0
    %4271 = vmatprep.subr.mxu0 0.0
    %4272 = vmatpush1.msra.mxu0 0.0
    %4273 = vmatprep.subr.mxu0 0.0
    %4274 = vmatpush1.msra.mxu0 0.0
    %4275 = vmatprep.subr.mxu0 0.0
    %4276 = vmatpush1.msra.mxu0 0.0
    %4277 = vmatprep.subr.mxu0 0.0
    %4278 = vmatpush1.msra.mxu0 0.0
    %4279 = vmatprep.subr.mxu0 0.0
    %4280 = vmatpush1.msra.mxu0 0.0
    %4281 = vmatprep.subr.mxu0 0.0
    %4282 = vmatpush1.msra.mxu0 0.0
    %4283 = vmatprep.subr.mxu0 0.0
    %4284 = vmatpush1.msra.mxu0 0.0
    %4285 = vmatprep.subr.mxu0 0.0
    %4286 = vmatpush1.msra.mxu0 0.0
    %4287 = vmatprep.subr.mxu0 0.0
    %4288 = vmatpush1.msra.mxu0 0.0
    %4289 = vmatprep.subr.mxu0 0.0
    %4290 = vmatpush1.msra.mxu0 0.0
    %4291 = vmatprep.subr.mxu0 0.0
    %4292 = vmatpush1.msra.mxu0 0.0
    %4293 = vmatprep.subr.mxu0 0.0
    %4294 = vmatpush1.msra.mxu0 0.0
    %4295 = vmatprep.subr.mxu0 0.0
    %4296 = vmatpush1.msra.mxu0 0.0
    %4297 = vmatprep.subr.mxu0 0.0
    %4298 = vmatpush1.msra.mxu0 0.0
    %4299 = vmatprep.subr.mxu0 0.0
    %4300 = vmatpush1.msra.mxu0 0.0
    %4301 = vmatprep.subr.mxu0 0.0
    %4302 = vmatpush1.msra.mxu0 0.0
    %4303 = vmatprep.subr.mxu0 0.0
    %4304 = vmatpush1.msra.mxu0 0.0
    %4305 = vmatprep.subr.mxu0 0.0
    %4306 = vmatpush1.msra.mxu0 0.0
    %4307 = vmatprep.subr.mxu0 0.0
    %4308 = vmatpush1.msra.mxu0 0.0
    %4309 = vmatprep.subr.mxu0 0.0
    %4310 = vmatpush1.msra.mxu0 0.0
    %4311 = vmatprep.subr.mxu0 0.0
    %4312 = vmatpush1.msra.mxu0 0.0
    %4313 = vmatprep.subr.mxu0 0.0
    %4314 = vmatpush1.msra.mxu0 0.0
    %4315 = vmatprep.subr.mxu0 0.0
    %4316 = vmatpush1.msra.mxu0 0.0
    %4317 = vmatprep.subr.mxu0 0.0
    %4318 = vmatpush1.msra.mxu0 0.0
    %4319 = vmatprep.subr.mxu0 0.0
    %4320 = vmatpush1.msra.mxu0 0.0
    %4321 = vmatprep.mubr.f32.mxu0 0.0
    %4322 = vmatmul.mubr.f32.gmra.mrb[0].mxu0 %v4252
    %v4323 = vpop.f32.mrb[0].mxu0
    %v4324 = vadd.f32 %v4249, %v4323
    %v4325 = vpop.f32.mrb[0].mxu0
    %4326 = vmatprep.mubr.f32.mxu0 0.0
    %4327 = vmatmul.mubr.f32.gmra.mrb[0].mxu0 %v4255
    %v4328 = vpop.f32.mrb[0].mxu0
    %v4329 = vadd.f32 %v4249, %v4328
    %v4330 = vpop.f32.mrb[0].mxu0
    %4331 = vdwg.mxu0
    %v4332 = vadd.f32 %v4324, %v4128
    %v4333 = vadd.f32 %v4329, %v4129
    %v4334 = vld [vmem:[%s24] sm:$0x1]
    %v4335 = vld [vmem:[%s25] sm:$0x1]
    %v4336 = vsel %vm564, %v4332, 0.0
    %4337 = vadd.xlane.f32.xlu0 %v4336
    %v4338 = vpop.xlane.xlu0 %4337
    %v4339 = vsel %vm564, %v4333, 0.0
    %4340 = vadd.xlane.f32.xlu0 %v4339
    %v4341 = vpop.xlane.xlu0 %4340
    %v4342 = vmul.f32 %v4338, %v4093
    %v4343 = vmul.f32 %v4341, %v4093
    %v4344 = vsub.f32 %v4332, %v4342
    %v4345 = vsub.f32 %v4333, %v4343
    %v4346 = vmul.f32 %v4344, %v4344
    %v4347 = vmul.f32 %v4345, %v4345
    %v4348 = vsel %vm564, %v4346, 0.0
    %4349 = vadd.xlane.f32.xlu0 %v4348
    %v4350 = vpop.xlane.xlu0 %4349
    %v4351 = vsel %vm564, %v4347, 0.0
    %4352 = vadd.xlane.f32.xlu0 %v4351
    %v4353 = vpop.xlane.xlu0 %4352
    %v4354 = vmul.f32 %v4350, %v4093
    %v4355 = vmul.f32 %v4353, %v4093
    %v4356 = vadd.f32 %v4354, 1e-12
    %v4357 = vadd.f32 %v4355, 1e-12
    %v4358 = vrsqrt.pop %v4356
    %v4359 = vrsqrt.pop %v4357
    %v4360 = vmul.f32 %v4344, %v4358
    %v4361 = vmul.f32 %v4345, %v4359
    %v4363 = vlaneseq
    %v4364 = vshrl.u32 %v4363, 7
    %v4365 = vsub.s32 0, %v4364
    %v4366 = vrot.slane %v4334, %v4365
    %v4368 = vmul.f32 %v4360, %v4366
    %v4369 = vmul.f32 %v4361, %v4366
    %v4371 = vlaneseq
    %v4372 = vshrl.u32 %v4371, 7
    %v4373 = vsub.s32 0, %v4372
    %v4374 = vrot.slane %v4335, %v4373
    %v4376 = vadd.f32 %v4368, %v4374
    %v4377 = vadd.f32 %v4369, %v4374
    %v4378 = vld [vmem:[%s26] sm:$0x1]
    %v4380 = vlaneseq
    %v4381 = vshrl.u32 %v4380, 7
    %v4382 = vsub.s32 0, %v4381
    %v4383 = vrot.slane %v4378, %v4382
    %v4385 = vmul.f32 %v4376, %v4383
    %v4386 = vmul.f32 %v4377, %v4383
    %v4387 = vsel %vm564, %v4385, 0.0
    %4388 = vadd.xlane.f32.xlu0 %v4387
    %v4389 = vpop.xlane.xlu0 %4388
    %v4390 = vsel %vm564, %v4386, 0.0
    %4391 = vadd.xlane.f32.xlu0 %v4390
    %v4392 = vpop.xlane.xlu0 %4391
    %v4393 = vld [vmem:[#allocation2] sm:$0x1]
    %v4395 = vlaneseq
    %v4396 = vshrl.u32 %v4395, 7
    %v4397 = vsub.s32 0, %v4396
    %v4398 = vrot.slane %v4393, %v4397
    %4399 = vset.pattern.permute.xlu0 0
    %4400 = vperm.xlu0 %4399, %v4398
    %v4401 = vpop.permute.xlu0 %4400
    %v4403 = vadd.f32 %v4389, %v4401
    %v4404 = vadd.f32 %v4392, %v4401
    %v4405 = vmul.f32 %v4403, 0.5
    %v4406 = vmul.f32 %v4404, 0.5
    %v4407 = vtanh.pop %v4405
    %v4408 = vtanh.pop %v4406
    %v4409 = vadd.f32 %v4407, 1.0
    %v4410 = vadd.f32 %v4408, 1.0
    %v4411 = vmul.f32 %v4409, 0.5
    %v4412 = vmul.f32 %v4410, 0.5
    %v4415 = vlaneseq
    %v4416 = vand.u32 %v4415, 127
    %v4417 = vlaneseq
    %v4418 = vshrl.u32 %v4417, 7
    %v4419 = vsub.s32 %v4416, %v4418
    %v4420 = vrot.slane %v4411, %v4419
    %v4421 = vlaneseq
    %v4422 = vshrl.u32 %v4421, 7
    %v4423 = vsub.s32 %v4416, %v4422
    %v4424 = vrot.slane %v4412, %v4423
    %v4425 = vsel %vm787, %v4424, %v4420
    %vm4427 = vcmask 58368
    %4428 = vst.msk [vmem:[#allocation24] sm:$0x3] %vm4427, %v4425
    // Predicated region
    $region166: #{tpu_custom_call.1} parent=1 // pred_check
      _
    $region167: #{tpu_custom_call.1} parent=1 // pred_check_branch
      %4430 = sbr.rel (0) target = $region169
    $region168: #{tpu_custom_call.1} parent=1 // pred_region
      %s4432 = ssub.s32 32, 32
      %4433 = vsyncadd [#allocation5], %s4432
      %s4435 = sshll.u32 [#allocation24], 4
      %s4436 = int_to_ptr.vmem [resolvable:$true] %s4435
      %4438 = dma.vmem_to_hbm [thread:$0]  %s4436, 32, %s28, [#allocation5]
    $region169: #{tpu_custom_call.1} parent=1 // pred_fallthru
      _
    // Predicated region
    $region170: #{tpu_custom_call.1} parent=1 // pred_check
      _
    $region171: #{tpu_custom_call.1} parent=1 // pred_check_branch
      %4440 = sbr.rel (0) target = $region173
    $region172: #{tpu_custom_call.1} parent=1 // pred_region
      %4441 = dma.done [#allocation5], 32
    $region173: #{tpu_custom_call.1} parent=1 // pred_fallthru
      _
    %4442 = vsyncpa [#allocation4], 1
    %4443 = vsyncpa [#allocation7], 1
    %4444 = vsyncpa [#allocation10], 1
    %4445 = vsyncpa [#allocation13], 1
    %4446 = vsyncpa [#allocation16], 1
    %4447 = vsyncpa [#allocation19], 1
    %4448 = vsyncpa [#allocation22], 1
    %4449 = vsyncpa [#allocation5], 1

</llo_original>
